<compile_context>
chip_gen: v7x
topology: tpu7x:2x2x1
jax: 0.10.0
libtpu: 0.0.40
codegen_flags: <defaults>
</compile_context>

<pallas_src>
import jax
import jax.numpy as jnp
from jax import lax
from jax.experimental import pallas as pl
from jax.experimental.pallas import tpu as pltpu

# ----- sizes (small, consistent with the module's hyper-parameters) -----
B = 2          # number of graphs per side
N = 8          # nodes per graph
F = 16         # raw node feature dim
E = 32         # args.embedding_size
A = 8          # args.align_size
H = 4          # args.n_heads
L = A + 1      # tokens after cls concat
HE = H * E     # concatenated head dim (128 lanes)


# ===================== single fused kernel ===================================
def fused_kernel(d1_ref, d2_ref,
                 we11_ref, be11_ref, we12_ref, be12_ref, wa1_ref,
                 we21_ref, be21_ref, we22_ref, be22_ref, wa2_ref,
                 wqkv_ref, pw1_ref, pb1_ref, pw2_ref, pb2_ref, pw3_ref, pb3_ref,
                 o1_ref, o2_ref):
    x1 = d1_ref[0]                                                 # (N, F)
    x2 = d2_ref[0]                                                 # (N, F)

    # ---- encoder (two views) + align pooling + cls prepend, per side ----
    def encode_align_side(x, wea, bea, web, beb, wa):
        ha = jnp.maximum(
            jnp.dot(x, wea, preferred_element_type=jnp.float32) + bea, 0.0)
        hb = jnp.maximum(
            jnp.dot(x, web, preferred_element_type=jnp.float32) + beb, 0.0)

        def pool(h):                                               # (N, E) -> (A, E)
            logits = jnp.dot(h, wa, preferred_element_type=jnp.float32)  # (N, A)
            logits = logits - jnp.max(logits, axis=-1, keepdims=True)
            p = jnp.exp(logits)
            p = p * pl.reciprocal(jnp.sum(p, axis=-1, keepdims=True),
                                  approx=True)                     # softmax rows
            # assignment.T @ h : contract node axis
            return lax.dot_general(p, h, (((0,), (0,)), ((), ())),
                                   preferred_element_type=jnp.float32)

        sub = pool(ha) + pool(hb)                                  # (A, E)
        cls = jnp.mean(sub, axis=0, keepdims=True)                 # (1, E)
        return jnp.concatenate([cls, sub], axis=0)                 # (L, E)

    swc1 = encode_align_side(x1, we11_ref[...], be11_ref[...],
                             we12_ref[...], be12_ref[...], wa1_ref[...])
    swc2 = encode_align_side(x2, we21_ref[...], be21_ref[...],
                             we22_ref[...], be22_ref[...], wa2_ref[...])

    # ---- multi-head cross attention (stacked QKV weights, CLS row only) ----
    wqkv = wqkv_ref[...]                                           # (E, 3*HE)
    qkv1 = jnp.dot(swc1, wqkv, preferred_element_type=jnp.float32)  # (L, 3*HE)
    qkv2 = jnp.dot(swc2, wqkv, preferred_element_type=jnp.float32)  # (L, 3*HE)
    scale = 1.0 / jnp.sqrt(jnp.float32(E))

    q1 = qkv1[0:1, 0:HE]                                           # CLS query only
    q2 = qkv2[0:1, 0:HE]
    k1, v1 = qkv1[:, HE:2 * HE], qkv1[:, 2 * HE:3 * HE]            # (L, HE)
    k2, v2 = qkv2[:, HE:2 * HE], qkv2[:, 2 * HE:3 * HE]

    def cls_attend(q_cls, k, v):
        outs = []
        for h in range(H):                                         # static unroll
            sl = slice(h * E, (h + 1) * E)
            s = lax.dot_general(q_cls[:, sl], k[:, sl],
                                (((1,), (1,)), ((), ())),
                                preferred_element_type=jnp.float32) * scale  # (1, L)
            s = s - jnp.max(s, axis=-1, keepdims=True)
            p = jnp.exp(s)
            p = p * pl.reciprocal(jnp.sum(p, axis=-1, keepdims=True),
                                  approx=True)
            outs.append(jnp.dot(p, v[:, sl],
                                preferred_element_type=jnp.float32))          # (1, E)
        return jnp.concatenate(outs, axis=-1)                      # (1, HE)

    o1 = cls_attend(q1, k2, v2)   # side-1 CLS queries, side-2 keys/values
    o2 = cls_attend(q2, k1, v1)   # side-2 CLS queries, side-1 keys/values
    attn = jnp.concatenate([o1, o2], axis=0)                       # (2, HE)

    # ---- shared projection head, both sides in one batch of 2 rows ----
    # Dropout(p) is identity in eval mode.
    h1 = jnp.maximum(
        jnp.dot(attn, pw1_ref[...], preferred_element_type=jnp.float32)
        + pb1_ref[...], 0.0)                                       # (2, E)
    h2 = jnp.maximum(
        jnp.dot(h1, pw2_ref[...], preferred_element_type=jnp.float32)
        + pb2_ref[...], 0.0)
    out = (jnp.dot(h2, pw3_ref[...], preferred_element_type=jnp.float32)
           + pb3_ref[...])                                         # (2, E)

    o1_ref[0] = out[0:1]
    o2_ref[0] = out[1:2]


def _full_spec(shape):
    return pl.BlockSpec(shape, lambda b, _n=len(shape): (0,) * _n)


def my_model_forward(data1, data2, params):
    p = params
    # stack per-head Q/K/V weights into one lane-dense (E, 3*H*E) matrix:
    # columns [Wq_h0 | ... | Wq_h3 | Wk_h0 | ... | Wv_h3]
    wqkv = jnp.concatenate(
        [jnp.transpose(p["wq"], (1, 0, 2)).reshape(E, HE),
         jnp.transpose(p["wk"], (1, 0, 2)).reshape(E, HE),
         jnp.transpose(p["wv"], (1, 0, 2)).reshape(E, HE)], axis=1)  # (E, 3*HE)

    out1, out2 = pl.pallas_call(
        fused_kernel,
        out_shape=(jax.ShapeDtypeStruct((B, 1, E), jnp.float32),
                   jax.ShapeDtypeStruct((B, 1, E), jnp.float32)),
        grid=(B,),
        in_specs=[
            pl.BlockSpec((1, N, F), lambda b: (b, 0, 0)),   # data1
            pl.BlockSpec((1, N, F), lambda b: (b, 0, 0)),   # data2
            _full_spec((F, E)), _full_spec((1, E)),          # encoder1 view1
            _full_spec((F, E)), _full_spec((1, E)),          # encoder1 view2
            _full_spec((E, A)),                              # align1
            _full_spec((F, E)), _full_spec((1, E)),          # encoder2 view1
            _full_spec((F, E)), _full_spec((1, E)),          # encoder2 view2
            _full_spec((E, A)),                              # align2
            _full_spec((E, 3 * HE)),                         # stacked QKV
            _full_spec((HE, E)), _full_spec((1, E)),         # proj layer 1
            _full_spec((E, E)), _full_spec((1, E)),          # proj layer 2
            _full_spec((E, E)), _full_spec((1, E)),          # proj layer 3
        ],
        out_specs=(pl.BlockSpec((1, 1, E), lambda b: (b, 0, 0)),
                   pl.BlockSpec((1, 1, E), lambda b: (b, 0, 0))),
        compiler_params=pltpu.CompilerParams(
            dimension_semantics=("parallel",)),
    )(data1, data2,
      p["we11"], p["be11"], p["we12"], p["be12"], p["wa1"],
      p["we21"], p["be21"], p["we22"], p["be22"], p["wa2"],
      wqkv,
      p["pw1"], p["pb1"], p["pw2"], p["pb2"], p["pw3"], p["pb3"])

    return out1[:, 0, :], out2[:, 0, :]


def make_params(key):
    ks = jax.random.split(key, 16)
    s = 0.1
    # weights stored (in, out); torch nn.Linear stores (out, in) -- transposed.
    return {
        # encoder1 (two views) + align1
        "we11": s * jax.random.normal(ks[0], (F, E), jnp.float32),
        "be11": jnp.zeros((1, E), jnp.float32),
        "we12": s * jax.random.normal(ks[1], (F, E), jnp.float32),
        "be12": jnp.zeros((1, E), jnp.float32),
        "wa1":  s * jax.random.normal(ks[2], (E, A), jnp.float32),
        # encoder2 (two views) + align2
        "we21": s * jax.random.normal(ks[3], (F, E), jnp.float32),
        "be21": jnp.zeros((1, E), jnp.float32),
        "we22": s * jax.random.normal(ks[4], (F, E), jnp.float32),
        "be22": jnp.zeros((1, E), jnp.float32),
        "wa2":  s * jax.random.normal(ks[5], (E, A), jnp.float32),
        # cross attention (per-head Q/K/V projections, stacked in the wrapper)
        "wq": s * jax.random.normal(ks[6], (H, E, E), jnp.float32),
        "wk": s * jax.random.normal(ks[7], (H, E, E), jnp.float32),
        "wv": s * jax.random.normal(ks[8], (H, E, E), jnp.float32),
        # projection head (shared between both sides)
        "pw1": s * jax.random.normal(ks[9], (HE, E), jnp.float32),
        "pb1": jnp.zeros((1, E), jnp.float32),
        "pw2": s * jax.random.normal(ks[10], (E, E), jnp.float32),
        "pb2": jnp.zeros((1, E), jnp.float32),
        "pw3": s * jax.random.normal(ks[11], (E, E), jnp.float32),
        "pb3": jnp.zeros((1, E), jnp.float32),
    }


if __name__ == "__main__":
    key = jax.random.PRNGKey(0)
    kd1, kd2, kp = jax.random.split(key, 3)
    data1 = jax.random.normal(kd1, (B, N, F), jnp.float32)
    data2 = jax.random.normal(kd2, (B, N, F), jnp.float32)
    params = make_params(kp)

    sub_x1, sub_x2 = my_model_forward(data1, data2, params)
    sub_x1, sub_x2 = jax.block_until_ready((sub_x1, sub_x2))

    assert sub_x1.shape == (B, E) and sub_x2.shape == (B, E)
    assert jnp.all(jnp.isfinite(sub_x1)) and jnp.all(jnp.isfinite(sub_x2))
    print("KERNEL_OK")
</pallas_src>

<mosaic_0001>
module attributes {stable_mosaic.version = 11 : i64} {
  func.func @fused_kernel(%arg0: i32, %arg1: memref<1x8x16xf32, #tpu.memory_space<vmem>>, %arg2: memref<1x8x16xf32, #tpu.memory_space<vmem>>, %arg3: memref<16x32xf32, #tpu.memory_space<vmem>>, %arg4: memref<1x32xf32, #tpu.memory_space<vmem>>, %arg5: memref<16x32xf32, #tpu.memory_space<vmem>>, %arg6: memref<1x32xf32, #tpu.memory_space<vmem>>, %arg7: memref<32x8xf32, #tpu.memory_space<vmem>>, %arg8: memref<16x32xf32, #tpu.memory_space<vmem>>, %arg9: memref<1x32xf32, #tpu.memory_space<vmem>>, %arg10: memref<16x32xf32, #tpu.memory_space<vmem>>, %arg11: memref<1x32xf32, #tpu.memory_space<vmem>>, %arg12: memref<32x8xf32, #tpu.memory_space<vmem>>, %arg13: memref<32x384xf32, #tpu.memory_space<vmem>>, %arg14: memref<128x32xf32, #tpu.memory_space<vmem>>, %arg15: memref<1x32xf32, #tpu.memory_space<vmem>>, %arg16: memref<32x32xf32, #tpu.memory_space<vmem>>, %arg17: memref<1x32xf32, #tpu.memory_space<vmem>>, %arg18: memref<32x32xf32, #tpu.memory_space<vmem>>, %arg19: memref<1x32xf32, #tpu.memory_space<vmem>>, %arg20: memref<1x1x32xf32, #tpu.memory_space<vmem>>, %arg21: memref<1x1x32xf32, #tpu.memory_space<vmem>>) attributes {dimension_semantics = [#tpu.dimension_semantics<parallel>], iteration_bounds = array<i64: 2>, scalar_prefetch = 0 : i64, scratch_operands = 0 : i64, tpu.core_type = #tpu.core_type<tc>, window_params = [{transform_indices = @transform_0, window_bounds = array<i64: 1, 8, 16>}, {transform_indices = @transform_1, window_bounds = array<i64: 1, 8, 16>}, {pipeline_mode = #tpu.pipeline_mode<synchronous>, transform_indices = @transform_2, window_bounds = array<i64: 16, 32>}, {pipeline_mode = #tpu.pipeline_mode<synchronous>, transform_indices = @transform_3, window_bounds = array<i64: 1, 32>}, {pipeline_mode = #tpu.pipeline_mode<synchronous>, transform_indices = @transform_4, window_bounds = array<i64: 16, 32>}, {pipeline_mode = #tpu.pipeline_mode<synchronous>, transform_indices = @transform_5, window_bounds = array<i64: 1, 32>}, {pipeline_mode = #tpu.pipeline_mode<synchronous>, transform_indices = @transform_6, window_bounds = array<i64: 32, 8>}, {pipeline_mode = #tpu.pipeline_mode<synchronous>, transform_indices = @transform_7, window_bounds = array<i64: 16, 32>}, {pipeline_mode = #tpu.pipeline_mode<synchronous>, transform_indices = @transform_8, window_bounds = array<i64: 1, 32>}, {pipeline_mode = #tpu.pipeline_mode<synchronous>, transform_indices = @transform_9, window_bounds = array<i64: 16, 32>}, {pipeline_mode = #tpu.pipeline_mode<synchronous>, transform_indices = @transform_10, window_bounds = array<i64: 1, 32>}, {pipeline_mode = #tpu.pipeline_mode<synchronous>, transform_indices = @transform_11, window_bounds = array<i64: 32, 8>}, {pipeline_mode = #tpu.pipeline_mode<synchronous>, transform_indices = @transform_12, window_bounds = array<i64: 32, 384>}, {pipeline_mode = #tpu.pipeline_mode<synchronous>, transform_indices = @transform_13, window_bounds = array<i64: 128, 32>}, {pipeline_mode = #tpu.pipeline_mode<synchronous>, transform_indices = @transform_14, window_bounds = array<i64: 1, 32>}, {pipeline_mode = #tpu.pipeline_mode<synchronous>, transform_indices = @transform_15, window_bounds = array<i64: 32, 32>}, {pipeline_mode = #tpu.pipeline_mode<synchronous>, transform_indices = @transform_16, window_bounds = array<i64: 1, 32>}, {pipeline_mode = #tpu.pipeline_mode<synchronous>, transform_indices = @transform_17, window_bounds = array<i64: 32, 32>}, {pipeline_mode = #tpu.pipeline_mode<synchronous>, transform_indices = @transform_18, window_bounds = array<i64: 1, 32>}, {transform_indices = @transform_19, window_bounds = array<i64: 1, 1, 32>}, {transform_indices = @transform_20, window_bounds = array<i64: 1, 1, 32>}]} {
    %c0 = arith.constant 0 : index
    %c0_0 = arith.constant 0 : index
    %c0_1 = arith.constant 0 : index
    %0 = vector.load %arg1[%c0, %c0_0, %c0_1] : memref<1x8x16xf32, #tpu.memory_space<vmem>>, vector<1x8x16xf32>
    %1 = vector.shape_cast %0 : vector<1x8x16xf32> to vector<8x16xf32>
    %c0_2 = arith.constant 0 : index
    %c0_3 = arith.constant 0 : index
    %c0_4 = arith.constant 0 : index
    %2 = vector.load %arg2[%c0_2, %c0_3, %c0_4] : memref<1x8x16xf32, #tpu.memory_space<vmem>>, vector<1x8x16xf32>
    %3 = vector.shape_cast %2 : vector<1x8x16xf32> to vector<8x16xf32>
    %c0_5 = arith.constant 0 : index
    %c0_6 = arith.constant 0 : index
    %4 = vector.load %arg3[%c0_5, %c0_6] : memref<16x32xf32, #tpu.memory_space<vmem>>, vector<16x32xf32>
    %c0_7 = arith.constant 0 : index
    %c0_8 = arith.constant 0 : index
    %5 = vector.load %arg4[%c0_7, %c0_8] : memref<1x32xf32, #tpu.memory_space<vmem>>, vector<1x32xf32>
    %c0_9 = arith.constant 0 : index
    %c0_10 = arith.constant 0 : index
    %6 = vector.load %arg5[%c0_9, %c0_10] : memref<16x32xf32, #tpu.memory_space<vmem>>, vector<16x32xf32>
    %c0_11 = arith.constant 0 : index
    %c0_12 = arith.constant 0 : index
    %7 = vector.load %arg6[%c0_11, %c0_12] : memref<1x32xf32, #tpu.memory_space<vmem>>, vector<1x32xf32>
    %c0_13 = arith.constant 0 : index
    %c0_14 = arith.constant 0 : index
    %8 = vector.load %arg7[%c0_13, %c0_14] : memref<32x8xf32, #tpu.memory_space<vmem>>, vector<32x8xf32>
    %cst = arith.constant dense<0.000000e+00> : vector<8x32xf32>
    %9 = tpu.matmul %1, %4, %cst {dimension_numbers = #tpu.dot_dimension_numbers<[1], [0], [0], [1], [0, 0, 1, 1], [], []>} : vector<8x16xf32>, vector<16x32xf32>, vector<8x32xf32> -> vector<8x32xf32>
    %10 = vector.broadcast %5 : vector<1x32xf32> to vector<8x32xf32>
    %11 = arith.addf %9, %10 : vector<8x32xf32>
    %cst_15 = arith.constant 0.000000e+00 : f32
    %12 = vector.broadcast %cst_15 : f32 to vector<8x32xf32>
    %13 = arith.maximumf %11, %12 : vector<8x32xf32>
    %cst_16 = arith.constant dense<0.000000e+00> : vector<8x32xf32>
    %14 = tpu.matmul %1, %6, %cst_16 {dimension_numbers = #tpu.dot_dimension_numbers<[1], [0], [0], [1], [0, 0, 1, 1], [], []>} : vector<8x16xf32>, vector<16x32xf32>, vector<8x32xf32> -> vector<8x32xf32>
    %15 = vector.broadcast %7 : vector<1x32xf32> to vector<8x32xf32>
    %16 = arith.addf %14, %15 : vector<8x32xf32>
    %cst_17 = arith.constant 0.000000e+00 : f32
    %17 = vector.broadcast %cst_17 : f32 to vector<8x32xf32>
    %18 = arith.maximumf %16, %17 : vector<8x32xf32>
    %cst_18 = arith.constant dense<0.000000e+00> : vector<8x8xf32>
    %19 = tpu.matmul %13, %8, %cst_18 {dimension_numbers = #tpu.dot_dimension_numbers<[1], [0], [0], [1], [0, 0, 1, 1], [], []>} : vector<8x32xf32>, vector<32x8xf32>, vector<8x8xf32> -> vector<8x8xf32>
    %cst_19 = arith.constant dense<0xFF800000> : vector<8xf32>
    %20 = vector.multi_reduction <maximumf>, %19, %cst_19 [1] : vector<8x8xf32> to vector<8xf32>
    %21 = vector.shape_cast %20 : vector<8xf32> to vector<8x1xf32>
    %22 = vector.broadcast %21 : vector<8x1xf32> to vector<8x8xf32>
    %23 = arith.subf %19, %22 : vector<8x8xf32>
    %24 = math.exp %23 : vector<8x8xf32>
    %cst_20 = arith.constant dense<0.000000e+00> : vector<8xf32>
    %25 = vector.multi_reduction <add>, %24, %cst_20 [1] : vector<8x8xf32> to vector<8xf32>
    %26 = vector.shape_cast %25 : vector<8xf32> to vector<8x1xf32>
    %27 = tpu.reciprocal %26 {approx = true} : vector<8x1xf32> -> vector<8x1xf32>
    %28 = vector.broadcast %27 : vector<8x1xf32> to vector<8x8xf32>
    %29 = arith.mulf %24, %28 : vector<8x8xf32>
    %cst_21 = arith.constant dense<0.000000e+00> : vector<8x32xf32>
    %30 = tpu.matmul %29, %13, %cst_21 {dimension_numbers = #tpu.dot_dimension_numbers<[0], [0], [1], [1], [0, 1, 1, 1], [], []>} : vector<8x8xf32>, vector<8x32xf32>, vector<8x32xf32> -> vector<8x32xf32>
    %cst_22 = arith.constant dense<0.000000e+00> : vector<8x8xf32>
    %31 = tpu.matmul %18, %8, %cst_22 {dimension_numbers = #tpu.dot_dimension_numbers<[1], [0], [0], [1], [0, 0, 1, 1], [], []>} : vector<8x32xf32>, vector<32x8xf32>, vector<8x8xf32> -> vector<8x8xf32>
    %cst_23 = arith.constant dense<0xFF800000> : vector<8xf32>
    %32 = vector.multi_reduction <maximumf>, %31, %cst_23 [1] : vector<8x8xf32> to vector<8xf32>
    %33 = vector.shape_cast %32 : vector<8xf32> to vector<8x1xf32>
    %34 = vector.broadcast %33 : vector<8x1xf32> to vector<8x8xf32>
    %35 = arith.subf %31, %34 : vector<8x8xf32>
    %36 = math.exp %35 : vector<8x8xf32>
    %cst_24 = arith.constant dense<0.000000e+00> : vector<8xf32>
    %37 = vector.multi_reduction <add>, %36, %cst_24 [1] : vector<8x8xf32> to vector<8xf32>
    %38 = vector.shape_cast %37 : vector<8xf32> to vector<8x1xf32>
    %39 = tpu.reciprocal %38 {approx = true} : vector<8x1xf32> -> vector<8x1xf32>
    %40 = vector.broadcast %39 : vector<8x1xf32> to vector<8x8xf32>
    %41 = arith.mulf %36, %40 : vector<8x8xf32>
    %cst_25 = arith.constant dense<0.000000e+00> : vector<8x32xf32>
    %42 = tpu.matmul %41, %18, %cst_25 {dimension_numbers = #tpu.dot_dimension_numbers<[0], [0], [1], [1], [0, 1, 1, 1], [], []>} : vector<8x8xf32>, vector<8x32xf32>, vector<8x32xf32> -> vector<8x32xf32>
    %43 = arith.addf %30, %42 : vector<8x32xf32>
    %cst_26 = arith.constant dense<0.000000e+00> : vector<32xf32>
    %44 = vector.multi_reduction <add>, %43, %cst_26 [0] : vector<8x32xf32> to vector<32xf32>
    %45 = vector.shape_cast %44 : vector<32xf32> to vector<1x32xf32>
    %cst_27 = arith.constant 8.000000e+00 : f32
    %46 = vector.broadcast %cst_27 : f32 to vector<1x32xf32>
    %47 = arith.divf %45, %46 : vector<1x32xf32>
    %48 = tpu.concatenate %47, %43 in 0 : vector<1x32xf32>, vector<8x32xf32> -> vector<9x32xf32>
    %c0_28 = arith.constant 0 : index
    %c0_29 = arith.constant 0 : index
    %49 = vector.load %arg8[%c0_28, %c0_29] : memref<16x32xf32, #tpu.memory_space<vmem>>, vector<16x32xf32>
    %c0_30 = arith.constant 0 : index
    %c0_31 = arith.constant 0 : index
    %50 = vector.load %arg9[%c0_30, %c0_31] : memref<1x32xf32, #tpu.memory_space<vmem>>, vector<1x32xf32>
    %c0_32 = arith.constant 0 : index
    %c0_33 = arith.constant 0 : index
    %51 = vector.load %arg10[%c0_32, %c0_33] : memref<16x32xf32, #tpu.memory_space<vmem>>, vector<16x32xf32>
    %c0_34 = arith.constant 0 : index
    %c0_35 = arith.constant 0 : index
    %52 = vector.load %arg11[%c0_34, %c0_35] : memref<1x32xf32, #tpu.memory_space<vmem>>, vector<1x32xf32>
    %c0_36 = arith.constant 0 : index
    %c0_37 = arith.constant 0 : index
    %53 = vector.load %arg12[%c0_36, %c0_37] : memref<32x8xf32, #tpu.memory_space<vmem>>, vector<32x8xf32>
    %cst_38 = arith.constant dense<0.000000e+00> : vector<8x32xf32>
    %54 = tpu.matmul %3, %49, %cst_38 {dimension_numbers = #tpu.dot_dimension_numbers<[1], [0], [0], [1], [0, 0, 1, 1], [], []>} : vector<8x16xf32>, vector<16x32xf32>, vector<8x32xf32> -> vector<8x32xf32>
    %55 = vector.broadcast %50 : vector<1x32xf32> to vector<8x32xf32>
    %56 = arith.addf %54, %55 : vector<8x32xf32>
    %cst_39 = arith.constant 0.000000e+00 : f32
    %57 = vector.broadcast %cst_39 : f32 to vector<8x32xf32>
    %58 = arith.maximumf %56, %57 : vector<8x32xf32>
    %cst_40 = arith.constant dense<0.000000e+00> : vector<8x32xf32>
    %59 = tpu.matmul %3, %51, %cst_40 {dimension_numbers = #tpu.dot_dimension_numbers<[1], [0], [0], [1], [0, 0, 1, 1], [], []>} : vector<8x16xf32>, vector<16x32xf32>, vector<8x32xf32> -> vector<8x32xf32>
    %60 = vector.broadcast %52 : vector<1x32xf32> to vector<8x32xf32>
    %61 = arith.addf %59, %60 : vector<8x32xf32>
    %cst_41 = arith.constant 0.000000e+00 : f32
    %62 = vector.broadcast %cst_41 : f32 to vector<8x32xf32>
    %63 = arith.maximumf %61, %62 : vector<8x32xf32>
    %cst_42 = arith.constant dense<0.000000e+00> : vector<8x8xf32>
    %64 = tpu.matmul %58, %53, %cst_42 {dimension_numbers = #tpu.dot_dimension_numbers<[1], [0], [0], [1], [0, 0, 1, 1], [], []>} : vector<8x32xf32>, vector<32x8xf32>, vector<8x8xf32> -> vector<8x8xf32>
    %cst_43 = arith.constant dense<0xFF800000> : vector<8xf32>
    %65 = vector.multi_reduction <maximumf>, %64, %cst_43 [1] : vector<8x8xf32> to vector<8xf32>
    %66 = vector.shape_cast %65 : vector<8xf32> to vector<8x1xf32>
    %67 = vector.broadcast %66 : vector<8x1xf32> to vector<8x8xf32>
    %68 = arith.subf %64, %67 : vector<8x8xf32>
    %69 = math.exp %68 : vector<8x8xf32>
    %cst_44 = arith.constant dense<0.000000e+00> : vector<8xf32>
    %70 = vector.multi_reduction <add>, %69, %cst_44 [1] : vector<8x8xf32> to vector<8xf32>
    %71 = vector.shape_cast %70 : vector<8xf32> to vector<8x1xf32>
    %72 = tpu.reciprocal %71 {approx = true} : vector<8x1xf32> -> vector<8x1xf32>
    %73 = vector.broadcast %72 : vector<8x1xf32> to vector<8x8xf32>
    %74 = arith.mulf %69, %73 : vector<8x8xf32>
    %cst_45 = arith.constant dense<0.000000e+00> : vector<8x32xf32>
    %75 = tpu.matmul %74, %58, %cst_45 {dimension_numbers = #tpu.dot_dimension_numbers<[0], [0], [1], [1], [0, 1, 1, 1], [], []>} : vector<8x8xf32>, vector<8x32xf32>, vector<8x32xf32> -> vector<8x32xf32>
    %cst_46 = arith.constant dense<0.000000e+00> : vector<8x8xf32>
    %76 = tpu.matmul %63, %53, %cst_46 {dimension_numbers = #tpu.dot_dimension_numbers<[1], [0], [0], [1], [0, 0, 1, 1], [], []>} : vector<8x32xf32>, vector<32x8xf32>, vector<8x8xf32> -> vector<8x8xf32>
    %cst_47 = arith.constant dense<0xFF800000> : vector<8xf32>
    %77 = vector.multi_reduction <maximumf>, %76, %cst_47 [1] : vector<8x8xf32> to vector<8xf32>
    %78 = vector.shape_cast %77 : vector<8xf32> to vector<8x1xf32>
    %79 = vector.broadcast %78 : vector<8x1xf32> to vector<8x8xf32>
    %80 = arith.subf %76, %79 : vector<8x8xf32>
    %81 = math.exp %80 : vector<8x8xf32>
    %cst_48 = arith.constant dense<0.000000e+00> : vector<8xf32>
    %82 = vector.multi_reduction <add>, %81, %cst_48 [1] : vector<8x8xf32> to vector<8xf32>
    %83 = vector.shape_cast %82 : vector<8xf32> to vector<8x1xf32>
    %84 = tpu.reciprocal %83 {approx = true} : vector<8x1xf32> -> vector<8x1xf32>
    %85 = vector.broadcast %84 : vector<8x1xf32> to vector<8x8xf32>
    %86 = arith.mulf %81, %85 : vector<8x8xf32>
    %cst_49 = arith.constant dense<0.000000e+00> : vector<8x32xf32>
    %87 = tpu.matmul %86, %63, %cst_49 {dimension_numbers = #tpu.dot_dimension_numbers<[0], [0], [1], [1], [0, 1, 1, 1], [], []>} : vector<8x8xf32>, vector<8x32xf32>, vector<8x32xf32> -> vector<8x32xf32>
    %88 = arith.addf %75, %87 : vector<8x32xf32>
    %cst_50 = arith.constant dense<0.000000e+00> : vector<32xf32>
    %89 = vector.multi_reduction <add>, %88, %cst_50 [0] : vector<8x32xf32> to vector<32xf32>
    %90 = vector.shape_cast %89 : vector<32xf32> to vector<1x32xf32>
    %cst_51 = arith.constant 8.000000e+00 : f32
    %91 = vector.broadcast %cst_51 : f32 to vector<1x32xf32>
    %92 = arith.divf %90, %91 : vector<1x32xf32>
    %93 = tpu.concatenate %92, %88 in 0 : vector<1x32xf32>, vector<8x32xf32> -> vector<9x32xf32>
    %c0_52 = arith.constant 0 : index
    %c0_53 = arith.constant 0 : index
    %94 = vector.load %arg13[%c0_52, %c0_53] : memref<32x384xf32, #tpu.memory_space<vmem>>, vector<32x384xf32>
    %cst_54 = arith.constant dense<0.000000e+00> : vector<9x384xf32>
    %95 = tpu.matmul %48, %94, %cst_54 {dimension_numbers = #tpu.dot_dimension_numbers<[1], [0], [0], [1], [0, 0, 1, 1], [], []>} : vector<9x32xf32>, vector<32x384xf32>, vector<9x384xf32> -> vector<9x384xf32>
    %cst_55 = arith.constant dense<0.000000e+00> : vector<9x384xf32>
    %96 = tpu.matmul %93, %94, %cst_55 {dimension_numbers = #tpu.dot_dimension_numbers<[1], [0], [0], [1], [0, 0, 1, 1], [], []>} : vector<9x32xf32>, vector<32x384xf32>, vector<9x384xf32> -> vector<9x384xf32>
    %cst_56 = arith.constant 3.200000e+01 : f32
    %97 = math.sqrt %cst_56 : f32
    %cst_57 = arith.constant 1.000000e+00 : f32
    %98 = arith.divf %cst_57, %97 : f32
    %99 = vector.extract_strided_slice %95 {offsets = [0, 0], sizes = [1, 128], strides = [1, 1]} : vector<9x384xf32> to vector<1x128xf32>
    %100 = vector.extract_strided_slice %96 {offsets = [0, 0], sizes = [1, 128], strides = [1, 1]} : vector<9x384xf32> to vector<1x128xf32>
    %101 = vector.extract_strided_slice %95 {offsets = [0, 128], sizes = [9, 128], strides = [1, 1]} : vector<9x384xf32> to vector<9x128xf32>
    %102 = vector.extract_strided_slice %95 {offsets = [0, 256], sizes = [9, 128], strides = [1, 1]} : vector<9x384xf32> to vector<9x128xf32>
    %103 = vector.extract_strided_slice %96 {offsets = [0, 128], sizes = [9, 128], strides = [1, 1]} : vector<9x384xf32> to vector<9x128xf32>
    %104 = vector.extract_strided_slice %96 {offsets = [0, 256], sizes = [9, 128], strides = [1, 1]} : vector<9x384xf32> to vector<9x128xf32>
    %105 = vector.extract_strided_slice %99 {offsets = [0, 0], sizes = [1, 32], strides = [1, 1]} : vector<1x128xf32> to vector<1x32xf32>
    %106 = vector.extract_strided_slice %103 {offsets = [0, 0], sizes = [9, 32], strides = [1, 1]} : vector<9x128xf32> to vector<9x32xf32>
    %cst_58 = arith.constant dense<0.000000e+00> : vector<1x9xf32>
    %107 = tpu.matmul %105, %106, %cst_58 {dimension_numbers = #tpu.dot_dimension_numbers<[1], [1], [0], [0], [0, 0, 1, 0], [], []>} : vector<1x32xf32>, vector<9x32xf32>, vector<1x9xf32> -> vector<1x9xf32>
    %108 = vector.broadcast %98 : f32 to vector<1x9xf32>
    %109 = arith.mulf %107, %108 : vector<1x9xf32>
    %cst_59 = arith.constant dense<0xFF800000> : vector<1xf32>
    %110 = vector.multi_reduction <maximumf>, %109, %cst_59 [1] : vector<1x9xf32> to vector<1xf32>
    %111 = vector.shape_cast %110 : vector<1xf32> to vector<1x1xf32>
    %112 = vector.broadcast %111 : vector<1x1xf32> to vector<1x9xf32>
    %113 = arith.subf %109, %112 : vector<1x9xf32>
    %114 = math.exp %113 : vector<1x9xf32>
    %cst_60 = arith.constant dense<0.000000e+00> : vector<1xf32>
    %115 = vector.multi_reduction <add>, %114, %cst_60 [1] : vector<1x9xf32> to vector<1xf32>
    %116 = vector.shape_cast %115 : vector<1xf32> to vector<1x1xf32>
    %117 = tpu.reciprocal %116 {approx = true} : vector<1x1xf32> -> vector<1x1xf32>
    %118 = vector.broadcast %117 : vector<1x1xf32> to vector<1x9xf32>
    %119 = arith.mulf %114, %118 : vector<1x9xf32>
    %120 = vector.extract_strided_slice %104 {offsets = [0, 0], sizes = [9, 32], strides = [1, 1]} : vector<9x128xf32> to vector<9x32xf32>
    %cst_61 = arith.constant dense<0.000000e+00> : vector<1x32xf32>
    %121 = tpu.matmul %119, %120, %cst_61 {dimension_numbers = #tpu.dot_dimension_numbers<[1], [0], [0], [1], [0, 0, 1, 1], [], []>} : vector<1x9xf32>, vector<9x32xf32>, vector<1x32xf32> -> vector<1x32xf32>
    %122 = vector.extract_strided_slice %99 {offsets = [0, 32], sizes = [1, 32], strides = [1, 1]} : vector<1x128xf32> to vector<1x32xf32>
    %123 = vector.extract_strided_slice %103 {offsets = [0, 32], sizes = [9, 32], strides = [1, 1]} : vector<9x128xf32> to vector<9x32xf32>
    %cst_62 = arith.constant dense<0.000000e+00> : vector<1x9xf32>
    %124 = tpu.matmul %122, %123, %cst_62 {dimension_numbers = #tpu.dot_dimension_numbers<[1], [1], [0], [0], [0, 0, 1, 0], [], []>} : vector<1x32xf32>, vector<9x32xf32>, vector<1x9xf32> -> vector<1x9xf32>
    %125 = vector.broadcast %98 : f32 to vector<1x9xf32>
    %126 = arith.mulf %124, %125 : vector<1x9xf32>
    %cst_63 = arith.constant dense<0xFF800000> : vector<1xf32>
    %127 = vector.multi_reduction <maximumf>, %126, %cst_63 [1] : vector<1x9xf32> to vector<1xf32>
    %128 = vector.shape_cast %127 : vector<1xf32> to vector<1x1xf32>
    %129 = vector.broadcast %128 : vector<1x1xf32> to vector<1x9xf32>
    %130 = arith.subf %126, %129 : vector<1x9xf32>
    %131 = math.exp %130 : vector<1x9xf32>
    %cst_64 = arith.constant dense<0.000000e+00> : vector<1xf32>
    %132 = vector.multi_reduction <add>, %131, %cst_64 [1] : vector<1x9xf32> to vector<1xf32>
    %133 = vector.shape_cast %132 : vector<1xf32> to vector<1x1xf32>
    %134 = tpu.reciprocal %133 {approx = true} : vector<1x1xf32> -> vector<1x1xf32>
    %135 = vector.broadcast %134 : vector<1x1xf32> to vector<1x9xf32>
    %136 = arith.mulf %131, %135 : vector<1x9xf32>
    %137 = vector.extract_strided_slice %104 {offsets = [0, 32], sizes = [9, 32], strides = [1, 1]} : vector<9x128xf32> to vector<9x32xf32>
    %cst_65 = arith.constant dense<0.000000e+00> : vector<1x32xf32>
    %138 = tpu.matmul %136, %137, %cst_65 {dimension_numbers = #tpu.dot_dimension_numbers<[1], [0], [0], [1], [0, 0, 1, 1], [], []>} : vector<1x9xf32>, vector<9x32xf32>, vector<1x32xf32> -> vector<1x32xf32>
    %139 = vector.extract_strided_slice %99 {offsets = [0, 64], sizes = [1, 32], strides = [1, 1]} : vector<1x128xf32> to vector<1x32xf32>
    %140 = vector.extract_strided_slice %103 {offsets = [0, 64], sizes = [9, 32], strides = [1, 1]} : vector<9x128xf32> to vector<9x32xf32>
    %cst_66 = arith.constant dense<0.000000e+00> : vector<1x9xf32>
    %141 = tpu.matmul %139, %140, %cst_66 {dimension_numbers = #tpu.dot_dimension_numbers<[1], [1], [0], [0], [0, 0, 1, 0], [], []>} : vector<1x32xf32>, vector<9x32xf32>, vector<1x9xf32> -> vector<1x9xf32>
    %142 = vector.broadcast %98 : f32 to vector<1x9xf32>
    %143 = arith.mulf %141, %142 : vector<1x9xf32>
    %cst_67 = arith.constant dense<0xFF800000> : vector<1xf32>
    %144 = vector.multi_reduction <maximumf>, %143, %cst_67 [1] : vector<1x9xf32> to vector<1xf32>
    %145 = vector.shape_cast %144 : vector<1xf32> to vector<1x1xf32>
    %146 = vector.broadcast %145 : vector<1x1xf32> to vector<1x9xf32>
    %147 = arith.subf %143, %146 : vector<1x9xf32>
    %148 = math.exp %147 : vector<1x9xf32>
    %cst_68 = arith.constant dense<0.000000e+00> : vector<1xf32>
    %149 = vector.multi_reduction <add>, %148, %cst_68 [1] : vector<1x9xf32> to vector<1xf32>
    %150 = vector.shape_cast %149 : vector<1xf32> to vector<1x1xf32>
    %151 = tpu.reciprocal %150 {approx = true} : vector<1x1xf32> -> vector<1x1xf32>
    %152 = vector.broadcast %151 : vector<1x1xf32> to vector<1x9xf32>
    %153 = arith.mulf %148, %152 : vector<1x9xf32>
    %154 = vector.extract_strided_slice %104 {offsets = [0, 64], sizes = [9, 32], strides = [1, 1]} : vector<9x128xf32> to vector<9x32xf32>
    %cst_69 = arith.constant dense<0.000000e+00> : vector<1x32xf32>
    %155 = tpu.matmul %153, %154, %cst_69 {dimension_numbers = #tpu.dot_dimension_numbers<[1], [0], [0], [1], [0, 0, 1, 1], [], []>} : vector<1x9xf32>, vector<9x32xf32>, vector<1x32xf32> -> vector<1x32xf32>
    %156 = vector.extract_strided_slice %99 {offsets = [0, 96], sizes = [1, 32], strides = [1, 1]} : vector<1x128xf32> to vector<1x32xf32>
    %157 = vector.extract_strided_slice %103 {offsets = [0, 96], sizes = [9, 32], strides = [1, 1]} : vector<9x128xf32> to vector<9x32xf32>
    %cst_70 = arith.constant dense<0.000000e+00> : vector<1x9xf32>
    %158 = tpu.matmul %156, %157, %cst_70 {dimension_numbers = #tpu.dot_dimension_numbers<[1], [1], [0], [0], [0, 0, 1, 0], [], []>} : vector<1x32xf32>, vector<9x32xf32>, vector<1x9xf32> -> vector<1x9xf32>
    %159 = vector.broadcast %98 : f32 to vector<1x9xf32>
    %160 = arith.mulf %158, %159 : vector<1x9xf32>
    %cst_71 = arith.constant dense<0xFF800000> : vector<1xf32>
    %161 = vector.multi_reduction <maximumf>, %160, %cst_71 [1] : vector<1x9xf32> to vector<1xf32>
    %162 = vector.shape_cast %161 : vector<1xf32> to vector<1x1xf32>
    %163 = vector.broadcast %162 : vector<1x1xf32> to vector<1x9xf32>
    %164 = arith.subf %160, %163 : vector<1x9xf32>
    %165 = math.exp %164 : vector<1x9xf32>
    %cst_72 = arith.constant dense<0.000000e+00> : vector<1xf32>
    %166 = vector.multi_reduction <add>, %165, %cst_72 [1] : vector<1x9xf32> to vector<1xf32>
    %167 = vector.shape_cast %166 : vector<1xf32> to vector<1x1xf32>
    %168 = tpu.reciprocal %167 {approx = true} : vector<1x1xf32> -> vector<1x1xf32>
    %169 = vector.broadcast %168 : vector<1x1xf32> to vector<1x9xf32>
    %170 = arith.mulf %165, %169 : vector<1x9xf32>
    %171 = vector.extract_strided_slice %104 {offsets = [0, 96], sizes = [9, 32], strides = [1, 1]} : vector<9x128xf32> to vector<9x32xf32>
    %cst_73 = arith.constant dense<0.000000e+00> : vector<1x32xf32>
    %172 = tpu.matmul %170, %171, %cst_73 {dimension_numbers = #tpu.dot_dimension_numbers<[1], [0], [0], [1], [0, 0, 1, 1], [], []>} : vector<1x9xf32>, vector<9x32xf32>, vector<1x32xf32> -> vector<1x32xf32>
    %173 = tpu.concatenate %121, %138, %155, %172 in 1 : vector<1x32xf32>, vector<1x32xf32>, vector<1x32xf32>, vector<1x32xf32> -> vector<1x128xf32>
    %174 = vector.extract_strided_slice %100 {offsets = [0, 0], sizes = [1, 32], strides = [1, 1]} : vector<1x128xf32> to vector<1x32xf32>
    %175 = vector.extract_strided_slice %101 {offsets = [0, 0], sizes = [9, 32], strides = [1, 1]} : vector<9x128xf32> to vector<9x32xf32>
    %cst_74 = arith.constant dense<0.000000e+00> : vector<1x9xf32>
    %176 = tpu.matmul %174, %175, %cst_74 {dimension_numbers = #tpu.dot_dimension_numbers<[1], [1], [0], [0], [0, 0, 1, 0], [], []>} : vector<1x32xf32>, vector<9x32xf32>, vector<1x9xf32> -> vector<1x9xf32>
    %177 = vector.broadcast %98 : f32 to vector<1x9xf32>
    %178 = arith.mulf %176, %177 : vector<1x9xf32>
    %cst_75 = arith.constant dense<0xFF800000> : vector<1xf32>
    %179 = vector.multi_reduction <maximumf>, %178, %cst_75 [1] : vector<1x9xf32> to vector<1xf32>
    %180 = vector.shape_cast %179 : vector<1xf32> to vector<1x1xf32>
    %181 = vector.broadcast %180 : vector<1x1xf32> to vector<1x9xf32>
    %182 = arith.subf %178, %181 : vector<1x9xf32>
    %183 = math.exp %182 : vector<1x9xf32>
    %cst_76 = arith.constant dense<0.000000e+00> : vector<1xf32>
    %184 = vector.multi_reduction <add>, %183, %cst_76 [1] : vector<1x9xf32> to vector<1xf32>
    %185 = vector.shape_cast %184 : vector<1xf32> to vector<1x1xf32>
    %186 = tpu.reciprocal %185 {approx = true} : vector<1x1xf32> -> vector<1x1xf32>
    %187 = vector.broadcast %186 : vector<1x1xf32> to vector<1x9xf32>
    %188 = arith.mulf %183, %187 : vector<1x9xf32>
    %189 = vector.extract_strided_slice %102 {offsets = [0, 0], sizes = [9, 32], strides = [1, 1]} : vector<9x128xf32> to vector<9x32xf32>
    %cst_77 = arith.constant dense<0.000000e+00> : vector<1x32xf32>
    %190 = tpu.matmul %188, %189, %cst_77 {dimension_numbers = #tpu.dot_dimension_numbers<[1], [0], [0], [1], [0, 0, 1, 1], [], []>} : vector<1x9xf32>, vector<9x32xf32>, vector<1x32xf32> -> vector<1x32xf32>
    %191 = vector.extract_strided_slice %100 {offsets = [0, 32], sizes = [1, 32], strides = [1, 1]} : vector<1x128xf32> to vector<1x32xf32>
    %192 = vector.extract_strided_slice %101 {offsets = [0, 32], sizes = [9, 32], strides = [1, 1]} : vector<9x128xf32> to vector<9x32xf32>
    %cst_78 = arith.constant dense<0.000000e+00> : vector<1x9xf32>
    %193 = tpu.matmul %191, %192, %cst_78 {dimension_numbers = #tpu.dot_dimension_numbers<[1], [1], [0], [0], [0, 0, 1, 0], [], []>} : vector<1x32xf32>, vector<9x32xf32>, vector<1x9xf32> -> vector<1x9xf32>
    %194 = vector.broadcast %98 : f32 to vector<1x9xf32>
    %195 = arith.mulf %193, %194 : vector<1x9xf32>
    %cst_79 = arith.constant dense<0xFF800000> : vector<1xf32>
    %196 = vector.multi_reduction <maximumf>, %195, %cst_79 [1] : vector<1x9xf32> to vector<1xf32>
    %197 = vector.shape_cast %196 : vector<1xf32> to vector<1x1xf32>
    %198 = vector.broadcast %197 : vector<1x1xf32> to vector<1x9xf32>
    %199 = arith.subf %195, %198 : vector<1x9xf32>
    %200 = math.exp %199 : vector<1x9xf32>
    %cst_80 = arith.constant dense<0.000000e+00> : vector<1xf32>
    %201 = vector.multi_reduction <add>, %200, %cst_80 [1] : vector<1x9xf32> to vector<1xf32>
    %202 = vector.shape_cast %201 : vector<1xf32> to vector<1x1xf32>
    %203 = tpu.reciprocal %202 {approx = true} : vector<1x1xf32> -> vector<1x1xf32>
    %204 = vector.broadcast %203 : vector<1x1xf32> to vector<1x9xf32>
    %205 = arith.mulf %200, %204 : vector<1x9xf32>
    %206 = vector.extract_strided_slice %102 {offsets = [0, 32], sizes = [9, 32], strides = [1, 1]} : vector<9x128xf32> to vector<9x32xf32>
    %cst_81 = arith.constant dense<0.000000e+00> : vector<1x32xf32>
    %207 = tpu.matmul %205, %206, %cst_81 {dimension_numbers = #tpu.dot_dimension_numbers<[1], [0], [0], [1], [0, 0, 1, 1], [], []>} : vector<1x9xf32>, vector<9x32xf32>, vector<1x32xf32> -> vector<1x32xf32>
    %208 = vector.extract_strided_slice %100 {offsets = [0, 64], sizes = [1, 32], strides = [1, 1]} : vector<1x128xf32> to vector<1x32xf32>
    %209 = vector.extract_strided_slice %101 {offsets = [0, 64], sizes = [9, 32], strides = [1, 1]} : vector<9x128xf32> to vector<9x32xf32>
    %cst_82 = arith.constant dense<0.000000e+00> : vector<1x9xf32>
    %210 = tpu.matmul %208, %209, %cst_82 {dimension_numbers = #tpu.dot_dimension_numbers<[1], [1], [0], [0], [0, 0, 1, 0], [], []>} : vector<1x32xf32>, vector<9x32xf32>, vector<1x9xf32> -> vector<1x9xf32>
    %211 = vector.broadcast %98 : f32 to vector<1x9xf32>
    %212 = arith.mulf %210, %211 : vector<1x9xf32>
    %cst_83 = arith.constant dense<0xFF800000> : vector<1xf32>
    %213 = vector.multi_reduction <maximumf>, %212, %cst_83 [1] : vector<1x9xf32> to vector<1xf32>
    %214 = vector.shape_cast %213 : vector<1xf32> to vector<1x1xf32>
    %215 = vector.broadcast %214 : vector<1x1xf32> to vector<1x9xf32>
    %216 = arith.subf %212, %215 : vector<1x9xf32>
    %217 = math.exp %216 : vector<1x9xf32>
    %cst_84 = arith.constant dense<0.000000e+00> : vector<1xf32>
    %218 = vector.multi_reduction <add>, %217, %cst_84 [1] : vector<1x9xf32> to vector<1xf32>
    %219 = vector.shape_cast %218 : vector<1xf32> to vector<1x1xf32>
    %220 = tpu.reciprocal %219 {approx = true} : vector<1x1xf32> -> vector<1x1xf32>
    %221 = vector.broadcast %220 : vector<1x1xf32> to vector<1x9xf32>
    %222 = arith.mulf %217, %221 : vector<1x9xf32>
    %223 = vector.extract_strided_slice %102 {offsets = [0, 64], sizes = [9, 32], strides = [1, 1]} : vector<9x128xf32> to vector<9x32xf32>
    %cst_85 = arith.constant dense<0.000000e+00> : vector<1x32xf32>
    %224 = tpu.matmul %222, %223, %cst_85 {dimension_numbers = #tpu.dot_dimension_numbers<[1], [0], [0], [1], [0, 0, 1, 1], [], []>} : vector<1x9xf32>, vector<9x32xf32>, vector<1x32xf32> -> vector<1x32xf32>
    %225 = vector.extract_strided_slice %100 {offsets = [0, 96], sizes = [1, 32], strides = [1, 1]} : vector<1x128xf32> to vector<1x32xf32>
    %226 = vector.extract_strided_slice %101 {offsets = [0, 96], sizes = [9, 32], strides = [1, 1]} : vector<9x128xf32> to vector<9x32xf32>
    %cst_86 = arith.constant dense<0.000000e+00> : vector<1x9xf32>
    %227 = tpu.matmul %225, %226, %cst_86 {dimension_numbers = #tpu.dot_dimension_numbers<[1], [1], [0], [0], [0, 0, 1, 0], [], []>} : vector<1x32xf32>, vector<9x32xf32>, vector<1x9xf32> -> vector<1x9xf32>
    %228 = vector.broadcast %98 : f32 to vector<1x9xf32>
    %229 = arith.mulf %227, %228 : vector<1x9xf32>
    %cst_87 = arith.constant dense<0xFF800000> : vector<1xf32>
    %230 = vector.multi_reduction <maximumf>, %229, %cst_87 [1] : vector<1x9xf32> to vector<1xf32>
    %231 = vector.shape_cast %230 : vector<1xf32> to vector<1x1xf32>
    %232 = vector.broadcast %231 : vector<1x1xf32> to vector<1x9xf32>
    %233 = arith.subf %229, %232 : vector<1x9xf32>
    %234 = math.exp %233 : vector<1x9xf32>
    %cst_88 = arith.constant dense<0.000000e+00> : vector<1xf32>
    %235 = vector.multi_reduction <add>, %234, %cst_88 [1] : vector<1x9xf32> to vector<1xf32>
    %236 = vector.shape_cast %235 : vector<1xf32> to vector<1x1xf32>
    %237 = tpu.reciprocal %236 {approx = true} : vector<1x1xf32> -> vector<1x1xf32>
    %238 = vector.broadcast %237 : vector<1x1xf32> to vector<1x9xf32>
    %239 = arith.mulf %234, %238 : vector<1x9xf32>
    %240 = vector.extract_strided_slice %102 {offsets = [0, 96], sizes = [9, 32], strides = [1, 1]} : vector<9x128xf32> to vector<9x32xf32>
    %cst_89 = arith.constant dense<0.000000e+00> : vector<1x32xf32>
    %241 = tpu.matmul %239, %240, %cst_89 {dimension_numbers = #tpu.dot_dimension_numbers<[1], [0], [0], [1], [0, 0, 1, 1], [], []>} : vector<1x9xf32>, vector<9x32xf32>, vector<1x32xf32> -> vector<1x32xf32>
    %242 = tpu.concatenate %190, %207, %224, %241 in 1 : vector<1x32xf32>, vector<1x32xf32>, vector<1x32xf32>, vector<1x32xf32> -> vector<1x128xf32>
    %243 = tpu.concatenate %173, %242 in 0 : vector<1x128xf32>, vector<1x128xf32> -> vector<2x128xf32>
    %c0_90 = arith.constant 0 : index
    %c0_91 = arith.constant 0 : index
    %244 = vector.load %arg14[%c0_90, %c0_91] : memref<128x32xf32, #tpu.memory_space<vmem>>, vector<128x32xf32>
    %cst_92 = arith.constant dense<0.000000e+00> : vector<2x32xf32>
    %245 = tpu.matmul %243, %244, %cst_92 {dimension_numbers = #tpu.dot_dimension_numbers<[1], [0], [0], [1], [0, 0, 1, 1], [], []>} : vector<2x128xf32>, vector<128x32xf32>, vector<2x32xf32> -> vector<2x32xf32>
    %c0_93 = arith.constant 0 : index
    %c0_94 = arith.constant 0 : index
    %246 = vector.load %arg15[%c0_93, %c0_94] : memref<1x32xf32, #tpu.memory_space<vmem>>, vector<1x32xf32>
    %247 = vector.broadcast %246 : vector<1x32xf32> to vector<2x32xf32>
    %248 = arith.addf %245, %247 : vector<2x32xf32>
    %cst_95 = arith.constant 0.000000e+00 : f32
    %249 = vector.broadcast %cst_95 : f32 to vector<2x32xf32>
    %250 = arith.maximumf %248, %249 : vector<2x32xf32>
    %c0_96 = arith.constant 0 : index
    %c0_97 = arith.constant 0 : index
    %251 = vector.load %arg16[%c0_96, %c0_97] : memref<32x32xf32, #tpu.memory_space<vmem>>, vector<32x32xf32>
    %cst_98 = arith.constant dense<0.000000e+00> : vector<2x32xf32>
    %252 = tpu.matmul %250, %251, %cst_98 {dimension_numbers = #tpu.dot_dimension_numbers<[1], [0], [0], [1], [0, 0, 1, 1], [], []>} : vector<2x32xf32>, vector<32x32xf32>, vector<2x32xf32> -> vector<2x32xf32>
    %c0_99 = arith.constant 0 : index
    %c0_100 = arith.constant 0 : index
    %253 = vector.load %arg17[%c0_99, %c0_100] : memref<1x32xf32, #tpu.memory_space<vmem>>, vector<1x32xf32>
    %254 = vector.broadcast %253 : vector<1x32xf32> to vector<2x32xf32>
    %255 = arith.addf %252, %254 : vector<2x32xf32>
    %cst_101 = arith.constant 0.000000e+00 : f32
    %256 = vector.broadcast %cst_101 : f32 to vector<2x32xf32>
    %257 = arith.maximumf %255, %256 : vector<2x32xf32>
    %c0_102 = arith.constant 0 : index
    %c0_103 = arith.constant 0 : index
    %258 = vector.load %arg18[%c0_102, %c0_103] : memref<32x32xf32, #tpu.memory_space<vmem>>, vector<32x32xf32>
    %cst_104 = arith.constant dense<0.000000e+00> : vector<2x32xf32>
    %259 = tpu.matmul %257, %258, %cst_104 {dimension_numbers = #tpu.dot_dimension_numbers<[1], [0], [0], [1], [0, 0, 1, 1], [], []>} : vector<2x32xf32>, vector<32x32xf32>, vector<2x32xf32> -> vector<2x32xf32>
    %c0_105 = arith.constant 0 : index
    %c0_106 = arith.constant 0 : index
    %260 = vector.load %arg19[%c0_105, %c0_106] : memref<1x32xf32, #tpu.memory_space<vmem>>, vector<1x32xf32>
    %261 = vector.broadcast %260 : vector<1x32xf32> to vector<2x32xf32>
    %262 = arith.addf %259, %261 : vector<2x32xf32>
    %263 = vector.extract_strided_slice %262 {offsets = [0, 0], sizes = [1, 32], strides = [1, 1]} : vector<2x32xf32> to vector<1x32xf32>
    %c0_107 = arith.constant 0 : index
    %c0_108 = arith.constant 0 : index
    %c0_109 = arith.constant 0 : index
    %264 = vector.load %arg20[%c0_107, %c0_108, %c0_109] : memref<1x1x32xf32, #tpu.memory_space<vmem>>, vector<1x1x32xf32>
    %265 = vector.shape_cast %264 : vector<1x1x32xf32> to vector<1x32xf32>
    %266 = vector.shape_cast %263 : vector<1x32xf32> to vector<1x1x32xf32>
    tpu.vector_store %arg20[%c0_107, %c0_108, %c0_109], %266 {strides = array<i32>} : memref<1x1x32xf32, #tpu.memory_space<vmem>>, vector<1x1x32xf32>,
    %267 = vector.extract_strided_slice %262 {offsets = [1, 0], sizes = [1, 32], strides = [1, 1]} : vector<2x32xf32> to vector<1x32xf32>
    %c0_110 = arith.constant 0 : index
    %c0_111 = arith.constant 0 : index
    %c0_112 = arith.constant 0 : index
    %268 = vector.load %arg21[%c0_110, %c0_111, %c0_112] : memref<1x1x32xf32, #tpu.memory_space<vmem>>, vector<1x1x32xf32>
    %269 = vector.shape_cast %268 : vector<1x1x32xf32> to vector<1x32xf32>
    %270 = vector.shape_cast %267 : vector<1x32xf32> to vector<1x1x32xf32>
    tpu.vector_store %arg21[%c0_110, %c0_111, %c0_112], %270 {strides = array<i32>} : memref<1x1x32xf32, #tpu.memory_space<vmem>>, vector<1x1x32xf32>,
    return
  }
  func.func @transform_0(%arg0: i32) -> (i32, i32, i32) {
    %c0_i32 = arith.constant 0 : i32
    %c0_i32_0 = arith.constant 0 : i32
    %c0_i32_1 = arith.constant 0 : i32
    return %arg0, %c0_i32, %c0_i32_0 : i32, i32, i32
  }
  func.func @transform_1(%arg0: i32) -> (i32, i32, i32) {
    %c0_i32 = arith.constant 0 : i32
    %c0_i32_0 = arith.constant 0 : i32
    %c0_i32_1 = arith.constant 0 : i32
    return %arg0, %c0_i32, %c0_i32_0 : i32, i32, i32
  }
  func.func @transform_2(%arg0: i32) -> (i32, i32) {
    %c0_i32 = arith.constant 0 : i32
    %c0_i32_0 = arith.constant 0 : i32
    %c0_i32_1 = arith.constant 0 : i32
    return %c0_i32, %c0_i32_0 : i32, i32
  }
  func.func @transform_3(%arg0: i32) -> (i32, i32) {
    %c0_i32 = arith.constant 0 : i32
    %c0_i32_0 = arith.constant 0 : i32
    %c0_i32_1 = arith.constant 0 : i32
    return %c0_i32, %c0_i32_0 : i32, i32
  }
  func.func @transform_4(%arg0: i32) -> (i32, i32) {
    %c0_i32 = arith.constant 0 : i32
    %c0_i32_0 = arith.constant 0 : i32
    %c0_i32_1 = arith.constant 0 : i32
    return %c0_i32, %c0_i32_0 : i32, i32
  }
  func.func @transform_5(%arg0: i32) -> (i32, i32) {
    %c0_i32 = arith.constant 0 : i32
    %c0_i32_0 = arith.constant 0 : i32
    %c0_i32_1 = arith.constant 0 : i32
    return %c0_i32, %c0_i32_0 : i32, i32
  }
  func.func @transform_6(%arg0: i32) -> (i32, i32) {
    %c0_i32 = arith.constant 0 : i32
    %c0_i32_0 = arith.constant 0 : i32
    %c0_i32_1 = arith.constant 0 : i32
    return %c0_i32, %c0_i32_0 : i32, i32
  }
  func.func @transform_7(%arg0: i32) -> (i32, i32) {
    %c0_i32 = arith.constant 0 : i32
    %c0_i32_0 = arith.constant 0 : i32
    %c0_i32_1 = arith.constant 0 : i32
    return %c0_i32, %c0_i32_0 : i32, i32
  }
  func.func @transform_8(%arg0: i32) -> (i32, i32) {
    %c0_i32 = arith.constant 0 : i32
    %c0_i32_0 = arith.constant 0 : i32
    %c0_i32_1 = arith.constant 0 : i32
    return %c0_i32, %c0_i32_0 : i32, i32
  }
  func.func @transform_9(%arg0: i32) -> (i32, i32) {
    %c0_i32 = arith.constant 0 : i32
    %c0_i32_0 = arith.constant 0 : i32
    %c0_i32_1 = arith.constant 0 : i32
    return %c0_i32, %c0_i32_0 : i32, i32
  }
  func.func @transform_10(%arg0: i32) -> (i32, i32) {
    %c0_i32 = arith.constant 0 : i32
    %c0_i32_0 = arith.constant 0 : i32
    %c0_i32_1 = arith.constant 0 : i32
    return %c0_i32, %c0_i32_0 : i32, i32
  }
  func.func @transform_11(%arg0: i32) -> (i32, i32) {
    %c0_i32 = arith.constant 0 : i32
    %c0_i32_0 = arith.constant 0 : i32
    %c0_i32_1 = arith.constant 0 : i32
    return %c0_i32, %c0_i32_0 : i32, i32
  }
  func.func @transform_12(%arg0: i32) -> (i32, i32) {
    %c0_i32 = arith.constant 0 : i32
    %c0_i32_0 = arith.constant 0 : i32
    %c0_i32_1 = arith.constant 0 : i32
    return %c0_i32, %c0_i32_0 : i32, i32
  }
  func.func @transform_13(%arg0: i32) -> (i32, i32) {
    %c0_i32 = arith.constant 0 : i32
    %c0_i32_0 = arith.constant 0 : i32
    %c0_i32_1 = arith.constant 0 : i32
    return %c0_i32, %c0_i32_0 : i32, i32
  }
  func.func @transform_14(%arg0: i32) -> (i32, i32) {
    %c0_i32 = arith.constant 0 : i32
    %c0_i32_0 = arith.constant 0 : i32
    %c0_i32_1 = arith.constant 0 : i32
    return %c0_i32, %c0_i32_0 : i32, i32
  }
  func.func @transform_15(%arg0: i32) -> (i32, i32) {
    %c0_i32 = arith.constant 0 : i32
    %c0_i32_0 = arith.constant 0 : i32
    %c0_i32_1 = arith.constant 0 : i32
    return %c0_i32, %c0_i32_0 : i32, i32
  }
  func.func @transform_16(%arg0: i32) -> (i32, i32) {
    %c0_i32 = arith.constant 0 : i32
    %c0_i32_0 = arith.constant 0 : i32
    %c0_i32_1 = arith.constant 0 : i32
    return %c0_i32, %c0_i32_0 : i32, i32
  }
  func.func @transform_17(%arg0: i32) -> (i32, i32) {
    %c0_i32 = arith.constant 0 : i32
    %c0_i32_0 = arith.constant 0 : i32
    %c0_i32_1 = arith.constant 0 : i32
    return %c0_i32, %c0_i32_0 : i32, i32
  }
  func.func @transform_18(%arg0: i32) -> (i32, i32) {
    %c0_i32 = arith.constant 0 : i32
    %c0_i32_0 = arith.constant 0 : i32
    %c0_i32_1 = arith.constant 0 : i32
    return %c0_i32, %c0_i32_0 : i32, i32
  }
  func.func @transform_19(%arg0: i32) -> (i32, i32, i32) {
    %c0_i32 = arith.constant 0 : i32
    %c0_i32_0 = arith.constant 0 : i32
    %c0_i32_1 = arith.constant 0 : i32
    return %arg0, %c0_i32, %c0_i32_0 : i32, i32, i32
  }
  func.func @transform_20(%arg0: i32) -> (i32, i32, i32) {
    %c0_i32 = arith.constant 0 : i32
    %c0_i32_0 = arith.constant 0 : i32
    %c0_i32_1 = arith.constant 0 : i32
    return %arg0, %c0_i32, %c0_i32_0 : i32, i32, i32
  }
}

</mosaic_0001>

<llo_original>
// kernel: tpu_custom_call.1
$region0: #{tpu_custom_call.1}
  #allocation0 [shape = 'u32[]', space=smem, size = 0x4, offset = 0x4, fixed_abs, tag = 'smem constant byte address 0x4 - core index']
  #allocation1 [shape = 'u32[144,128]{1,0:T(1,128)}', space=vmem, size = 0x12000, scoped, tag = 'internal scratch']
  %s0 = inlined_call_operand.vmem [shape: f32[2,8,16], index: 0, kind: input, shape index: {}]
  %s1 = inlined_call_operand.vmem [shape: f32[2,8,16], index: 1, kind: input, shape index: {}]
  %s2 = inlined_call_operand.vmem [shape: f32[16,32], index: 2, kind: input, shape index: {}]
  %s3 = inlined_call_operand.vmem [shape: f32[1,32], index: 3, kind: input, shape index: {}]
  %s4 = inlined_call_operand.hbm [shape: f32[16,32], index: 4, kind: input, shape index: {}]
  %s5 = inlined_call_operand.hbm [shape: f32[1,32], index: 5, kind: input, shape index: {}]
  %s6 = inlined_call_operand.vmem [shape: f32[32,8], index: 6, kind: input, shape index: {}]
  %s7 = inlined_call_operand.vmem [shape: f32[16,32], index: 7, kind: input, shape index: {}]
  %s8 = inlined_call_operand.hbm [shape: f32[1,32], index: 8, kind: input, shape index: {}]
  %s9 = inlined_call_operand.vmem [shape: f32[16,32], index: 9, kind: input, shape index: {}]
  %s10 = inlined_call_operand.hbm [shape: f32[1,32], index: 10, kind: input, shape index: {}]
  %s11 = inlined_call_operand.vmem [shape: f32[32,8], index: 11, kind: input, shape index: {}]
  %s12 = inlined_call_operand.vmem [shape: f32[32,384], index: 12, kind: input, shape index: {}]
  %s13 = inlined_call_operand.vmem [shape: f32[128,32], index: 13, kind: input, shape index: {}]
  %s14 = inlined_call_operand.vmem [shape: f32[1,32], index: 14, kind: input, shape index: {}]
  %s15 = inlined_call_operand.vmem [shape: f32[32,32], index: 15, kind: input, shape index: {}]
  %s16 = inlined_call_operand.vmem [shape: f32[1,32], index: 16, kind: input, shape index: {}]
  %s17 = inlined_call_operand.vmem [shape: f32[32,32], index: 17, kind: input, shape index: {}]
  %s18 = inlined_call_operand.vmem [shape: f32[1,32], index: 18, kind: input, shape index: {}]
  %s19 = inlined_call_operand.hbm [shape: f32[2,1,32], index: 19, kind: output, shape index: {0}]
  %s20 = inlined_call_operand.hbm [shape: f32[2,1,32], index: 20, kind: output, shape index: {1}]
  %21 = xla_tuple %s19, %s20
  %s22 = sld [smem:[#allocation0]]
  $region133: #{tpu_custom_call.1} parent=0
    _
  %s24 = ssub.s32 1, %s22
  %s25 = scalar_select 0, %s24, %s22
  $region1: #{tpu_custom_call.1} parent=0
    #allocation2 [shape = 'u8[8192]{0}', space=vmem, size = 0x2000, scoped, tag = 'input window, operand 4, single buffered']
    #allocation3 [shape = 's32[2]{0}', space=sflag, size = 0x8, scoped, tag = 'scoped memory for tpu_custom_call.1']
    #allocation4 [shape = 's32[2]{0}', space=sflag, size = 0x8, scoped, tag = 'scoped memory for tpu_custom_call.1']
    #allocation5 [shape = 'u8[512]{0}', space=vmem, size = 0x400, scoped, tag = 'input window, operand 5, single buffered']
    #allocation6 [shape = 's32[1]{0}', space=sflag, size = 0x4, scoped, tag = 'scoped memory for tpu_custom_call.1']
    #allocation7 [shape = 'u8[512]{0}', space=vmem, size = 0x400, scoped, tag = 'input window, operand 8, single buffered']
    #allocation8 [shape = 'u8[512]{0}', space=vmem, size = 0x400, scoped, tag = 'input window, operand 10, single buffered']
    #allocation9 [shape = 's32[1]{0}', space=sflag, size = 0x4, scoped, tag = 'scoped memory for tpu_custom_call.1']
    #allocation10 [shape = 'u8[1024]{0}', space=vmem, size = 0x400, scoped, tag = 'output window, operand 0']
    #allocation11 [shape = 'u8[1024]{0}', space=vmem, size = 0x400, scoped, tag = 'output window, operand 1']
    #allocation12 [shape = 's32[2]{0}', space=sflag, size = 0x8, scoped, tag = 'scoped memory for tpu_custom_call.1']
    %26 = vsyncpa [#allocation3], 0
    %27 = vsyncpa [#allocation6], 0
    %28 = vsyncpa [#allocation9], 0
    %29 = vsyncpa [#allocation4], 0
    %s30 = scalar_lea.sflag [#allocation4], 1
    %31 = vsyncpa %s30, 0
    %32 = vsyncpa [#allocation12], 0
    %s33 = scalar_lea.sflag [#allocation12], 1
    %34 = vsyncpa %s33, 0
    loop: start=0, step=1, limit=4
    $region2: #{tpu_custom_call.1} parent=1 // loop_pre_header
      _
    $region3: #{tpu_custom_call.1} parent=1 // loop_header
      %s36 = sphi 0, %s40
      %p37 = scmp.ge.s32.totalorder %s36, 4
      %s46 = sphi 0, %s48
      %s49 = sphi 0, %s46
      %s50 = sphi 0, %s49
      %s66 = sphi 0, %s50
      %s72 = sphi 0, %s74
      %s75 = sphi 0, %s72
      %s76 = sphi 0, %s75
      %s92 = sphi 0, %s76
      %s96 = sphi 0, %s96
      %s98 = sphi 0, %s96
      %s99 = sphi 0, %s98
      %s113 = sphi 0, %s99
      %s117 = sphi 0, %s117
      %s119 = sphi 0, %s117
      %s120 = sphi 0, %s119
      %s134 = sphi 0, %s120
      %s138 = sphi 0, %s138
      %s140 = sphi 0, %s138
      %s141 = sphi 0, %s140
      %s155 = sphi 0, %s141
      %s159 = sphi 0, %s159
      %s161 = sphi 0, %s159
      %s162 = sphi 0, %s161
      %s176 = sphi 0, %s162
      %s180 = sphi 0, %s180
      %s182 = sphi 0, %s180
      %s183 = sphi 0, %s182
      %s197 = sphi 0, %s183
      %s201 = sphi 0, %s201
      %s203 = sphi 0, %s201
      %s204 = sphi 0, %s203
      %s218 = sphi 0, %s204
      %s222 = sphi 0, %s222
      %s224 = sphi 0, %s222
      %s225 = sphi 0, %s224
      %s239 = sphi 0, %s225
      %s243 = sphi 0, %s243
      %s245 = sphi 0, %s243
      %s246 = sphi 0, %s245
      %s260 = sphi 0, %s246
      %s264 = sphi 0, %s264
      %s266 = sphi 0, %s264
      %s267 = sphi 0, %s266
      %s281 = sphi 0, %s267
      %s285 = sphi 0, %s285
      %s287 = sphi 0, %s285
      %s288 = sphi 0, %s287
      %s302 = sphi 0, %s288
      %s306 = sphi 0, %s306
      %s308 = sphi 0, %s306
      %s309 = sphi 0, %s308
      %s323 = sphi 0, %s309
      %s327 = sphi 0, %s327
      %s329 = sphi 0, %s327
      %s330 = sphi 0, %s329
      %s344 = sphi 0, %s330
      %s348 = sphi 0, %s348
      %s350 = sphi 0, %s348
      %s351 = sphi 0, %s350
      %s365 = sphi 0, %s351
      %s369 = sphi 0, %s369
      %s371 = sphi 0, %s369
      %s372 = sphi 0, %s371
      %s386 = sphi 0, %s372
      %s390 = sphi 0, %s390
      %s392 = sphi 0, %s390
      %s393 = sphi 0, %s392
      %s407 = sphi 0, %s393
      %s411 = sphi 0, %s411
      %s413 = sphi 0, %s411
      %s414 = sphi 0, %s413
      %s428 = sphi 0, %s414
      %s432 = sphi 0, %s432
      %s434 = sphi 0, %s432
      %s435 = sphi 0, %s434
      %s449 = sphi 0, %s435
      %s455 = sphi 0, %s457
      %s458 = sphi 0, %s455
      %s459 = sphi 0, %s458
      %s475 = sphi 0, %s459
      %s481 = sphi 0, %s483
      %s484 = sphi 0, %s481
      %s485 = sphi 0, %s484
      %s501 = sphi 0, %s485
    $region4: #{tpu_custom_call.1} parent=1 // loop_header_branch
      %39 = sbr.rel (%p37) target = $region8
    $region5: #{tpu_custom_call.1} parent=1 // loop_body
      %s41 = ssub.s32 %s36, 1
      %s42 = ssub.s32 %s36, 2
      %s43 = sadd.s32 %s36, 1
      %s44 = ssub.s32 %s36, %s43
      %p45 = scmp.eq.s32.totalorder %s44, 0
      %s47 = sadd.s32 %s46, 1
      %s48 = scalar_select %p45, %s46, %s47
      %p51 = pneg %p45
      %p52 = scmp.eq.s32.totalorder %s36, 1
      %p53 = por %p51, %p52
      %p54 = scmp.ne.s32.totalorder %s46, %s49
      %p55 = scmp.eq.s32.totalorder %s36, 0
      %p56 = por %p54, %p55
      %p57 = scmp.ne.s32.totalorder %s46, %s49
      %p58 = scmp.eq.s32.totalorder %s41, 1
      %p59 = por %p57, %p58
      %p60 = scmp.ne.s32.totalorder %s49, %s50
      %p61 = scmp.eq.s32.totalorder %s41, 0
      %p62 = por %p60, %p61
      %p63 = scmp.ne.s32.totalorder %s49, %s50
      %p64 = scmp.eq.s32.totalorder %s42, 1
      %p65 = por %p63, %p64
      %p67 = scmp.ne.s32.totalorder %s50, %s66
      %p68 = scmp.eq.s32.totalorder %s42, 0
      %p69 = por %p67, %p68
      %s70 = ssub.s32 %s36, %s43
      %p71 = scmp.eq.s32.totalorder %s70, 0
      %s73 = sadd.s32 %s72, 1
      %s74 = scalar_select %p71, %s72, %s73
      %p77 = pneg %p71
      %p78 = scmp.eq.s32.totalorder %s36, 1
      %p79 = por %p77, %p78
      %p80 = scmp.ne.s32.totalorder %s72, %s75
      %p81 = scmp.eq.s32.totalorder %s36, 0
      %p82 = por %p80, %p81
      %p83 = scmp.ne.s32.totalorder %s72, %s75
      %p84 = scmp.eq.s32.totalorder %s41, 1
      %p85 = por %p83, %p84
      %p86 = scmp.ne.s32.totalorder %s75, %s76
      %p87 = scmp.eq.s32.totalorder %s41, 0
      %p88 = por %p86, %p87
      %p89 = scmp.ne.s32.totalorder %s75, %s76
      %p90 = scmp.eq.s32.totalorder %s42, 1
      %p91 = por %p89, %p90
      %p93 = scmp.ne.s32.totalorder %s76, %s92
      %p94 = scmp.eq.s32.totalorder %s42, 0
      %p95 = por %p93, %p94
      %s97 = sadd.s32 %s96, 1
      %p100 = scmp.eq.s32.totalorder %s36, 1
      %p101 = scmp.ne.s32.totalorder %s96, %s98
      %p102 = scmp.eq.s32.totalorder %s36, 0
      %p103 = por %p101, %p102
      %p104 = scmp.ne.s32.totalorder %s96, %s98
      %p105 = scmp.eq.s32.totalorder %s41, 1
      %p106 = por %p104, %p105
      %p107 = scmp.ne.s32.totalorder %s98, %s99
      %p108 = scmp.eq.s32.totalorder %s41, 0
      %p109 = por %p107, %p108
      %p110 = scmp.ne.s32.totalorder %s98, %s99
      %p111 = scmp.eq.s32.totalorder %s42, 1
      %p112 = por %p110, %p111
      %p114 = scmp.ne.s32.totalorder %s99, %s113
      %p115 = scmp.eq.s32.totalorder %s42, 0
      %p116 = por %p114, %p115
      %s118 = sadd.s32 %s117, 1
      %p121 = scmp.eq.s32.totalorder %s36, 1
      %p122 = scmp.ne.s32.totalorder %s117, %s119
      %p123 = scmp.eq.s32.totalorder %s36, 0
      %p124 = por %p122, %p123
      %p125 = scmp.ne.s32.totalorder %s117, %s119
      %p126 = scmp.eq.s32.totalorder %s41, 1
      %p127 = por %p125, %p126
      %p128 = scmp.ne.s32.totalorder %s119, %s120
      %p129 = scmp.eq.s32.totalorder %s41, 0
      %p130 = por %p128, %p129
      %p131 = scmp.ne.s32.totalorder %s119, %s120
      %p132 = scmp.eq.s32.totalorder %s42, 1
      %p133 = por %p131, %p132
      %p135 = scmp.ne.s32.totalorder %s120, %s134
      %p136 = scmp.eq.s32.totalorder %s42, 0
      %p137 = por %p135, %p136
      %s139 = sadd.s32 %s138, 1
      %p142 = scmp.eq.s32.totalorder %s36, 1
      %p143 = scmp.ne.s32.totalorder %s138, %s140
      %p144 = scmp.eq.s32.totalorder %s36, 0
      %p145 = por %p143, %p144
      %p146 = scmp.ne.s32.totalorder %s138, %s140
      %p147 = scmp.eq.s32.totalorder %s41, 1
      %p148 = por %p146, %p147
      %p149 = scmp.ne.s32.totalorder %s140, %s141
      %p150 = scmp.eq.s32.totalorder %s41, 0
      %p151 = por %p149, %p150
      %p152 = scmp.ne.s32.totalorder %s140, %s141
      %p153 = scmp.eq.s32.totalorder %s42, 1
      %p154 = por %p152, %p153
      %p156 = scmp.ne.s32.totalorder %s141, %s155
      %p157 = scmp.eq.s32.totalorder %s42, 0
      %p158 = por %p156, %p157
      %s160 = sadd.s32 %s159, 1
      %p163 = scmp.eq.s32.totalorder %s36, 1
      %p164 = scmp.ne.s32.totalorder %s159, %s161
      %p165 = scmp.eq.s32.totalorder %s36, 0
      %p166 = por %p164, %p165
      %p167 = scmp.ne.s32.totalorder %s159, %s161
      %p168 = scmp.eq.s32.totalorder %s41, 1
      %p169 = por %p167, %p168
      %p170 = scmp.ne.s32.totalorder %s161, %s162
      %p171 = scmp.eq.s32.totalorder %s41, 0
      %p172 = por %p170, %p171
      %p173 = scmp.ne.s32.totalorder %s161, %s162
      %p174 = scmp.eq.s32.totalorder %s42, 1
      %p175 = por %p173, %p174
      %p177 = scmp.ne.s32.totalorder %s162, %s176
      %p178 = scmp.eq.s32.totalorder %s42, 0
      %p179 = por %p177, %p178
      %s181 = sadd.s32 %s180, 1
      %p184 = scmp.eq.s32.totalorder %s36, 1
      %p185 = scmp.ne.s32.totalorder %s180, %s182
      %p186 = scmp.eq.s32.totalorder %s36, 0
      %p187 = por %p185, %p186
      %p188 = scmp.ne.s32.totalorder %s180, %s182
      %p189 = scmp.eq.s32.totalorder %s41, 1
      %p190 = por %p188, %p189
      %p191 = scmp.ne.s32.totalorder %s182, %s183
      %p192 = scmp.eq.s32.totalorder %s41, 0
      %p193 = por %p191, %p192
      %p194 = scmp.ne.s32.totalorder %s182, %s183
      %p195 = scmp.eq.s32.totalorder %s42, 1
      %p196 = por %p194, %p195
      %p198 = scmp.ne.s32.totalorder %s183, %s197
      %p199 = scmp.eq.s32.totalorder %s42, 0
      %p200 = por %p198, %p199
      %s202 = sadd.s32 %s201, 1
      %p205 = scmp.eq.s32.totalorder %s36, 1
      %p206 = scmp.ne.s32.totalorder %s201, %s203
      %p207 = scmp.eq.s32.totalorder %s36, 0
      %p208 = por %p206, %p207
      %p209 = scmp.ne.s32.totalorder %s201, %s203
      %p210 = scmp.eq.s32.totalorder %s41, 1
      %p211 = por %p209, %p210
      %p212 = scmp.ne.s32.totalorder %s203, %s204
      %p213 = scmp.eq.s32.totalorder %s41, 0
      %p214 = por %p212, %p213
      %p215 = scmp.ne.s32.totalorder %s203, %s204
      %p216 = scmp.eq.s32.totalorder %s42, 1
      %p217 = por %p215, %p216
      %p219 = scmp.ne.s32.totalorder %s204, %s218
      %p220 = scmp.eq.s32.totalorder %s42, 0
      %p221 = por %p219, %p220
      %s223 = sadd.s32 %s222, 1
      %p226 = scmp.eq.s32.totalorder %s36, 1
      %p227 = scmp.ne.s32.totalorder %s222, %s224
      %p228 = scmp.eq.s32.totalorder %s36, 0
      %p229 = por %p227, %p228
      %p230 = scmp.ne.s32.totalorder %s222, %s224
      %p231 = scmp.eq.s32.totalorder %s41, 1
      %p232 = por %p230, %p231
      %p233 = scmp.ne.s32.totalorder %s224, %s225
      %p234 = scmp.eq.s32.totalorder %s41, 0
      %p235 = por %p233, %p234
      %p236 = scmp.ne.s32.totalorder %s224, %s225
      %p237 = scmp.eq.s32.totalorder %s42, 1
      %p238 = por %p236, %p237
      %p240 = scmp.ne.s32.totalorder %s225, %s239
      %p241 = scmp.eq.s32.totalorder %s42, 0
      %p242 = por %p240, %p241
      %s244 = sadd.s32 %s243, 1
      %p247 = scmp.eq.s32.totalorder %s36, 1
      %p248 = scmp.ne.s32.totalorder %s243, %s245
      %p249 = scmp.eq.s32.totalorder %s36, 0
      %p250 = por %p248, %p249
      %p251 = scmp.ne.s32.totalorder %s243, %s245
      %p252 = scmp.eq.s32.totalorder %s41, 1
      %p253 = por %p251, %p252
      %p254 = scmp.ne.s32.totalorder %s245, %s246
      %p255 = scmp.eq.s32.totalorder %s41, 0
      %p256 = por %p254, %p255
      %p257 = scmp.ne.s32.totalorder %s245, %s246
      %p258 = scmp.eq.s32.totalorder %s42, 1
      %p259 = por %p257, %p258
      %p261 = scmp.ne.s32.totalorder %s246, %s260
      %p262 = scmp.eq.s32.totalorder %s42, 0
      %p263 = por %p261, %p262
      %s265 = sadd.s32 %s264, 1
      %p268 = scmp.eq.s32.totalorder %s36, 1
      %p269 = scmp.ne.s32.totalorder %s264, %s266
      %p270 = scmp.eq.s32.totalorder %s36, 0
      %p271 = por %p269, %p270
      %p272 = scmp.ne.s32.totalorder %s264, %s266
      %p273 = scmp.eq.s32.totalorder %s41, 1
      %p274 = por %p272, %p273
      %p275 = scmp.ne.s32.totalorder %s266, %s267
      %p276 = scmp.eq.s32.totalorder %s41, 0
      %p277 = por %p275, %p276
      %p278 = scmp.ne.s32.totalorder %s266, %s267
      %p279 = scmp.eq.s32.totalorder %s42, 1
      %p280 = por %p278, %p279
      %p282 = scmp.ne.s32.totalorder %s267, %s281
      %p283 = scmp.eq.s32.totalorder %s42, 0
      %p284 = por %p282, %p283
      %s286 = sadd.s32 %s285, 1
      %p289 = scmp.eq.s32.totalorder %s36, 1
      %p290 = scmp.ne.s32.totalorder %s285, %s287
      %p291 = scmp.eq.s32.totalorder %s36, 0
      %p292 = por %p290, %p291
      %p293 = scmp.ne.s32.totalorder %s285, %s287
      %p294 = scmp.eq.s32.totalorder %s41, 1
      %p295 = por %p293, %p294
      %p296 = scmp.ne.s32.totalorder %s287, %s288
      %p297 = scmp.eq.s32.totalorder %s41, 0
      %p298 = por %p296, %p297
      %p299 = scmp.ne.s32.totalorder %s287, %s288
      %p300 = scmp.eq.s32.totalorder %s42, 1
      %p301 = por %p299, %p300
      %p303 = scmp.ne.s32.totalorder %s288, %s302
      %p304 = scmp.eq.s32.totalorder %s42, 0
      %p305 = por %p303, %p304
      %s307 = sadd.s32 %s306, 1
      %p310 = scmp.eq.s32.totalorder %s36, 1
      %p311 = scmp.ne.s32.totalorder %s306, %s308
      %p312 = scmp.eq.s32.totalorder %s36, 0
      %p313 = por %p311, %p312
      %p314 = scmp.ne.s32.totalorder %s306, %s308
      %p315 = scmp.eq.s32.totalorder %s41, 1
      %p316 = por %p314, %p315
      %p317 = scmp.ne.s32.totalorder %s308, %s309
      %p318 = scmp.eq.s32.totalorder %s41, 0
      %p319 = por %p317, %p318
      %p320 = scmp.ne.s32.totalorder %s308, %s309
      %p321 = scmp.eq.s32.totalorder %s42, 1
      %p322 = por %p320, %p321
      %p324 = scmp.ne.s32.totalorder %s309, %s323
      %p325 = scmp.eq.s32.totalorder %s42, 0
      %p326 = por %p324, %p325
      %s328 = sadd.s32 %s327, 1
      %p331 = scmp.eq.s32.totalorder %s36, 1
      %p332 = scmp.ne.s32.totalorder %s327, %s329
      %p333 = scmp.eq.s32.totalorder %s36, 0
      %p334 = por %p332, %p333
      %p335 = scmp.ne.s32.totalorder %s327, %s329
      %p336 = scmp.eq.s32.totalorder %s41, 1
      %p337 = por %p335, %p336
      %p338 = scmp.ne.s32.totalorder %s329, %s330
      %p339 = scmp.eq.s32.totalorder %s41, 0
      %p340 = por %p338, %p339
      %p341 = scmp.ne.s32.totalorder %s329, %s330
      %p342 = scmp.eq.s32.totalorder %s42, 1
      %p343 = por %p341, %p342
      %p345 = scmp.ne.s32.totalorder %s330, %s344
      %p346 = scmp.eq.s32.totalorder %s42, 0
      %p347 = por %p345, %p346
      %s349 = sadd.s32 %s348, 1
      %p352 = scmp.eq.s32.totalorder %s36, 1
      %p353 = scmp.ne.s32.totalorder %s348, %s350
      %p354 = scmp.eq.s32.totalorder %s36, 0
      %p355 = por %p353, %p354
      %p356 = scmp.ne.s32.totalorder %s348, %s350
      %p357 = scmp.eq.s32.totalorder %s41, 1
      %p358 = por %p356, %p357
      %p359 = scmp.ne.s32.totalorder %s350, %s351
      %p360 = scmp.eq.s32.totalorder %s41, 0
      %p361 = por %p359, %p360
      %p362 = scmp.ne.s32.totalorder %s350, %s351
      %p363 = scmp.eq.s32.totalorder %s42, 1
      %p364 = por %p362, %p363
      %p366 = scmp.ne.s32.totalorder %s351, %s365
      %p367 = scmp.eq.s32.totalorder %s42, 0
      %p368 = por %p366, %p367
      %s370 = sadd.s32 %s369, 1
      %p373 = scmp.eq.s32.totalorder %s36, 1
      %p374 = scmp.ne.s32.totalorder %s369, %s371
      %p375 = scmp.eq.s32.totalorder %s36, 0
      %p376 = por %p374, %p375
      %p377 = scmp.ne.s32.totalorder %s369, %s371
      %p378 = scmp.eq.s32.totalorder %s41, 1
      %p379 = por %p377, %p378
      %p380 = scmp.ne.s32.totalorder %s371, %s372
      %p381 = scmp.eq.s32.totalorder %s41, 0
      %p382 = por %p380, %p381
      %p383 = scmp.ne.s32.totalorder %s371, %s372
      %p384 = scmp.eq.s32.totalorder %s42, 1
      %p385 = por %p383, %p384
      %p387 = scmp.ne.s32.totalorder %s372, %s386
      %p388 = scmp.eq.s32.totalorder %s42, 0
      %p389 = por %p387, %p388
      %s391 = sadd.s32 %s390, 1
      %p394 = scmp.eq.s32.totalorder %s36, 1
      %p395 = scmp.ne.s32.totalorder %s390, %s392
      %p396 = scmp.eq.s32.totalorder %s36, 0
      %p397 = por %p395, %p396
      %p398 = scmp.ne.s32.totalorder %s390, %s392
      %p399 = scmp.eq.s32.totalorder %s41, 1
      %p400 = por %p398, %p399
      %p401 = scmp.ne.s32.totalorder %s392, %s393
      %p402 = scmp.eq.s32.totalorder %s41, 0
      %p403 = por %p401, %p402
      %p404 = scmp.ne.s32.totalorder %s392, %s393
      %p405 = scmp.eq.s32.totalorder %s42, 1
      %p406 = por %p404, %p405
      %p408 = scmp.ne.s32.totalorder %s393, %s407
      %p409 = scmp.eq.s32.totalorder %s42, 0
      %p410 = por %p408, %p409
      %s412 = sadd.s32 %s411, 1
      %p415 = scmp.eq.s32.totalorder %s36, 1
      %p416 = scmp.ne.s32.totalorder %s411, %s413
      %p417 = scmp.eq.s32.totalorder %s36, 0
      %p418 = por %p416, %p417
      %p419 = scmp.ne.s32.totalorder %s411, %s413
      %p420 = scmp.eq.s32.totalorder %s41, 1
      %p421 = por %p419, %p420
      %p422 = scmp.ne.s32.totalorder %s413, %s414
      %p423 = scmp.eq.s32.totalorder %s41, 0
      %p424 = por %p422, %p423
      %p425 = scmp.ne.s32.totalorder %s413, %s414
      %p426 = scmp.eq.s32.totalorder %s42, 1
      %p427 = por %p425, %p426
      %p429 = scmp.ne.s32.totalorder %s414, %s428
      %p430 = scmp.eq.s32.totalorder %s42, 0
      %p431 = por %p429, %p430
      %s433 = sadd.s32 %s432, 1
      %p436 = scmp.eq.s32.totalorder %s36, 1
      %p437 = scmp.ne.s32.totalorder %s432, %s434
      %p438 = scmp.eq.s32.totalorder %s36, 0
      %p439 = por %p437, %p438
      %p440 = scmp.ne.s32.totalorder %s432, %s434
      %p441 = scmp.eq.s32.totalorder %s41, 1
      %p442 = por %p440, %p441
      %p443 = scmp.ne.s32.totalorder %s434, %s435
      %p444 = scmp.eq.s32.totalorder %s41, 0
      %p445 = por %p443, %p444
      %p446 = scmp.ne.s32.totalorder %s434, %s435
      %p447 = scmp.eq.s32.totalorder %s42, 1
      %p448 = por %p446, %p447
      %p450 = scmp.ne.s32.totalorder %s435, %s449
      %p451 = scmp.eq.s32.totalorder %s42, 0
      %p452 = por %p450, %p451
      %s453 = ssub.s32 %s36, %s43
      %p454 = scmp.eq.s32.totalorder %s453, 0
      %s456 = sadd.s32 %s455, 1
      %s457 = scalar_select %p454, %s455, %s456
      %p460 = pneg %p454
      %p461 = scmp.eq.s32.totalorder %s36, 1
      %p462 = por %p460, %p461
      %p463 = scmp.ne.s32.totalorder %s455, %s458
      %p464 = scmp.eq.s32.totalorder %s36, 0
      %p465 = por %p463, %p464
      %p466 = scmp.ne.s32.totalorder %s455, %s458
      %p467 = scmp.eq.s32.totalorder %s41, 1
      %p468 = por %p466, %p467
      %p469 = scmp.ne.s32.totalorder %s458, %s459
      %p470 = scmp.eq.s32.totalorder %s41, 0
      %p471 = por %p469, %p470
      %p472 = scmp.ne.s32.totalorder %s458, %s459
      %p473 = scmp.eq.s32.totalorder %s42, 1
      %p474 = por %p472, %p473
      %p476 = scmp.ne.s32.totalorder %s459, %s475
      %p477 = scmp.eq.s32.totalorder %s42, 0
      %p478 = por %p476, %p477
      %s479 = ssub.s32 %s36, %s43
      %p480 = scmp.eq.s32.totalorder %s479, 0
      %s482 = sadd.s32 %s481, 1
      %s483 = scalar_select %p480, %s481, %s482
      %p486 = pneg %p480
      %p487 = scmp.eq.s32.totalorder %s36, 1
      %p488 = por %p486, %p487
      %p489 = scmp.ne.s32.totalorder %s481, %s484
      %p490 = scmp.eq.s32.totalorder %s36, 0
      %p491 = por %p489, %p490
      %p492 = scmp.ne.s32.totalorder %s481, %s484
      %p493 = scmp.eq.s32.totalorder %s41, 1
      %p494 = por %p492, %p493
      %p495 = scmp.ne.s32.totalorder %s484, %s485
      %p496 = scmp.eq.s32.totalorder %s41, 0
      %p497 = por %p495, %p496
      %p498 = scmp.ne.s32.totalorder %s484, %s485
      %p499 = scmp.eq.s32.totalorder %s42, 1
      %p500 = por %p498, %p499
      %p502 = scmp.ne.s32.totalorder %s485, %s501
      %p503 = scmp.eq.s32.totalorder %s42, 0
      %p504 = por %p502, %p503
      %p505 = scmp.le.s32.totalorder 1, %s36
      %p506 = scmp.lt.s32.totalorder %s36, 3
      %p507 = pnand %p505, %p506
      %p508 = pneg %p507
      // Predicated region
      $region9: #{tpu_custom_call.1} parent=5 // pred_check
        _
      $region10: #{tpu_custom_call.1} parent=5 // pred_check_branch
        %510 = sbr.rel (%p507) target = $region12
      $region11: #{tpu_custom_call.1} parent=5 // pred_region
        %s511 = ssub.s32 %s36, 1
        // Predicated region
        $region13: #{tpu_custom_call.1} parent=11 // pred_check
          %p512 = pneg %p109
        $region14: #{tpu_custom_call.1} parent=11 // pred_check_branch
          %514 = sbr.rel (%p512) target = $region16
        $region15: #{tpu_custom_call.1} parent=11 // pred_region
          _
        $region16: #{tpu_custom_call.1} parent=11 // pred_fallthru
          _
        // Predicated region
        $region17: #{tpu_custom_call.1} parent=11 // pred_check
          %p515 = pneg %p130
        $region18: #{tpu_custom_call.1} parent=11 // pred_check_branch
          %517 = sbr.rel (%p515) target = $region20
        $region19: #{tpu_custom_call.1} parent=11 // pred_region
          _
        $region20: #{tpu_custom_call.1} parent=11 // pred_fallthru
          _
        // Predicated region
        $region21: #{tpu_custom_call.1} parent=11 // pred_check
          %p518 = pneg %p151
        $region22: #{tpu_custom_call.1} parent=11 // pred_check_branch
          %520 = sbr.rel (%p518) target = $region24
        $region23: #{tpu_custom_call.1} parent=11 // pred_region
          %s522 = ssub.s32 256, 256
          %523 = vsyncadd [#allocation3], %s522
          %s524 = sshll.u32 [#allocation2], 4
          %s525 = int_to_ptr.vmem [resolvable:$true] %s524
          %530 = dma.hbm_to_vmem [thread:$0]  %s4, 256, %s525, [#allocation3], 128, 128, 8
        $region24: #{tpu_custom_call.1} parent=11 // pred_fallthru
          _
        // Predicated region
        $region25: #{tpu_custom_call.1} parent=11 // pred_check
          %p531 = pneg %p172
        $region26: #{tpu_custom_call.1} parent=11 // pred_check_branch
          %533 = sbr.rel (%p531) target = $region28
        $region27: #{tpu_custom_call.1} parent=11 // pred_region
          %s535 = ssub.s32 16, 16
          %536 = vsyncadd [#allocation6], %s535
          %s538 = sshll.u32 [#allocation5], 4
          %s539 = int_to_ptr.vmem [resolvable:$true] %s538
          %541 = dma.hbm_to_vmem [thread:$0]  %s5, 16, %s539, [#allocation6]
        $region28: #{tpu_custom_call.1} parent=11 // pred_fallthru
          _
        // Predicated region
        $region29: #{tpu_custom_call.1} parent=11 // pred_check
          %p542 = pneg %p193
        $region30: #{tpu_custom_call.1} parent=11 // pred_check_branch
          %544 = sbr.rel (%p542) target = $region32
        $region31: #{tpu_custom_call.1} parent=11 // pred_region
          _
        $region32: #{tpu_custom_call.1} parent=11 // pred_fallthru
          _
        // Predicated region
        $region33: #{tpu_custom_call.1} parent=11 // pred_check
          %p545 = pneg %p214
        $region34: #{tpu_custom_call.1} parent=11 // pred_check_branch
          %547 = sbr.rel (%p545) target = $region36
        $region35: #{tpu_custom_call.1} parent=11 // pred_region
          _
        $region36: #{tpu_custom_call.1} parent=11 // pred_fallthru
          _
        // Predicated region
        $region37: #{tpu_custom_call.1} parent=11 // pred_check
          %p548 = pneg %p235
        $region38: #{tpu_custom_call.1} parent=11 // pred_check_branch
          %550 = sbr.rel (%p548) target = $region40
        $region39: #{tpu_custom_call.1} parent=11 // pred_region
          %s552 = ssub.s32 16, 16
          %553 = vsyncadd [#allocation6], %s552
          %s555 = sshll.u32 [#allocation7], 4
          %s556 = int_to_ptr.vmem [resolvable:$true] %s555
          %558 = dma.hbm_to_vmem [thread:$0]  %s8, 16, %s556, [#allocation6]
        $region40: #{tpu_custom_call.1} parent=11 // pred_fallthru
          _
        // Predicated region
        $region41: #{tpu_custom_call.1} parent=11 // pred_check
          %p559 = pneg %p256
        $region42: #{tpu_custom_call.1} parent=11 // pred_check_branch
          %561 = sbr.rel (%p559) target = $region44
        $region43: #{tpu_custom_call.1} parent=11 // pred_region
          _
        $region44: #{tpu_custom_call.1} parent=11 // pred_fallthru
          _
        // Predicated region
        $region45: #{tpu_custom_call.1} parent=11 // pred_check
          %p562 = pneg %p277
        $region46: #{tpu_custom_call.1} parent=11 // pred_check_branch
          %564 = sbr.rel (%p562) target = $region48
        $region47: #{tpu_custom_call.1} parent=11 // pred_region
          %s566 = ssub.s32 16, 16
          %567 = vsyncadd [#allocation9], %s566
          %s569 = sshll.u32 [#allocation8], 4
          %s570 = int_to_ptr.vmem [resolvable:$true] %s569
          %572 = dma.hbm_to_vmem [thread:$0]  %s10, 16, %s570, [#allocation9]
        $region48: #{tpu_custom_call.1} parent=11 // pred_fallthru
          _
        // Predicated region
        $region49: #{tpu_custom_call.1} parent=11 // pred_check
          %p573 = pneg %p298
        $region50: #{tpu_custom_call.1} parent=11 // pred_check_branch
          %575 = sbr.rel (%p573) target = $region52
        $region51: #{tpu_custom_call.1} parent=11 // pred_region
          _
        $region52: #{tpu_custom_call.1} parent=11 // pred_fallthru
          _
        // Predicated region
        $region53: #{tpu_custom_call.1} parent=11 // pred_check
          %p576 = pneg %p319
        $region54: #{tpu_custom_call.1} parent=11 // pred_check_branch
          %578 = sbr.rel (%p576) target = $region56
        $region55: #{tpu_custom_call.1} parent=11 // pred_region
          _
        $region56: #{tpu_custom_call.1} parent=11 // pred_fallthru
          _
        // Predicated region
        $region57: #{tpu_custom_call.1} parent=11 // pred_check
          %p579 = pneg %p340
        $region58: #{tpu_custom_call.1} parent=11 // pred_check_branch
          %581 = sbr.rel (%p579) target = $region60
        $region59: #{tpu_custom_call.1} parent=11 // pred_region
          _
        $region60: #{tpu_custom_call.1} parent=11 // pred_fallthru
          _
        // Predicated region
        $region61: #{tpu_custom_call.1} parent=11 // pred_check
          %p582 = pneg %p361
        $region62: #{tpu_custom_call.1} parent=11 // pred_check_branch
          %584 = sbr.rel (%p582) target = $region64
        $region63: #{tpu_custom_call.1} parent=11 // pred_region
          _
        $region64: #{tpu_custom_call.1} parent=11 // pred_fallthru
          _
        // Predicated region
        $region65: #{tpu_custom_call.1} parent=11 // pred_check
          %p585 = pneg %p382
        $region66: #{tpu_custom_call.1} parent=11 // pred_check_branch
          %587 = sbr.rel (%p585) target = $region68
        $region67: #{tpu_custom_call.1} parent=11 // pred_region
          _
        $region68: #{tpu_custom_call.1} parent=11 // pred_fallthru
          _
        // Predicated region
        $region69: #{tpu_custom_call.1} parent=11 // pred_check
          %p588 = pneg %p403
        $region70: #{tpu_custom_call.1} parent=11 // pred_check_branch
          %590 = sbr.rel (%p588) target = $region72
        $region71: #{tpu_custom_call.1} parent=11 // pred_region
          _
        $region72: #{tpu_custom_call.1} parent=11 // pred_fallthru
          _
        // Predicated region
        $region73: #{tpu_custom_call.1} parent=11 // pred_check
          %p591 = pneg %p424
        $region74: #{tpu_custom_call.1} parent=11 // pred_check_branch
          %593 = sbr.rel (%p591) target = $region76
        $region75: #{tpu_custom_call.1} parent=11 // pred_region
          _
        $region76: #{tpu_custom_call.1} parent=11 // pred_fallthru
          _
        // Predicated region
        $region77: #{tpu_custom_call.1} parent=11 // pred_check
          %p594 = pneg %p445
        $region78: #{tpu_custom_call.1} parent=11 // pred_check_branch
          %596 = sbr.rel (%p594) target = $region80
        $region79: #{tpu_custom_call.1} parent=11 // pred_region
          _
        $region80: #{tpu_custom_call.1} parent=11 // pred_fallthru
          _
      $region12: #{tpu_custom_call.1} parent=5 // pred_fallthru
        _
      %p597 = scmp.lt.s32.totalorder %s36, 2
      // Predicated region
      $region81: #{tpu_custom_call.1} parent=5 // pred_check
        %p598 = pneg %p597
      $region82: #{tpu_custom_call.1} parent=5 // pred_check_branch
        %600 = sbr.rel (%p598) target = $region84
      $region83: #{tpu_custom_call.1} parent=5 // pred_region
        // Predicated region
        $region85: #{tpu_custom_call.1} parent=83 // pred_check
          %p601 = pneg %p56
        $region86: #{tpu_custom_call.1} parent=83 // pred_check_branch
          %603 = sbr.rel (%p601) target = $region88
        $region87: #{tpu_custom_call.1} parent=83 // pred_region
          %p604 = scmp.lt.s32.totalorder %s36, 1
          %s605 = scalar_select %p604, %s36, 1
          %s606 = smul.addr %s605, 8
          %s607 = scalar_lea.vmem %s0, %s606
        $region88: #{tpu_custom_call.1} parent=83 // pred_fallthru
          _
        // Predicated region
        $region89: #{tpu_custom_call.1} parent=83 // pred_check
          %p608 = pneg %p82
        $region90: #{tpu_custom_call.1} parent=83 // pred_check_branch
          %610 = sbr.rel (%p608) target = $region92
        $region91: #{tpu_custom_call.1} parent=83 // pred_region
          %p611 = scmp.lt.s32.totalorder %s36, 1
          %s612 = scalar_select %p611, %s36, 1
          %s613 = smul.addr %s612, 8
          %s614 = scalar_lea.vmem %s1, %s613
        $region92: #{tpu_custom_call.1} parent=83 // pred_fallthru
          _
      $region84: #{tpu_custom_call.1} parent=5 // pred_fallthru
        _
      %p615 = scmp.le.s32.totalorder 1, %s36
      %p616 = scmp.lt.s32.totalorder %s36, 3
      %p617 = pnand %p615, %p616
      %p618 = pneg %p617
      // Predicated region
      $region93: #{tpu_custom_call.1} parent=5 // pred_check
        _
      $region94: #{tpu_custom_call.1} parent=5 // pred_check_branch
        %620 = sbr.rel (%p617) target = $region96
      $region95: #{tpu_custom_call.1} parent=5 // pred_region
        %s621 = ssub.s32 %s36, 1
        // Predicated region
        $region97: #{tpu_custom_call.1} parent=95 // pred_check
          %p622 = pneg %p151
        $region98: #{tpu_custom_call.1} parent=95 // pred_check_branch
          %624 = sbr.rel (%p622) target = $region100
        $region99: #{tpu_custom_call.1} parent=95 // pred_region
          %625 = dma.done [#allocation3], 256
        $region100: #{tpu_custom_call.1} parent=95 // pred_fallthru
          _
        // Predicated region
        $region101: #{tpu_custom_call.1} parent=95 // pred_check
          %p626 = pneg %p172
        $region102: #{tpu_custom_call.1} parent=95 // pred_check_branch
          %628 = sbr.rel (%p626) target = $region104
        $region103: #{tpu_custom_call.1} parent=95 // pred_region
          %629 = dma.done [#allocation6], 16
        $region104: #{tpu_custom_call.1} parent=95 // pred_fallthru
          _
        // Predicated region
        $region105: #{tpu_custom_call.1} parent=95 // pred_check
          %p630 = pneg %p235
        $region106: #{tpu_custom_call.1} parent=95 // pred_check_branch
          %632 = sbr.rel (%p630) target = $region108
        $region107: #{tpu_custom_call.1} parent=95 // pred_region
          %633 = dma.done [#allocation6], 16
        $region108: #{tpu_custom_call.1} parent=95 // pred_fallthru
          _
        // Predicated region
        $region109: #{tpu_custom_call.1} parent=95 // pred_check
          %p634 = pneg %p277
        $region110: #{tpu_custom_call.1} parent=95 // pred_check_branch
          %636 = sbr.rel (%p634) target = $region112
        $region111: #{tpu_custom_call.1} parent=95 // pred_region
          %637 = dma.done [#allocation9], 16
        $region112: #{tpu_custom_call.1} parent=95 // pred_fallthru
          _
        %p638 = scmp.lt.s32.totalorder %s41, 1
        %s639 = scalar_select %p638, %s41, 1
        %s640 = smul.addr %s639, 8
        %s641 = scalar_lea.vmem %s0, %s640
        %p642 = pneg %p62
        %p643 = pneg %p59
        %p644 = scmp.lt.s32.totalorder %s41, 1
        %s645 = scalar_select %p644, %s41, 1
        %s646 = smul.addr %s645, 8
        %s647 = scalar_lea.vmem %s1, %s646
        %p648 = pneg %p88
        %p649 = pneg %p85
        %p650 = pneg %p109
        %p651 = pneg %p106
        %p652 = pneg %p130
        %p653 = pneg %p127
        %p654 = pneg %p151
        %p655 = pneg %p148
        %p656 = pneg %p172
        %p657 = pneg %p169
        %p658 = pneg %p193
        %p659 = pneg %p190
        %p660 = pneg %p214
        %p661 = pneg %p211
        %p662 = pneg %p235
        %p663 = pneg %p232
        %p664 = pneg %p256
        %p665 = pneg %p253
        %p666 = pneg %p277
        %p667 = pneg %p274
        %p668 = pneg %p298
        %p669 = pneg %p295
        %p670 = pneg %p319
        %p671 = pneg %p316
        %p672 = pneg %p340
        %p673 = pneg %p337
        %p674 = pneg %p361
        %p675 = pneg %p358
        %p676 = pneg %p382
        %p677 = pneg %p379
        %p678 = pneg %p403
        %p679 = pneg %p400
        %p680 = pneg %p424
        %p681 = pneg %p421
        %p682 = pneg %p445
        %p683 = pneg %p442
        %p684 = pneg %p471
        %p685 = pneg %p468
        %s686 = sand.u32 %s458, 1
        %s687 = scalar_lea.sflag [#allocation4], %s686
        %s688 = sand.u32 %s458, 1
        %s689 = scalar_lea.vmem [#allocation10], %s688
        %p690 = pneg %p497
        %p691 = pneg %p494
        %s692 = sand.u32 %s484, 1
        %s693 = scalar_lea.sflag [#allocation12], %s692
        %s694 = sand.u32 %s484, 1
        %s695 = scalar_lea.vmem [#allocation11], %s694
        %p696 = scmp.lt.s32.totalorder %s41, 1
        %s697 = scalar_select %p696, %s41, 1
        %s698 = smul.addr %s697, 8
        %s699 = scalar_lea.vmem %s0, %s698
        %p700 = scmp.lt.s32.totalorder %s41, 1
        %s701 = scalar_select %p700, %s41, 1
        %s702 = smul.addr %s701, 8
        %s703 = scalar_lea.vmem %s1, %s702
        %v704 = vld [vmem:[%s699] sm:$0xff]
        %v705 = vld [vmem:[%s703] sm:$0xff]
        %v706 = vld [vmem:[%s2] sm:$0xff]
        %v707 = vld [vmem:[%s2 + $0x8] sm:$0xff]
        %v708 = vld [vmem:[%s3] sm:$0x1]
        %v709 = vld [vmem:[#allocation2] sm:$0xff]
        %v710 = vld [vmem:[#allocation2 + $0x8] sm:$0xff]
        %v711 = vld [vmem:[#allocation5] sm:$0x1]
        %v712 = vld [vmem:[%s6] sm:$0xff]
        %v713 = vld [vmem:[%s6 + $0x8] sm:$0xff]
        %v714 = vld [vmem:[%s6 + $0x10] sm:$0xff]
        %v715 = vld [vmem:[%s6 + $0x18] sm:$0xff]
        %v717 = vlaneseq
        %v718 = vshrl.u32 %v717, 7
        %v719 = vsub.s32 0, %v718
        %v720 = vrot.slane %v708, %v719
        %vm722 = vcmask 130048
        %v724 = vsel %vm722, %v704, 0
        %726 = vmatprep.subr.mxu0 0.0
        %727 = vmatpush1.msra.mxu0 %v706
        %728 = vmatprep.subr.mxu0 0.0
        %729 = vmatpush1.msra.mxu0 %v707
        %730 = vmatprep.subr.mxu0 0.0
        %731 = vmatpush1.msra.mxu0 0.0
        %732 = vmatprep.subr.mxu0 0.0
        %733 = vmatpush1.msra.mxu0 0.0
        %734 = vmatprep.subr.mxu0 0.0
        %735 = vmatpush1.msra.mxu0 0.0
        %736 = vmatprep.subr.mxu0 0.0
        %737 = vmatpush1.msra.mxu0 0.0
        %738 = vmatprep.subr.mxu0 0.0
        %739 = vmatpush1.msra.mxu0 0.0
        %740 = vmatprep.subr.mxu0 0.0
        %741 = vmatpush1.msra.mxu0 0.0
        %742 = vmatprep.subr.mxu0 0.0
        %743 = vmatpush1.msra.mxu0 0.0
        %744 = vmatprep.subr.mxu0 0.0
        %745 = vmatpush1.msra.mxu0 0.0
        %746 = vmatprep.subr.mxu0 0.0
        %747 = vmatpush1.msra.mxu0 0.0
        %748 = vmatprep.subr.mxu0 0.0
        %749 = vmatpush1.msra.mxu0 0.0
        %750 = vmatprep.subr.mxu0 0.0
        %751 = vmatpush1.msra.mxu0 0.0
        %752 = vmatprep.subr.mxu0 0.0
        %753 = vmatpush1.msra.mxu0 0.0
        %754 = vmatprep.subr.mxu0 0.0
        %755 = vmatpush1.msra.mxu0 0.0
        %756 = vmatprep.subr.mxu0 0.0
        %757 = vmatpush1.msra.mxu0 0.0
        %758 = vmatprep.subr.mxu0 0.0
        %759 = vmatpush1.msra.mxu0 0.0
        %760 = vmatprep.subr.mxu0 0.0
        %761 = vmatpush1.msra.mxu0 0.0
        %762 = vmatprep.subr.mxu0 0.0
        %763 = vmatpush1.msra.mxu0 0.0
        %764 = vmatprep.subr.mxu0 0.0
        %765 = vmatpush1.msra.mxu0 0.0
        %766 = vmatprep.subr.mxu0 0.0
        %767 = vmatpush1.msra.mxu0 0.0
        %768 = vmatprep.subr.mxu0 0.0
        %769 = vmatpush1.msra.mxu0 0.0
        %770 = vmatprep.subr.mxu0 0.0
        %771 = vmatpush1.msra.mxu0 0.0
        %772 = vmatprep.subr.mxu0 0.0
        %773 = vmatpush1.msra.mxu0 0.0
        %774 = vmatprep.subr.mxu0 0.0
        %775 = vmatpush1.msra.mxu0 0.0
        %776 = vmatprep.subr.mxu0 0.0
        %777 = vmatpush1.msra.mxu0 0.0
        %778 = vmatprep.subr.mxu0 0.0
        %779 = vmatpush1.msra.mxu0 0.0
        %780 = vmatprep.subr.mxu0 0.0
        %781 = vmatpush1.msra.mxu0 0.0
        %782 = vmatprep.subr.mxu0 0.0
        %783 = vmatpush1.msra.mxu0 0.0
        %784 = vmatprep.subr.mxu0 0.0
        %785 = vmatpush1.msra.mxu0 0.0
        %786 = vmatprep.subr.mxu0 0.0
        %787 = vmatpush1.msra.mxu0 0.0
        %788 = vmatprep.subr.mxu0 0.0
        %789 = vmatpush1.msra.mxu0 0.0
        %790 = vmatprep.mubr.f32.mxu0 0.0
        %791 = vmatmul.mubr.f32.gmra.mrb[0].mxu0 %v724
        %v792 = vpop.f32.mrb[0].mxu0
        %v793 = vadd.f32 %v720, %v792
        %v794 = vpop.f32.mrb[0].mxu0
        %795 = vdwg.mxu0
        %v796 = vmax.f32 %v793, 0.0
        %v798 = vlaneseq
        %v799 = vshrl.u32 %v798, 7
        %v800 = vsub.s32 0, %v799
        %v801 = vrot.slane %v711, %v800
        %803 = vmatprep.subr.mxu0 0.0
        %804 = vmatpush1.msra.mxu0 %v709
        %805 = vmatprep.subr.mxu0 0.0
        %806 = vmatpush1.msra.mxu0 %v710
        %807 = vmatprep.subr.mxu0 0.0
        %808 = vmatpush1.msra.mxu0 0.0
        %809 = vmatprep.subr.mxu0 0.0
        %810 = vmatpush1.msra.mxu0 0.0
        %811 = vmatprep.subr.mxu0 0.0
        %812 = vmatpush1.msra.mxu0 0.0
        %813 = vmatprep.subr.mxu0 0.0
        %814 = vmatpush1.msra.mxu0 0.0
        %815 = vmatprep.subr.mxu0 0.0
        %816 = vmatpush1.msra.mxu0 0.0
        %817 = vmatprep.subr.mxu0 0.0
        %818 = vmatpush1.msra.mxu0 0.0
        %819 = vmatprep.subr.mxu0 0.0
        %820 = vmatpush1.msra.mxu0 0.0
        %821 = vmatprep.subr.mxu0 0.0
        %822 = vmatpush1.msra.mxu0 0.0
        %823 = vmatprep.subr.mxu0 0.0
        %824 = vmatpush1.msra.mxu0 0.0
        %825 = vmatprep.subr.mxu0 0.0
        %826 = vmatpush1.msra.mxu0 0.0
        %827 = vmatprep.subr.mxu0 0.0
        %828 = vmatpush1.msra.mxu0 0.0
        %829 = vmatprep.subr.mxu0 0.0
        %830 = vmatpush1.msra.mxu0 0.0
        %831 = vmatprep.subr.mxu0 0.0
        %832 = vmatpush1.msra.mxu0 0.0
        %833 = vmatprep.subr.mxu0 0.0
        %834 = vmatpush1.msra.mxu0 0.0
        %835 = vmatprep.subr.mxu0 0.0
        %836 = vmatpush1.msra.mxu0 0.0
        %837 = vmatprep.subr.mxu0 0.0
        %838 = vmatpush1.msra.mxu0 0.0
        %839 = vmatprep.subr.mxu0 0.0
        %840 = vmatpush1.msra.mxu0 0.0
        %841 = vmatprep.subr.mxu0 0.0
        %842 = vmatpush1.msra.mxu0 0.0
        %843 = vmatprep.subr.mxu0 0.0
        %844 = vmatpush1.msra.mxu0 0.0
        %845 = vmatprep.subr.mxu0 0.0
        %846 = vmatpush1.msra.mxu0 0.0
        %847 = vmatprep.subr.mxu0 0.0
        %848 = vmatpush1.msra.mxu0 0.0
        %849 = vmatprep.subr.mxu0 0.0
        %850 = vmatpush1.msra.mxu0 0.0
        %851 = vmatprep.subr.mxu0 0.0
        %852 = vmatpush1.msra.mxu0 0.0
        %853 = vmatprep.subr.mxu0 0.0
        %854 = vmatpush1.msra.mxu0 0.0
        %855 = vmatprep.subr.mxu0 0.0
        %856 = vmatpush1.msra.mxu0 0.0
        %857 = vmatprep.subr.mxu0 0.0
        %858 = vmatpush1.msra.mxu0 0.0
        %859 = vmatprep.subr.mxu0 0.0
        %860 = vmatpush1.msra.mxu0 0.0
        %861 = vmatprep.subr.mxu0 0.0
        %862 = vmatpush1.msra.mxu0 0.0
        %863 = vmatprep.subr.mxu0 0.0
        %864 = vmatpush1.msra.mxu0 0.0
        %865 = vmatprep.subr.mxu0 0.0
        %866 = vmatpush1.msra.mxu0 0.0
        %867 = vmatprep.mubr.f32.mxu0 0.0
        %868 = vmatmul.mubr.f32.gmra.mrb[0].mxu0 %v724
        %v869 = vpop.f32.mrb[0].mxu0
        %v870 = vadd.f32 %v801, %v869
        %v871 = vpop.f32.mrb[0].mxu0
        %872 = vdwg.mxu0
        %v873 = vmax.f32 %v870, 0.0
        %vm874 = vcmask 261120
        %v876 = vsel %vm874, %v796, 0
        %878 = vmatprep.subr.mxu0 0.0
        %879 = vmatpush1.msra.mxu0 %v712
        %880 = vmatprep.subr.mxu0 0.0
        %881 = vmatpush1.msra.mxu0 %v713
        %882 = vmatprep.subr.mxu0 0.0
        %883 = vmatpush1.msra.mxu0 %v714
        %884 = vmatprep.subr.mxu0 0.0
        %885 = vmatpush1.msra.mxu0 %v715
        %886 = vmatprep.subr.mxu0 0.0
        %887 = vmatpush1.msra.mxu0 0.0
        %888 = vmatprep.subr.mxu0 0.0
        %889 = vmatpush1.msra.mxu0 0.0
        %890 = vmatprep.subr.mxu0 0.0
        %891 = vmatpush1.msra.mxu0 0.0
        %892 = vmatprep.subr.mxu0 0.0
        %893 = vmatpush1.msra.mxu0 0.0
        %894 = vmatprep.subr.mxu0 0.0
        %895 = vmatpush1.msra.mxu0 0.0
        %896 = vmatprep.subr.mxu0 0.0
        %897 = vmatpush1.msra.mxu0 0.0
        %898 = vmatprep.subr.mxu0 0.0
        %899 = vmatpush1.msra.mxu0 0.0
        %900 = vmatprep.subr.mxu0 0.0
        %901 = vmatpush1.msra.mxu0 0.0
        %902 = vmatprep.subr.mxu0 0.0
        %903 = vmatpush1.msra.mxu0 0.0
        %904 = vmatprep.subr.mxu0 0.0
        %905 = vmatpush1.msra.mxu0 0.0
        %906 = vmatprep.subr.mxu0 0.0
        %907 = vmatpush1.msra.mxu0 0.0
        %908 = vmatprep.subr.mxu0 0.0
        %909 = vmatpush1.msra.mxu0 0.0
        %910 = vmatprep.subr.mxu0 0.0
        %911 = vmatpush1.msra.mxu0 0.0
        %912 = vmatprep.subr.mxu0 0.0
        %913 = vmatpush1.msra.mxu0 0.0
        %914 = vmatprep.subr.mxu0 0.0
        %915 = vmatpush1.msra.mxu0 0.0
        %916 = vmatprep.subr.mxu0 0.0
        %917 = vmatpush1.msra.mxu0 0.0
        %918 = vmatprep.subr.mxu0 0.0
        %919 = vmatpush1.msra.mxu0 0.0
        %920 = vmatprep.subr.mxu0 0.0
        %921 = vmatpush1.msra.mxu0 0.0
        %922 = vmatprep.subr.mxu0 0.0
        %923 = vmatpush1.msra.mxu0 0.0
        %924 = vmatprep.subr.mxu0 0.0
        %925 = vmatpush1.msra.mxu0 0.0
        %926 = vmatprep.subr.mxu0 0.0
        %927 = vmatpush1.msra.mxu0 0.0
        %928 = vmatprep.subr.mxu0 0.0
        %929 = vmatpush1.msra.mxu0 0.0
        %930 = vmatprep.subr.mxu0 0.0
        %931 = vmatpush1.msra.mxu0 0.0
        %932 = vmatprep.subr.mxu0 0.0
        %933 = vmatpush1.msra.mxu0 0.0
        %934 = vmatprep.subr.mxu0 0.0
        %935 = vmatpush1.msra.mxu0 0.0
        %936 = vmatprep.subr.mxu0 0.0
        %937 = vmatpush1.msra.mxu0 0.0
        %938 = vmatprep.subr.mxu0 0.0
        %939 = vmatpush1.msra.mxu0 0.0
        %940 = vmatprep.subr.mxu0 0.0
        %941 = vmatpush1.msra.mxu0 0.0
        %942 = vmatprep.mubr.f32.mxu0 0.0
        %943 = vmatmul.mubr.f32.gmra.mrb[0].mxu0 %v876
        %v944 = vpop.f32.mrb[0].mxu0
        %v945 = vadd.f32 0.0, %v944
        %v946 = vpop.f32.mrb[0].mxu0
        %947 = vdwg.mxu0
        %vm948 = vcmask 64512
        %v949 = vsel %vm948, %v945, -inf
        %950 = vmax.xlane.f32.xlu0 %v949
        %v951 = vpop.xlane.xlu0 %950
        %v952 = vsub.f32 %v945, %v951
        %v953 = vmul.f32 %v952, 1.442695
        %v954 = vpow.pop %v953
        %v955 = vsel %vm948, %v954, 0.0
        %956 = vadd.xlane.f32.xlu0 %v955
        %v957 = vpop.xlane.xlu0 %956
        %v958 = vrcp.pop %v957
        %v959 = vmul.f32 %v954, %v958
        %v961 = vsel %vm874, %v873, 0
        %963 = vmatprep.subr.mxu0 0.0
        %964 = vmatpush1.msra.mxu0 %v712
        %965 = vmatprep.subr.mxu0 0.0
        %966 = vmatpush1.msra.mxu0 %v713
        %967 = vmatprep.subr.mxu0 0.0
        %968 = vmatpush1.msra.mxu0 %v714
        %969 = vmatprep.subr.mxu0 0.0
        %970 = vmatpush1.msra.mxu0 %v715
        %971 = vmatprep.subr.mxu0 0.0
        %972 = vmatpush1.msra.mxu0 0.0
        %973 = vmatprep.subr.mxu0 0.0
        %974 = vmatpush1.msra.mxu0 0.0
        %975 = vmatprep.subr.mxu0 0.0
        %976 = vmatpush1.msra.mxu0 0.0
        %977 = vmatprep.subr.mxu0 0.0
        %978 = vmatpush1.msra.mxu0 0.0
        %979 = vmatprep.subr.mxu0 0.0
        %980 = vmatpush1.msra.mxu0 0.0
        %981 = vmatprep.subr.mxu0 0.0
        %982 = vmatpush1.msra.mxu0 0.0
        %983 = vmatprep.subr.mxu0 0.0
        %984 = vmatpush1.msra.mxu0 0.0
        %985 = vmatprep.subr.mxu0 0.0
        %986 = vmatpush1.msra.mxu0 0.0
        %987 = vmatprep.subr.mxu0 0.0
        %988 = vmatpush1.msra.mxu0 0.0
        %989 = vmatprep.subr.mxu0 0.0
        %990 = vmatpush1.msra.mxu0 0.0
        %991 = vmatprep.subr.mxu0 0.0
        %992 = vmatpush1.msra.mxu0 0.0
        %993 = vmatprep.subr.mxu0 0.0
        %994 = vmatpush1.msra.mxu0 0.0
        %995 = vmatprep.subr.mxu0 0.0
        %996 = vmatpush1.msra.mxu0 0.0
        %997 = vmatprep.subr.mxu0 0.0
        %998 = vmatpush1.msra.mxu0 0.0
        %999 = vmatprep.subr.mxu0 0.0
        %1000 = vmatpush1.msra.mxu0 0.0
        %1001 = vmatprep.subr.mxu0 0.0
        %1002 = vmatpush1.msra.mxu0 0.0
        %1003 = vmatprep.subr.mxu0 0.0
        %1004 = vmatpush1.msra.mxu0 0.0
        %1005 = vmatprep.subr.mxu0 0.0
        %1006 = vmatpush1.msra.mxu0 0.0
        %1007 = vmatprep.subr.mxu0 0.0
        %1008 = vmatpush1.msra.mxu0 0.0
        %1009 = vmatprep.subr.mxu0 0.0
        %1010 = vmatpush1.msra.mxu0 0.0
        %1011 = vmatprep.subr.mxu0 0.0
        %1012 = vmatpush1.msra.mxu0 0.0
        %1013 = vmatprep.subr.mxu0 0.0
        %1014 = vmatpush1.msra.mxu0 0.0
        %1015 = vmatprep.subr.mxu0 0.0
        %1016 = vmatpush1.msra.mxu0 0.0
        %1017 = vmatprep.subr.mxu0 0.0
        %1018 = vmatpush1.msra.mxu0 0.0
        %1019 = vmatprep.subr.mxu0 0.0
        %1020 = vmatpush1.msra.mxu0 0.0
        %1021 = vmatprep.subr.mxu0 0.0
        %1022 = vmatpush1.msra.mxu0 0.0
        %1023 = vmatprep.subr.mxu0 0.0
        %1024 = vmatpush1.msra.mxu0 0.0
        %1025 = vmatprep.subr.mxu0 0.0
        %1026 = vmatpush1.msra.mxu0 0.0
        %1027 = vmatprep.mubr.f32.mxu0 0.0
        %1028 = vmatmul.mubr.f32.gmra.mrb[0].mxu0 %v961
        %v1029 = vpop.f32.mrb[0].mxu0
        %v1030 = vadd.f32 0.0, %v1029
        %v1031 = vpop.f32.mrb[0].mxu0
        %1032 = vdwg.mxu0
        %v1033 = vsel %vm948, %v1030, -inf
        %1034 = vmax.xlane.f32.xlu0 %v1033
        %v1035 = vpop.xlane.xlu0 %1034
        %v1036 = vsub.f32 %v1030, %v1035
        %v1037 = vmul.f32 %v1036, 1.442695
        %v1038 = vpow.pop %v1037
        %v1039 = vsel %vm948, %v1038, 0.0
        %1040 = vadd.xlane.f32.xlu0 %v1039
        %v1041 = vpop.xlane.xlu0 %1040
        %v1042 = vrcp.pop %v1041
        %v1043 = vmul.f32 %v1038, %v1042
        %1044 = vxpose.xlu0.b32.start [1/16] %v1043, 128
        %1045 = vxpose.xlu0.b32.cont [2/16] 0.0, 128
        %1046 = vxpose.xlu0.b32.cont [3/16] 0.0, 128
        %1047 = vxpose.xlu0.b32.cont [4/16] 0.0, 128
        %1048 = vxpose.xlu0.b32.cont [5/16] 0.0, 128
        %1049 = vxpose.xlu0.b32.cont [6/16] 0.0, 128
        %1050 = vxpose.xlu0.b32.cont [7/16] 0.0, 128
        %1051 = vxpose.xlu0.b32.cont [8/16] 0.0, 128
        %1052 = vxpose.xlu0.b32.cont [9/16] 0.0, 128
        %1053 = vxpose.xlu0.b32.cont [10/16] 0.0, 128
        %1054 = vxpose.xlu0.b32.cont [11/16] 0.0, 128
        %1055 = vxpose.xlu0.b32.cont [12/16] 0.0, 128
        %1056 = vxpose.xlu0.b32.cont [13/16] 0.0, 128
        %1057 = vxpose.xlu0.b32.cont [14/16] 0.0, 128
        %1058 = vxpose.xlu0.b32.cont [15/16] 0.0, 128
        %1059 = vxpose.xlu0.b32.end [16/16] 0.0, 128
        %v1060 = vpop.trf.xlu0
        %v1061 = vpop.trf.xlu0
        %v1062 = vpop.trf.xlu0
        %v1063 = vpop.trf.xlu0
        %v1064 = vpop.trf.xlu0
        %v1065 = vpop.trf.xlu0
        %v1066 = vpop.trf.xlu0
        %v1067 = vpop.trf.xlu0
        %v1068 = vpop.trf.xlu0
        %v1069 = vpop.trf.xlu0
        %v1070 = vpop.trf.xlu0
        %v1071 = vpop.trf.xlu0
        %v1072 = vpop.trf.xlu0
        %v1073 = vpop.trf.xlu0
        %v1074 = vpop.trf.xlu0
        %v1075 = vpop.trf.xlu0
        %v1077 = vsel %vm948, %v1060, 0
        %1079 = vmatprep.subr.mxu0 0.0
        %1080 = vmatpush1.msra.mxu0 %v873
        %1081 = vmatprep.subr.mxu0 0.0
        %1082 = vmatpush1.msra.mxu0 0.0
        %1083 = vmatprep.subr.mxu0 0.0
        %1084 = vmatpush1.msra.mxu0 0.0
        %1085 = vmatprep.subr.mxu0 0.0
        %1086 = vmatpush1.msra.mxu0 0.0
        %1087 = vmatprep.subr.mxu0 0.0
        %1088 = vmatpush1.msra.mxu0 0.0
        %1089 = vmatprep.subr.mxu0 0.0
        %1090 = vmatpush1.msra.mxu0 0.0
        %1091 = vmatprep.subr.mxu0 0.0
        %1092 = vmatpush1.msra.mxu0 0.0
        %1093 = vmatprep.subr.mxu0 0.0
        %1094 = vmatpush1.msra.mxu0 0.0
        %1095 = vmatprep.subr.mxu0 0.0
        %1096 = vmatpush1.msra.mxu0 0.0
        %1097 = vmatprep.subr.mxu0 0.0
        %1098 = vmatpush1.msra.mxu0 0.0
        %1099 = vmatprep.subr.mxu0 0.0
        %1100 = vmatpush1.msra.mxu0 0.0
        %1101 = vmatprep.subr.mxu0 0.0
        %1102 = vmatpush1.msra.mxu0 0.0
        %1103 = vmatprep.subr.mxu0 0.0
        %1104 = vmatpush1.msra.mxu0 0.0
        %1105 = vmatprep.subr.mxu0 0.0
        %1106 = vmatpush1.msra.mxu0 0.0
        %1107 = vmatprep.subr.mxu0 0.0
        %1108 = vmatpush1.msra.mxu0 0.0
        %1109 = vmatprep.subr.mxu0 0.0
        %1110 = vmatpush1.msra.mxu0 0.0
        %1111 = vmatprep.subr.mxu0 0.0
        %1112 = vmatpush1.msra.mxu0 0.0
        %1113 = vmatprep.subr.mxu0 0.0
        %1114 = vmatpush1.msra.mxu0 0.0
        %1115 = vmatprep.subr.mxu0 0.0
        %1116 = vmatpush1.msra.mxu0 0.0
        %1117 = vmatprep.subr.mxu0 0.0
        %1118 = vmatpush1.msra.mxu0 0.0
        %1119 = vmatprep.subr.mxu0 0.0
        %1120 = vmatpush1.msra.mxu0 0.0
        %1121 = vmatprep.subr.mxu0 0.0
        %1122 = vmatpush1.msra.mxu0 0.0
        %1123 = vmatprep.subr.mxu0 0.0
        %1124 = vmatpush1.msra.mxu0 0.0
        %1125 = vmatprep.subr.mxu0 0.0
        %1126 = vmatpush1.msra.mxu0 0.0
        %1127 = vmatprep.subr.mxu0 0.0
        %1128 = vmatpush1.msra.mxu0 0.0
        %1129 = vmatprep.subr.mxu0 0.0
        %1130 = vmatpush1.msra.mxu0 0.0
        %1131 = vmatprep.subr.mxu0 0.0
        %1132 = vmatpush1.msra.mxu0 0.0
        %1133 = vmatprep.subr.mxu0 0.0
        %1134 = vmatpush1.msra.mxu0 0.0
        %1135 = vmatprep.subr.mxu0 0.0
        %1136 = vmatpush1.msra.mxu0 0.0
        %1137 = vmatprep.subr.mxu0 0.0
        %1138 = vmatpush1.msra.mxu0 0.0
        %1139 = vmatprep.subr.mxu0 0.0
        %1140 = vmatpush1.msra.mxu0 0.0
        %1141 = vmatprep.subr.mxu0 0.0
        %1142 = vmatpush1.msra.mxu0 0.0
        %1143 = vmatprep.mubr.f32.mxu0 0.0
        %1144 = vmatmul.mubr.f32.gmra.mrb[0].mxu0 %v1077
        %v1145 = vpop.f32.mrb[0].mxu0
        %v1146 = vadd.f32 0.0, %v1145
        %v1147 = vpop.f32.mrb[0].mxu0
        %1148 = vdwg.mxu0
        %1149 = vxpose.xlu0.b32.start [1/16] %v959, 128
        %1150 = vxpose.xlu0.b32.cont [2/16] 0.0, 128
        %1151 = vxpose.xlu0.b32.cont [3/16] 0.0, 128
        %1152 = vxpose.xlu0.b32.cont [4/16] 0.0, 128
        %1153 = vxpose.xlu0.b32.cont [5/16] 0.0, 128
        %1154 = vxpose.xlu0.b32.cont [6/16] 0.0, 128
        %1155 = vxpose.xlu0.b32.cont [7/16] 0.0, 128
        %1156 = vxpose.xlu0.b32.cont [8/16] 0.0, 128
        %1157 = vxpose.xlu0.b32.cont [9/16] 0.0, 128
        %1158 = vxpose.xlu0.b32.cont [10/16] 0.0, 128
        %1159 = vxpose.xlu0.b32.cont [11/16] 0.0, 128
        %1160 = vxpose.xlu0.b32.cont [12/16] 0.0, 128
        %1161 = vxpose.xlu0.b32.cont [13/16] 0.0, 128
        %1162 = vxpose.xlu0.b32.cont [14/16] 0.0, 128
        %1163 = vxpose.xlu0.b32.cont [15/16] 0.0, 128
        %1164 = vxpose.xlu0.b32.end [16/16] 0.0, 128
        %v1165 = vpop.trf.xlu0
        %v1166 = vpop.trf.xlu0
        %v1167 = vpop.trf.xlu0
        %v1168 = vpop.trf.xlu0
        %v1169 = vpop.trf.xlu0
        %v1170 = vpop.trf.xlu0
        %v1171 = vpop.trf.xlu0
        %v1172 = vpop.trf.xlu0
        %v1173 = vpop.trf.xlu0
        %v1174 = vpop.trf.xlu0
        %v1175 = vpop.trf.xlu0
        %v1176 = vpop.trf.xlu0
        %v1177 = vpop.trf.xlu0
        %v1178 = vpop.trf.xlu0
        %v1179 = vpop.trf.xlu0
        %v1180 = vpop.trf.xlu0
        %v1182 = vsel %vm948, %v1165, 0
        %1184 = vmatprep.subr.mxu0 0.0
        %1185 = vmatpush1.msra.mxu0 %v796
        %1186 = vmatprep.subr.mxu0 0.0
        %1187 = vmatpush1.msra.mxu0 0.0
        %1188 = vmatprep.subr.mxu0 0.0
        %1189 = vmatpush1.msra.mxu0 0.0
        %1190 = vmatprep.subr.mxu0 0.0
        %1191 = vmatpush1.msra.mxu0 0.0
        %1192 = vmatprep.subr.mxu0 0.0
        %1193 = vmatpush1.msra.mxu0 0.0
        %1194 = vmatprep.subr.mxu0 0.0
        %1195 = vmatpush1.msra.mxu0 0.0
        %1196 = vmatprep.subr.mxu0 0.0
        %1197 = vmatpush1.msra.mxu0 0.0
        %1198 = vmatprep.subr.mxu0 0.0
        %1199 = vmatpush1.msra.mxu0 0.0
        %1200 = vmatprep.subr.mxu0 0.0
        %1201 = vmatpush1.msra.mxu0 0.0
        %1202 = vmatprep.subr.mxu0 0.0
        %1203 = vmatpush1.msra.mxu0 0.0
        %1204 = vmatprep.subr.mxu0 0.0
        %1205 = vmatpush1.msra.mxu0 0.0
        %1206 = vmatprep.subr.mxu0 0.0
        %1207 = vmatpush1.msra.mxu0 0.0
        %1208 = vmatprep.subr.mxu0 0.0
        %1209 = vmatpush1.msra.mxu0 0.0
        %1210 = vmatprep.subr.mxu0 0.0
        %1211 = vmatpush1.msra.mxu0 0.0
        %1212 = vmatprep.subr.mxu0 0.0
        %1213 = vmatpush1.msra.mxu0 0.0
        %1214 = vmatprep.subr.mxu0 0.0
        %1215 = vmatpush1.msra.mxu0 0.0
        %1216 = vmatprep.subr.mxu0 0.0
        %1217 = vmatpush1.msra.mxu0 0.0
        %1218 = vmatprep.subr.mxu0 0.0
        %1219 = vmatpush1.msra.mxu0 0.0
        %1220 = vmatprep.subr.mxu0 0.0
        %1221 = vmatpush1.msra.mxu0 0.0
        %1222 = vmatprep.subr.mxu0 0.0
        %1223 = vmatpush1.msra.mxu0 0.0
        %1224 = vmatprep.subr.mxu0 0.0
        %1225 = vmatpush1.msra.mxu0 0.0
        %1226 = vmatprep.subr.mxu0 0.0
        %1227 = vmatpush1.msra.mxu0 0.0
        %1228 = vmatprep.subr.mxu0 0.0
        %1229 = vmatpush1.msra.mxu0 0.0
        %1230 = vmatprep.subr.mxu0 0.0
        %1231 = vmatpush1.msra.mxu0 0.0
        %1232 = vmatprep.subr.mxu0 0.0
        %1233 = vmatpush1.msra.mxu0 0.0
        %1234 = vmatprep.subr.mxu0 0.0
        %1235 = vmatpush1.msra.mxu0 0.0
        %1236 = vmatprep.subr.mxu0 0.0
        %1237 = vmatpush1.msra.mxu0 0.0
        %1238 = vmatprep.subr.mxu0 0.0
        %1239 = vmatpush1.msra.mxu0 0.0
        %1240 = vmatprep.subr.mxu0 0.0
        %1241 = vmatpush1.msra.mxu0 0.0
        %1242 = vmatprep.subr.mxu0 0.0
        %1243 = vmatpush1.msra.mxu0 0.0
        %1244 = vmatprep.subr.mxu0 0.0
        %1245 = vmatpush1.msra.mxu0 0.0
        %1246 = vmatprep.subr.mxu0 0.0
        %1247 = vmatpush1.msra.mxu0 0.0
        %1248 = vmatprep.mubr.f32.mxu0 0.0
        %1249 = vmatmul.mubr.f32.gmra.mrb[0].mxu0 %v1182
        %v1250 = vpop.f32.mrb[0].mxu0
        %v1251 = vadd.f32 %v1146, %v1250
        %v1252 = vpop.f32.mrb[0].mxu0
        %1253 = vdwg.mxu0
        %v1254 = vsel %vm874, %v1251, 0.0
        %v1255 = vrot.slane %v1254, 4
        %v1256 = vadd.f32 %v1254, %v1255
        %v1257 = vrot.slane %v1256, 2
        %v1258 = vadd.f32 %v1256, %v1257
        %v1259 = vrot.slane %v1258, 1
        %v1260 = vadd.f32 %v1258, %v1259
        %v1261 = vrcp.pop 8.0
        %v1262 = vmul.f32 %v1260, %v1261
        %v1264 = vrot.slane %v1251, 7
        %vm1266 = vcmask 1040384
        %v1267 = vsel %vm1266, %v1262, %v1264
        %v1268 = vld [vmem:[%s7] sm:$0xff]
        %v1269 = vld [vmem:[%s7 + $0x8] sm:$0xff]
        %v1270 = vld [vmem:[#allocation7] sm:$0x1]
        %v1271 = vld [vmem:[%s9] sm:$0xff]
        %v1272 = vld [vmem:[%s9 + $0x8] sm:$0xff]
        %v1273 = vld [vmem:[#allocation8] sm:$0x1]
        %v1274 = vld [vmem:[%s11] sm:$0xff]
        %v1275 = vld [vmem:[%s11 + $0x8] sm:$0xff]
        %v1276 = vld [vmem:[%s11 + $0x10] sm:$0xff]
        %v1277 = vld [vmem:[%s11 + $0x18] sm:$0xff]
        %v1279 = vlaneseq
        %v1280 = vshrl.u32 %v1279, 7
        %v1281 = vsub.s32 0, %v1280
        %v1282 = vrot.slane %v1270, %v1281
        %v1285 = vsel %vm722, %v705, 0
        %1287 = vmatprep.subr.mxu0 0.0
        %1288 = vmatpush1.msra.mxu0 %v1268
        %1289 = vmatprep.subr.mxu0 0.0
        %1290 = vmatpush1.msra.mxu0 %v1269
        %1291 = vmatprep.subr.mxu0 0.0
        %1292 = vmatpush1.msra.mxu0 0.0
        %1293 = vmatprep.subr.mxu0 0.0
        %1294 = vmatpush1.msra.mxu0 0.0
        %1295 = vmatprep.subr.mxu0 0.0
        %1296 = vmatpush1.msra.mxu0 0.0
        %1297 = vmatprep.subr.mxu0 0.0
        %1298 = vmatpush1.msra.mxu0 0.0
        %1299 = vmatprep.subr.mxu0 0.0
        %1300 = vmatpush1.msra.mxu0 0.0
        %1301 = vmatprep.subr.mxu0 0.0
        %1302 = vmatpush1.msra.mxu0 0.0
        %1303 = vmatprep.subr.mxu0 0.0
        %1304 = vmatpush1.msra.mxu0 0.0
        %1305 = vmatprep.subr.mxu0 0.0
        %1306 = vmatpush1.msra.mxu0 0.0
        %1307 = vmatprep.subr.mxu0 0.0
        %1308 = vmatpush1.msra.mxu0 0.0
        %1309 = vmatprep.subr.mxu0 0.0
        %1310 = vmatpush1.msra.mxu0 0.0
        %1311 = vmatprep.subr.mxu0 0.0
        %1312 = vmatpush1.msra.mxu0 0.0
        %1313 = vmatprep.subr.mxu0 0.0
        %1314 = vmatpush1.msra.mxu0 0.0
        %1315 = vmatprep.subr.mxu0 0.0
        %1316 = vmatpush1.msra.mxu0 0.0
        %1317 = vmatprep.subr.mxu0 0.0
        %1318 = vmatpush1.msra.mxu0 0.0
        %1319 = vmatprep.subr.mxu0 0.0
        %1320 = vmatpush1.msra.mxu0 0.0
        %1321 = vmatprep.subr.mxu0 0.0
        %1322 = vmatpush1.msra.mxu0 0.0
        %1323 = vmatprep.subr.mxu0 0.0
        %1324 = vmatpush1.msra.mxu0 0.0
        %1325 = vmatprep.subr.mxu0 0.0
        %1326 = vmatpush1.msra.mxu0 0.0
        %1327 = vmatprep.subr.mxu0 0.0
        %1328 = vmatpush1.msra.mxu0 0.0
        %1329 = vmatprep.subr.mxu0 0.0
        %1330 = vmatpush1.msra.mxu0 0.0
        %1331 = vmatprep.subr.mxu0 0.0
        %1332 = vmatpush1.msra.mxu0 0.0
        %1333 = vmatprep.subr.mxu0 0.0
        %1334 = vmatpush1.msra.mxu0 0.0
        %1335 = vmatprep.subr.mxu0 0.0
        %1336 = vmatpush1.msra.mxu0 0.0
        %1337 = vmatprep.subr.mxu0 0.0
        %1338 = vmatpush1.msra.mxu0 0.0
        %1339 = vmatprep.subr.mxu0 0.0
        %1340 = vmatpush1.msra.mxu0 0.0
        %1341 = vmatprep.subr.mxu0 0.0
        %1342 = vmatpush1.msra.mxu0 0.0
        %1343 = vmatprep.subr.mxu0 0.0
        %1344 = vmatpush1.msra.mxu0 0.0
        %1345 = vmatprep.subr.mxu0 0.0
        %1346 = vmatpush1.msra.mxu0 0.0
        %1347 = vmatprep.subr.mxu0 0.0
        %1348 = vmatpush1.msra.mxu0 0.0
        %1349 = vmatprep.subr.mxu0 0.0
        %1350 = vmatpush1.msra.mxu0 0.0
        %1351 = vmatprep.mubr.f32.mxu0 0.0
        %1352 = vmatmul.mubr.f32.gmra.mrb[0].mxu0 %v1285
        %v1353 = vpop.f32.mrb[0].mxu0
        %v1354 = vadd.f32 %v1282, %v1353
        %v1355 = vpop.f32.mrb[0].mxu0
        %1356 = vdwg.mxu0
        %v1357 = vmax.f32 %v1354, 0.0
        %v1359 = vlaneseq
        %v1360 = vshrl.u32 %v1359, 7
        %v1361 = vsub.s32 0, %v1360
        %v1362 = vrot.slane %v1273, %v1361
        %1364 = vmatprep.subr.mxu0 0.0
        %1365 = vmatpush1.msra.mxu0 %v1271
        %1366 = vmatprep.subr.mxu0 0.0
        %1367 = vmatpush1.msra.mxu0 %v1272
        %1368 = vmatprep.subr.mxu0 0.0
        %1369 = vmatpush1.msra.mxu0 0.0
        %1370 = vmatprep.subr.mxu0 0.0
        %1371 = vmatpush1.msra.mxu0 0.0
        %1372 = vmatprep.subr.mxu0 0.0
        %1373 = vmatpush1.msra.mxu0 0.0
        %1374 = vmatprep.subr.mxu0 0.0
        %1375 = vmatpush1.msra.mxu0 0.0
        %1376 = vmatprep.subr.mxu0 0.0
        %1377 = vmatpush1.msra.mxu0 0.0
        %1378 = vmatprep.subr.mxu0 0.0
        %1379 = vmatpush1.msra.mxu0 0.0
        %1380 = vmatprep.subr.mxu0 0.0
        %1381 = vmatpush1.msra.mxu0 0.0
        %1382 = vmatprep.subr.mxu0 0.0
        %1383 = vmatpush1.msra.mxu0 0.0
        %1384 = vmatprep.subr.mxu0 0.0
        %1385 = vmatpush1.msra.mxu0 0.0
        %1386 = vmatprep.subr.mxu0 0.0
        %1387 = vmatpush1.msra.mxu0 0.0
        %1388 = vmatprep.subr.mxu0 0.0
        %1389 = vmatpush1.msra.mxu0 0.0
        %1390 = vmatprep.subr.mxu0 0.0
        %1391 = vmatpush1.msra.mxu0 0.0
        %1392 = vmatprep.subr.mxu0 0.0
        %1393 = vmatpush1.msra.mxu0 0.0
        %1394 = vmatprep.subr.mxu0 0.0
        %1395 = vmatpush1.msra.mxu0 0.0
        %1396 = vmatprep.subr.mxu0 0.0
        %1397 = vmatpush1.msra.mxu0 0.0
        %1398 = vmatprep.subr.mxu0 0.0
        %1399 = vmatpush1.msra.mxu0 0.0
        %1400 = vmatprep.subr.mxu0 0.0
        %1401 = vmatpush1.msra.mxu0 0.0
        %1402 = vmatprep.subr.mxu0 0.0
        %1403 = vmatpush1.msra.mxu0 0.0
        %1404 = vmatprep.subr.mxu0 0.0
        %1405 = vmatpush1.msra.mxu0 0.0
        %1406 = vmatprep.subr.mxu0 0.0
        %1407 = vmatpush1.msra.mxu0 0.0
        %1408 = vmatprep.subr.mxu0 0.0
        %1409 = vmatpush1.msra.mxu0 0.0
        %1410 = vmatprep.subr.mxu0 0.0
        %1411 = vmatpush1.msra.mxu0 0.0
        %1412 = vmatprep.subr.mxu0 0.0
        %1413 = vmatpush1.msra.mxu0 0.0
        %1414 = vmatprep.subr.mxu0 0.0
        %1415 = vmatpush1.msra.mxu0 0.0
        %1416 = vmatprep.subr.mxu0 0.0
        %1417 = vmatpush1.msra.mxu0 0.0
        %1418 = vmatprep.subr.mxu0 0.0
        %1419 = vmatpush1.msra.mxu0 0.0
        %1420 = vmatprep.subr.mxu0 0.0
        %1421 = vmatpush1.msra.mxu0 0.0
        %1422 = vmatprep.subr.mxu0 0.0
        %1423 = vmatpush1.msra.mxu0 0.0
        %1424 = vmatprep.subr.mxu0 0.0
        %1425 = vmatpush1.msra.mxu0 0.0
        %1426 = vmatprep.subr.mxu0 0.0
        %1427 = vmatpush1.msra.mxu0 0.0
        %1428 = vmatprep.mubr.f32.mxu0 0.0
        %1429 = vmatmul.mubr.f32.gmra.mrb[0].mxu0 %v1285
        %v1430 = vpop.f32.mrb[0].mxu0
        %v1431 = vadd.f32 %v1362, %v1430
        %v1432 = vpop.f32.mrb[0].mxu0
        %1433 = vdwg.mxu0
        %v1434 = vmax.f32 %v1431, 0.0
        %v1436 = vsel %vm874, %v1357, 0
        %1438 = vmatprep.subr.mxu0 0.0
        %1439 = vmatpush1.msra.mxu0 %v1274
        %1440 = vmatprep.subr.mxu0 0.0
        %1441 = vmatpush1.msra.mxu0 %v1275
        %1442 = vmatprep.subr.mxu0 0.0
        %1443 = vmatpush1.msra.mxu0 %v1276
        %1444 = vmatprep.subr.mxu0 0.0
        %1445 = vmatpush1.msra.mxu0 %v1277
        %1446 = vmatprep.subr.mxu0 0.0
        %1447 = vmatpush1.msra.mxu0 0.0
        %1448 = vmatprep.subr.mxu0 0.0
        %1449 = vmatpush1.msra.mxu0 0.0
        %1450 = vmatprep.subr.mxu0 0.0
        %1451 = vmatpush1.msra.mxu0 0.0
        %1452 = vmatprep.subr.mxu0 0.0
        %1453 = vmatpush1.msra.mxu0 0.0
        %1454 = vmatprep.subr.mxu0 0.0
        %1455 = vmatpush1.msra.mxu0 0.0
        %1456 = vmatprep.subr.mxu0 0.0
        %1457 = vmatpush1.msra.mxu0 0.0
        %1458 = vmatprep.subr.mxu0 0.0
        %1459 = vmatpush1.msra.mxu0 0.0
        %1460 = vmatprep.subr.mxu0 0.0
        %1461 = vmatpush1.msra.mxu0 0.0
        %1462 = vmatprep.subr.mxu0 0.0
        %1463 = vmatpush1.msra.mxu0 0.0
        %1464 = vmatprep.subr.mxu0 0.0
        %1465 = vmatpush1.msra.mxu0 0.0
        %1466 = vmatprep.subr.mxu0 0.0
        %1467 = vmatpush1.msra.mxu0 0.0
        %1468 = vmatprep.subr.mxu0 0.0
        %1469 = vmatpush1.msra.mxu0 0.0
        %1470 = vmatprep.subr.mxu0 0.0
        %1471 = vmatpush1.msra.mxu0 0.0
        %1472 = vmatprep.subr.mxu0 0.0
        %1473 = vmatpush1.msra.mxu0 0.0
        %1474 = vmatprep.subr.mxu0 0.0
        %1475 = vmatpush1.msra.mxu0 0.0
        %1476 = vmatprep.subr.mxu0 0.0
        %1477 = vmatpush1.msra.mxu0 0.0
        %1478 = vmatprep.subr.mxu0 0.0
        %1479 = vmatpush1.msra.mxu0 0.0
        %1480 = vmatprep.subr.mxu0 0.0
        %1481 = vmatpush1.msra.mxu0 0.0
        %1482 = vmatprep.subr.mxu0 0.0
        %1483 = vmatpush1.msra.mxu0 0.0
        %1484 = vmatprep.subr.mxu0 0.0
        %1485 = vmatpush1.msra.mxu0 0.0
        %1486 = vmatprep.subr.mxu0 0.0
        %1487 = vmatpush1.msra.mxu0 0.0
        %1488 = vmatprep.subr.mxu0 0.0
        %1489 = vmatpush1.msra.mxu0 0.0
        %1490 = vmatprep.subr.mxu0 0.0
        %1491 = vmatpush1.msra.mxu0 0.0
        %1492 = vmatprep.subr.mxu0 0.0
        %1493 = vmatpush1.msra.mxu0 0.0
        %1494 = vmatprep.subr.mxu0 0.0
        %1495 = vmatpush1.msra.mxu0 0.0
        %1496 = vmatprep.subr.mxu0 0.0
        %1497 = vmatpush1.msra.mxu0 0.0
        %1498 = vmatprep.subr.mxu0 0.0
        %1499 = vmatpush1.msra.mxu0 0.0
        %1500 = vmatprep.subr.mxu0 0.0
        %1501 = vmatpush1.msra.mxu0 0.0
        %1502 = vmatprep.mubr.f32.mxu0 0.0
        %1503 = vmatmul.mubr.f32.gmra.mrb[0].mxu0 %v1436
        %v1504 = vpop.f32.mrb[0].mxu0
        %v1505 = vadd.f32 0.0, %v1504
        %v1506 = vpop.f32.mrb[0].mxu0
        %1507 = vdwg.mxu0
        %v1508 = vsel %vm948, %v1505, -inf
        %1509 = vmax.xlane.f32.xlu0 %v1508
        %v1510 = vpop.xlane.xlu0 %1509
        %v1511 = vsub.f32 %v1505, %v1510
        %v1512 = vmul.f32 %v1511, 1.442695
        %v1513 = vpow.pop %v1512
        %v1514 = vsel %vm948, %v1513, 0.0
        %1515 = vadd.xlane.f32.xlu0 %v1514
        %v1516 = vpop.xlane.xlu0 %1515
        %v1517 = vrcp.pop %v1516
        %v1518 = vmul.f32 %v1513, %v1517
        %v1520 = vsel %vm874, %v1434, 0
        %1522 = vmatprep.subr.mxu0 0.0
        %1523 = vmatpush1.msra.mxu0 %v1274
        %1524 = vmatprep.subr.mxu0 0.0
        %1525 = vmatpush1.msra.mxu0 %v1275
        %1526 = vmatprep.subr.mxu0 0.0
        %1527 = vmatpush1.msra.mxu0 %v1276
        %1528 = vmatprep.subr.mxu0 0.0
        %1529 = vmatpush1.msra.mxu0 %v1277
        %1530 = vmatprep.subr.mxu0 0.0
        %1531 = vmatpush1.msra.mxu0 0.0
        %1532 = vmatprep.subr.mxu0 0.0
        %1533 = vmatpush1.msra.mxu0 0.0
        %1534 = vmatprep.subr.mxu0 0.0
        %1535 = vmatpush1.msra.mxu0 0.0
        %1536 = vmatprep.subr.mxu0 0.0
        %1537 = vmatpush1.msra.mxu0 0.0
        %1538 = vmatprep.subr.mxu0 0.0
        %1539 = vmatpush1.msra.mxu0 0.0
        %1540 = vmatprep.subr.mxu0 0.0
        %1541 = vmatpush1.msra.mxu0 0.0
        %1542 = vmatprep.subr.mxu0 0.0
        %1543 = vmatpush1.msra.mxu0 0.0
        %1544 = vmatprep.subr.mxu0 0.0
        %1545 = vmatpush1.msra.mxu0 0.0
        %1546 = vmatprep.subr.mxu0 0.0
        %1547 = vmatpush1.msra.mxu0 0.0
        %1548 = vmatprep.subr.mxu0 0.0
        %1549 = vmatpush1.msra.mxu0 0.0
        %1550 = vmatprep.subr.mxu0 0.0
        %1551 = vmatpush1.msra.mxu0 0.0
        %1552 = vmatprep.subr.mxu0 0.0
        %1553 = vmatpush1.msra.mxu0 0.0
        %1554 = vmatprep.subr.mxu0 0.0
        %1555 = vmatpush1.msra.mxu0 0.0
        %1556 = vmatprep.subr.mxu0 0.0
        %1557 = vmatpush1.msra.mxu0 0.0
        %1558 = vmatprep.subr.mxu0 0.0
        %1559 = vmatpush1.msra.mxu0 0.0
        %1560 = vmatprep.subr.mxu0 0.0
        %1561 = vmatpush1.msra.mxu0 0.0
        %1562 = vmatprep.subr.mxu0 0.0
        %1563 = vmatpush1.msra.mxu0 0.0
        %1564 = vmatprep.subr.mxu0 0.0
        %1565 = vmatpush1.msra.mxu0 0.0
        %1566 = vmatprep.subr.mxu0 0.0
        %1567 = vmatpush1.msra.mxu0 0.0
        %1568 = vmatprep.subr.mxu0 0.0
        %1569 = vmatpush1.msra.mxu0 0.0
        %1570 = vmatprep.subr.mxu0 0.0
        %1571 = vmatpush1.msra.mxu0 0.0
        %1572 = vmatprep.subr.mxu0 0.0
        %1573 = vmatpush1.msra.mxu0 0.0
        %1574 = vmatprep.subr.mxu0 0.0
        %1575 = vmatpush1.msra.mxu0 0.0
        %1576 = vmatprep.subr.mxu0 0.0
        %1577 = vmatpush1.msra.mxu0 0.0
        %1578 = vmatprep.subr.mxu0 0.0
        %1579 = vmatpush1.msra.mxu0 0.0
        %1580 = vmatprep.subr.mxu0 0.0
        %1581 = vmatpush1.msra.mxu0 0.0
        %1582 = vmatprep.subr.mxu0 0.0
        %1583 = vmatpush1.msra.mxu0 0.0
        %1584 = vmatprep.subr.mxu0 0.0
        %1585 = vmatpush1.msra.mxu0 0.0
        %1586 = vmatprep.mubr.f32.mxu0 0.0
        %1587 = vmatmul.mubr.f32.gmra.mrb[0].mxu0 %v1520
        %v1588 = vpop.f32.mrb[0].mxu0
        %v1589 = vadd.f32 0.0, %v1588
        %v1590 = vpop.f32.mrb[0].mxu0
        %1591 = vdwg.mxu0
        %v1592 = vsel %vm948, %v1589, -inf
        %1593 = vmax.xlane.f32.xlu0 %v1592
        %v1594 = vpop.xlane.xlu0 %1593
        %v1595 = vsub.f32 %v1589, %v1594
        %v1596 = vmul.f32 %v1595, 1.442695
        %v1597 = vpow.pop %v1596
        %v1598 = vsel %vm948, %v1597, 0.0
        %1599 = vadd.xlane.f32.xlu0 %v1598
        %v1600 = vpop.xlane.xlu0 %1599
        %v1601 = vrcp.pop %v1600
        %v1602 = vmul.f32 %v1597, %v1601
        %1603 = vxpose.xlu0.b32.start [1/16] %v1602, 128
        %1604 = vxpose.xlu0.b32.cont [2/16] 0.0, 128
        %1605 = vxpose.xlu0.b32.cont [3/16] 0.0, 128
        %1606 = vxpose.xlu0.b32.cont [4/16] 0.0, 128
        %1607 = vxpose.xlu0.b32.cont [5/16] 0.0, 128
        %1608 = vxpose.xlu0.b32.cont [6/16] 0.0, 128
        %1609 = vxpose.xlu0.b32.cont [7/16] 0.0, 128
        %1610 = vxpose.xlu0.b32.cont [8/16] 0.0, 128
        %1611 = vxpose.xlu0.b32.cont [9/16] 0.0, 128
        %1612 = vxpose.xlu0.b32.cont [10/16] 0.0, 128
        %1613 = vxpose.xlu0.b32.cont [11/16] 0.0, 128
        %1614 = vxpose.xlu0.b32.cont [12/16] 0.0, 128
        %1615 = vxpose.xlu0.b32.cont [13/16] 0.0, 128
        %1616 = vxpose.xlu0.b32.cont [14/16] 0.0, 128
        %1617 = vxpose.xlu0.b32.cont [15/16] 0.0, 128
        %1618 = vxpose.xlu0.b32.end [16/16] 0.0, 128
        %v1619 = vpop.trf.xlu0
        %v1620 = vpop.trf.xlu0
        %v1621 = vpop.trf.xlu0
        %v1622 = vpop.trf.xlu0
        %v1623 = vpop.trf.xlu0
        %v1624 = vpop.trf.xlu0
        %v1625 = vpop.trf.xlu0
        %v1626 = vpop.trf.xlu0
        %v1627 = vpop.trf.xlu0
        %v1628 = vpop.trf.xlu0
        %v1629 = vpop.trf.xlu0
        %v1630 = vpop.trf.xlu0
        %v1631 = vpop.trf.xlu0
        %v1632 = vpop.trf.xlu0
        %v1633 = vpop.trf.xlu0
        %v1634 = vpop.trf.xlu0
        %v1636 = vsel %vm948, %v1619, 0
        %1638 = vmatprep.subr.mxu0 0.0
        %1639 = vmatpush1.msra.mxu0 %v1434
        %1640 = vmatprep.subr.mxu0 0.0
        %1641 = vmatpush1.msra.mxu0 0.0
        %1642 = vmatprep.subr.mxu0 0.0
        %1643 = vmatpush1.msra.mxu0 0.0
        %1644 = vmatprep.subr.mxu0 0.0
        %1645 = vmatpush1.msra.mxu0 0.0
        %1646 = vmatprep.subr.mxu0 0.0
        %1647 = vmatpush1.msra.mxu0 0.0
        %1648 = vmatprep.subr.mxu0 0.0
        %1649 = vmatpush1.msra.mxu0 0.0
        %1650 = vmatprep.subr.mxu0 0.0
        %1651 = vmatpush1.msra.mxu0 0.0
        %1652 = vmatprep.subr.mxu0 0.0
        %1653 = vmatpush1.msra.mxu0 0.0
        %1654 = vmatprep.subr.mxu0 0.0
        %1655 = vmatpush1.msra.mxu0 0.0
        %1656 = vmatprep.subr.mxu0 0.0
        %1657 = vmatpush1.msra.mxu0 0.0
        %1658 = vmatprep.subr.mxu0 0.0
        %1659 = vmatpush1.msra.mxu0 0.0
        %1660 = vmatprep.subr.mxu0 0.0
        %1661 = vmatpush1.msra.mxu0 0.0
        %1662 = vmatprep.subr.mxu0 0.0
        %1663 = vmatpush1.msra.mxu0 0.0
        %1664 = vmatprep.subr.mxu0 0.0
        %1665 = vmatpush1.msra.mxu0 0.0
        %1666 = vmatprep.subr.mxu0 0.0
        %1667 = vmatpush1.msra.mxu0 0.0
        %1668 = vmatprep.subr.mxu0 0.0
        %1669 = vmatpush1.msra.mxu0 0.0
        %1670 = vmatprep.subr.mxu0 0.0
        %1671 = vmatpush1.msra.mxu0 0.0
        %1672 = vmatprep.subr.mxu0 0.0
        %1673 = vmatpush1.msra.mxu0 0.0
        %1674 = vmatprep.subr.mxu0 0.0
        %1675 = vmatpush1.msra.mxu0 0.0
        %1676 = vmatprep.subr.mxu0 0.0
        %1677 = vmatpush1.msra.mxu0 0.0
        %1678 = vmatprep.subr.mxu0 0.0
        %1679 = vmatpush1.msra.mxu0 0.0
        %1680 = vmatprep.subr.mxu0 0.0
        %1681 = vmatpush1.msra.mxu0 0.0
        %1682 = vmatprep.subr.mxu0 0.0
        %1683 = vmatpush1.msra.mxu0 0.0
        %1684 = vmatprep.subr.mxu0 0.0
        %1685 = vmatpush1.msra.mxu0 0.0
        %1686 = vmatprep.subr.mxu0 0.0
        %1687 = vmatpush1.msra.mxu0 0.0
        %1688 = vmatprep.subr.mxu0 0.0
        %1689 = vmatpush1.msra.mxu0 0.0
        %1690 = vmatprep.subr.mxu0 0.0
        %1691 = vmatpush1.msra.mxu0 0.0
        %1692 = vmatprep.subr.mxu0 0.0
        %1693 = vmatpush1.msra.mxu0 0.0
        %1694 = vmatprep.subr.mxu0 0.0
        %1695 = vmatpush1.msra.mxu0 0.0
        %1696 = vmatprep.subr.mxu0 0.0
        %1697 = vmatpush1.msra.mxu0 0.0
        %1698 = vmatprep.subr.mxu0 0.0
        %1699 = vmatpush1.msra.mxu0 0.0
        %1700 = vmatprep.subr.mxu0 0.0
        %1701 = vmatpush1.msra.mxu0 0.0
        %1702 = vmatprep.mubr.f32.mxu0 0.0
        %1703 = vmatmul.mubr.f32.gmra.mrb[0].mxu0 %v1636
        %v1704 = vpop.f32.mrb[0].mxu0
        %v1705 = vadd.f32 0.0, %v1704
        %v1706 = vpop.f32.mrb[0].mxu0
        %1707 = vdwg.mxu0
        %1708 = vxpose.xlu0.b32.start [1/16] %v1518, 128
        %1709 = vxpose.xlu0.b32.cont [2/16] 0.0, 128
        %1710 = vxpose.xlu0.b32.cont [3/16] 0.0, 128
        %1711 = vxpose.xlu0.b32.cont [4/16] 0.0, 128
        %1712 = vxpose.xlu0.b32.cont [5/16] 0.0, 128
        %1713 = vxpose.xlu0.b32.cont [6/16] 0.0, 128
        %1714 = vxpose.xlu0.b32.cont [7/16] 0.0, 128
        %1715 = vxpose.xlu0.b32.cont [8/16] 0.0, 128
        %1716 = vxpose.xlu0.b32.cont [9/16] 0.0, 128
        %1717 = vxpose.xlu0.b32.cont [10/16] 0.0, 128
        %1718 = vxpose.xlu0.b32.cont [11/16] 0.0, 128
        %1719 = vxpose.xlu0.b32.cont [12/16] 0.0, 128
        %1720 = vxpose.xlu0.b32.cont [13/16] 0.0, 128
        %1721 = vxpose.xlu0.b32.cont [14/16] 0.0, 128
        %1722 = vxpose.xlu0.b32.cont [15/16] 0.0, 128
        %1723 = vxpose.xlu0.b32.end [16/16] 0.0, 128
        %v1724 = vpop.trf.xlu0
        %v1725 = vpop.trf.xlu0
        %v1726 = vpop.trf.xlu0
        %v1727 = vpop.trf.xlu0
        %v1728 = vpop.trf.xlu0
        %v1729 = vpop.trf.xlu0
        %v1730 = vpop.trf.xlu0
        %v1731 = vpop.trf.xlu0
        %v1732 = vpop.trf.xlu0
        %v1733 = vpop.trf.xlu0
        %v1734 = vpop.trf.xlu0
        %v1735 = vpop.trf.xlu0
        %v1736 = vpop.trf.xlu0
        %v1737 = vpop.trf.xlu0
        %v1738 = vpop.trf.xlu0
        %v1739 = vpop.trf.xlu0
        %v1741 = vsel %vm948, %v1724, 0
        %1743 = vmatprep.subr.mxu0 0.0
        %1744 = vmatpush1.msra.mxu0 %v1357
        %1745 = vmatprep.subr.mxu0 0.0
        %1746 = vmatpush1.msra.mxu0 0.0
        %1747 = vmatprep.subr.mxu0 0.0
        %1748 = vmatpush1.msra.mxu0 0.0
        %1749 = vmatprep.subr.mxu0 0.0
        %1750 = vmatpush1.msra.mxu0 0.0
        %1751 = vmatprep.subr.mxu0 0.0
        %1752 = vmatpush1.msra.mxu0 0.0
        %1753 = vmatprep.subr.mxu0 0.0
        %1754 = vmatpush1.msra.mxu0 0.0
        %1755 = vmatprep.subr.mxu0 0.0
        %1756 = vmatpush1.msra.mxu0 0.0
        %1757 = vmatprep.subr.mxu0 0.0
        %1758 = vmatpush1.msra.mxu0 0.0
        %1759 = vmatprep.subr.mxu0 0.0
        %1760 = vmatpush1.msra.mxu0 0.0
        %1761 = vmatprep.subr.mxu0 0.0
        %1762 = vmatpush1.msra.mxu0 0.0
        %1763 = vmatprep.subr.mxu0 0.0
        %1764 = vmatpush1.msra.mxu0 0.0
        %1765 = vmatprep.subr.mxu0 0.0
        %1766 = vmatpush1.msra.mxu0 0.0
        %1767 = vmatprep.subr.mxu0 0.0
        %1768 = vmatpush1.msra.mxu0 0.0
        %1769 = vmatprep.subr.mxu0 0.0
        %1770 = vmatpush1.msra.mxu0 0.0
        %1771 = vmatprep.subr.mxu0 0.0
        %1772 = vmatpush1.msra.mxu0 0.0
        %1773 = vmatprep.subr.mxu0 0.0
        %1774 = vmatpush1.msra.mxu0 0.0
        %1775 = vmatprep.subr.mxu0 0.0
        %1776 = vmatpush1.msra.mxu0 0.0
        %1777 = vmatprep.subr.mxu0 0.0
        %1778 = vmatpush1.msra.mxu0 0.0
        %1779 = vmatprep.subr.mxu0 0.0
        %1780 = vmatpush1.msra.mxu0 0.0
        %1781 = vmatprep.subr.mxu0 0.0
        %1782 = vmatpush1.msra.mxu0 0.0
        %1783 = vmatprep.subr.mxu0 0.0
        %1784 = vmatpush1.msra.mxu0 0.0
        %1785 = vmatprep.subr.mxu0 0.0
        %1786 = vmatpush1.msra.mxu0 0.0
        %1787 = vmatprep.subr.mxu0 0.0
        %1788 = vmatpush1.msra.mxu0 0.0
        %1789 = vmatprep.subr.mxu0 0.0
        %1790 = vmatpush1.msra.mxu0 0.0
        %1791 = vmatprep.subr.mxu0 0.0
        %1792 = vmatpush1.msra.mxu0 0.0
        %1793 = vmatprep.subr.mxu0 0.0
        %1794 = vmatpush1.msra.mxu0 0.0
        %1795 = vmatprep.subr.mxu0 0.0
        %1796 = vmatpush1.msra.mxu0 0.0
        %1797 = vmatprep.subr.mxu0 0.0
        %1798 = vmatpush1.msra.mxu0 0.0
        %1799 = vmatprep.subr.mxu0 0.0
        %1800 = vmatpush1.msra.mxu0 0.0
        %1801 = vmatprep.subr.mxu0 0.0
        %1802 = vmatpush1.msra.mxu0 0.0
        %1803 = vmatprep.subr.mxu0 0.0
        %1804 = vmatpush1.msra.mxu0 0.0
        %1805 = vmatprep.subr.mxu0 0.0
        %1806 = vmatpush1.msra.mxu0 0.0
        %1807 = vmatprep.mubr.f32.mxu0 0.0
        %1808 = vmatmul.mubr.f32.gmra.mrb[0].mxu0 %v1741
        %v1809 = vpop.f32.mrb[0].mxu0
        %v1810 = vadd.f32 %v1705, %v1809
        %v1811 = vpop.f32.mrb[0].mxu0
        %1812 = vdwg.mxu0
        %v1813 = vsel %vm874, %v1810, 0.0
        %v1814 = vrot.slane %v1813, 4
        %v1815 = vadd.f32 %v1813, %v1814
        %v1816 = vrot.slane %v1815, 2
        %v1817 = vadd.f32 %v1815, %v1816
        %v1818 = vrot.slane %v1817, 1
        %v1819 = vadd.f32 %v1817, %v1818
        %v1820 = vmul.f32 %v1819, %v1261
        %v1822 = vrot.slane %v1810, 7
        %v1824 = vsel %vm1266, %v1820, %v1822
        %v1825 = vld [vmem:[%s12] sm:$0xff]
        %v1826 = vld [vmem:[%s12 + $0x8] sm:$0xff]
        %v1827 = vld [vmem:[%s12 + $0x10] sm:$0xff]
        %v1828 = vld [vmem:[%s12 + $0x18] sm:$0xff]
        %v1829 = vld [vmem:[%s12 + $0x20] sm:$0xff]
        %v1830 = vld [vmem:[%s12 + $0x28] sm:$0xff]
        %v1831 = vld [vmem:[%s12 + $0x30] sm:$0xff]
        %v1832 = vld [vmem:[%s12 + $0x38] sm:$0xff]
        %v1833 = vld [vmem:[%s12 + $0x40] sm:$0xff]
        %v1834 = vld [vmem:[%s12 + $0x48] sm:$0xff]
        %v1835 = vld [vmem:[%s12 + $0x50] sm:$0xff]
        %v1836 = vld [vmem:[%s12 + $0x58] sm:$0xff]
        %v1838 = vsel %vm874, %v1267, 0
        %v1840 = vsel %vm874, %v1264, 0
        %1842 = vmatprep.subr.mxu0 %v1826
        %1843 = vmatpush1.msra.mxu0 %v1825
        %1844 = vmatprep.subr.mxu0 %v1829
        %1845 = vmatpush1.msra.mxu0 %v1828
        %1846 = vmatprep.subr.mxu0 %v1832
        %1847 = vmatpush1.msra.mxu0 %v1831
        %1848 = vmatprep.subr.mxu0 %v1835
        %1849 = vmatpush1.msra.mxu0 %v1834
        %1850 = vmatprep.subr.mxu0 0.0
        %1851 = vmatpush1.msra.mxu0 0.0
        %1852 = vmatprep.subr.mxu0 0.0
        %1853 = vmatpush1.msra.mxu0 0.0
        %1854 = vmatprep.subr.mxu0 0.0
        %1855 = vmatpush1.msra.mxu0 0.0
        %1856 = vmatprep.subr.mxu0 0.0
        %1857 = vmatpush1.msra.mxu0 0.0
        %1858 = vmatprep.subr.mxu0 0.0
        %1859 = vmatpush1.msra.mxu0 0.0
        %1860 = vmatprep.subr.mxu0 0.0
        %1861 = vmatpush1.msra.mxu0 0.0
        %1862 = vmatprep.subr.mxu0 0.0
        %1863 = vmatpush1.msra.mxu0 0.0
        %1864 = vmatprep.subr.mxu0 0.0
        %1865 = vmatpush1.msra.mxu0 0.0
        %1866 = vmatprep.subr.mxu0 0.0
        %1867 = vmatpush1.msra.mxu0 0.0
        %1868 = vmatprep.subr.mxu0 0.0
        %1869 = vmatpush1.msra.mxu0 0.0
        %1870 = vmatprep.subr.mxu0 0.0
        %1871 = vmatpush1.msra.mxu0 0.0
        %1872 = vmatprep.subr.mxu0 0.0
        %1873 = vmatpush1.msra.mxu0 0.0
        %1874 = vmatprep.subr.mxu0 0.0
        %1875 = vmatpush1.msra.mxu0 0.0
        %1876 = vmatprep.subr.mxu0 0.0
        %1877 = vmatpush1.msra.mxu0 0.0
        %1878 = vmatprep.subr.mxu0 0.0
        %1879 = vmatpush1.msra.mxu0 0.0
        %1880 = vmatprep.subr.mxu0 0.0
        %1881 = vmatpush1.msra.mxu0 0.0
        %1882 = vmatprep.subr.mxu0 0.0
        %1883 = vmatpush1.msra.mxu0 0.0
        %1884 = vmatprep.subr.mxu0 0.0
        %1885 = vmatpush1.msra.mxu0 0.0
        %1886 = vmatprep.subr.mxu0 0.0
        %1887 = vmatpush1.msra.mxu0 0.0
        %1888 = vmatprep.subr.mxu0 0.0
        %1889 = vmatpush1.msra.mxu0 0.0
        %1890 = vmatprep.subr.mxu0 0.0
        %1891 = vmatpush1.msra.mxu0 0.0
        %1892 = vmatprep.subr.mxu0 0.0
        %1893 = vmatpush1.msra.mxu0 0.0
        %1894 = vmatprep.subr.mxu0 0.0
        %1895 = vmatpush1.msra.mxu0 0.0
        %1896 = vmatprep.subr.mxu0 0.0
        %1897 = vmatpush1.msra.mxu0 0.0
        %1898 = vmatprep.subr.mxu0 0.0
        %1899 = vmatpush1.msra.mxu0 0.0
        %1900 = vmatprep.subr.mxu0 0.0
        %1901 = vmatpush1.msra.mxu0 0.0
        %1902 = vmatprep.subr.mxu0 0.0
        %1903 = vmatpush1.msra.mxu0 0.0
        %1904 = vmatprep.subr.mxu0 0.0
        %1905 = vmatpush1.msra.mxu0 0.0
        %1906 = vmatprep.mubr.f32.mxu0 0.0
        %1907 = vmatmul.mubr.f32.gmra.mrb[0].mxu0 %v1838
        %v1908 = vpop.f32.mrb[0].mxu0
        %v1909 = vadd.f32 0.0, %v1908
        %v1910 = vpop.f32.mrb[0].mxu0
        %v1911 = vadd.f32 0.0, %v1910
        %1912 = vmatprep.mubr.f32.mxu0 0.0
        %1913 = vmatmul.mubr.f32.gmra.mrb[0].mxu0 %v1840
        %v1914 = vpop.f32.mrb[0].mxu0
        %v1915 = vpop.f32.mrb[0].mxu0
        %v1916 = vadd.f32 0.0, %v1915
        %1917 = vdwg.mxu0
        %1918 = vmatprep.subr.mxu0 0.0
        %1919 = vmatpush1.msra.mxu0 %v1827
        %1920 = vmatprep.subr.mxu0 0.0
        %1921 = vmatpush1.msra.mxu0 %v1830
        %1922 = vmatprep.subr.mxu0 0.0
        %1923 = vmatpush1.msra.mxu0 %v1833
        %1924 = vmatprep.subr.mxu0 0.0
        %1925 = vmatpush1.msra.mxu0 %v1836
        %1926 = vmatprep.subr.mxu0 0.0
        %1927 = vmatpush1.msra.mxu0 0.0
        %1928 = vmatprep.subr.mxu0 0.0
        %1929 = vmatpush1.msra.mxu0 0.0
        %1930 = vmatprep.subr.mxu0 0.0
        %1931 = vmatpush1.msra.mxu0 0.0
        %1932 = vmatprep.subr.mxu0 0.0
        %1933 = vmatpush1.msra.mxu0 0.0
        %1934 = vmatprep.subr.mxu0 0.0
        %1935 = vmatpush1.msra.mxu0 0.0
        %1936 = vmatprep.subr.mxu0 0.0
        %1937 = vmatpush1.msra.mxu0 0.0
        %1938 = vmatprep.subr.mxu0 0.0
        %1939 = vmatpush1.msra.mxu0 0.0
        %1940 = vmatprep.subr.mxu0 0.0
        %1941 = vmatpush1.msra.mxu0 0.0
        %1942 = vmatprep.subr.mxu0 0.0
        %1943 = vmatpush1.msra.mxu0 0.0
        %1944 = vmatprep.subr.mxu0 0.0
        %1945 = vmatpush1.msra.mxu0 0.0
        %1946 = vmatprep.subr.mxu0 0.0
        %1947 = vmatpush1.msra.mxu0 0.0
        %1948 = vmatprep.subr.mxu0 0.0
        %1949 = vmatpush1.msra.mxu0 0.0
        %1950 = vmatprep.subr.mxu0 0.0
        %1951 = vmatpush1.msra.mxu0 0.0
        %1952 = vmatprep.subr.mxu0 0.0
        %1953 = vmatpush1.msra.mxu0 0.0
        %1954 = vmatprep.subr.mxu0 0.0
        %1955 = vmatpush1.msra.mxu0 0.0
        %1956 = vmatprep.subr.mxu0 0.0
        %1957 = vmatpush1.msra.mxu0 0.0
        %1958 = vmatprep.subr.mxu0 0.0
        %1959 = vmatpush1.msra.mxu0 0.0
        %1960 = vmatprep.subr.mxu0 0.0
        %1961 = vmatpush1.msra.mxu0 0.0
        %1962 = vmatprep.subr.mxu0 0.0
        %1963 = vmatpush1.msra.mxu0 0.0
        %1964 = vmatprep.subr.mxu0 0.0
        %1965 = vmatpush1.msra.mxu0 0.0
        %1966 = vmatprep.subr.mxu0 0.0
        %1967 = vmatpush1.msra.mxu0 0.0
        %1968 = vmatprep.subr.mxu0 0.0
        %1969 = vmatpush1.msra.mxu0 0.0
        %1970 = vmatprep.subr.mxu0 0.0
        %1971 = vmatpush1.msra.mxu0 0.0
        %1972 = vmatprep.subr.mxu0 0.0
        %1973 = vmatpush1.msra.mxu0 0.0
        %1974 = vmatprep.subr.mxu0 0.0
        %1975 = vmatpush1.msra.mxu0 0.0
        %1976 = vmatprep.subr.mxu0 0.0
        %1977 = vmatpush1.msra.mxu0 0.0
        %1978 = vmatprep.subr.mxu0 0.0
        %1979 = vmatpush1.msra.mxu0 0.0
        %1980 = vmatprep.subr.mxu0 0.0
        %1981 = vmatpush1.msra.mxu0 0.0
        %1982 = vmatprep.mubr.f32.mxu0 0.0
        %1983 = vmatmul.mubr.f32.gmra.mrb[0].mxu0 %v1838
        %v1984 = vpop.f32.mrb[0].mxu0
        %v1985 = vadd.f32 0.0, %v1984
        %v1986 = vpop.f32.mrb[0].mxu0
        %1987 = vmatprep.mubr.f32.mxu0 0.0
        %1988 = vmatmul.mubr.f32.gmra.mrb[0].mxu0 %v1840
        %v1989 = vpop.f32.mrb[0].mxu0
        %v1990 = vadd.f32 0.0, %v1989
        %v1991 = vpop.f32.mrb[0].mxu0
        %1992 = vdwg.mxu0
        %v1994 = vsel %vm874, %v1824, 0
        %v1996 = vsel %vm874, %v1822, 0
        %1998 = vmatprep.subr.mxu0 %v1826
        %1999 = vmatpush1.msra.mxu0 %v1825
        %2000 = vmatprep.subr.mxu0 %v1829
        %2001 = vmatpush1.msra.mxu0 %v1828
        %2002 = vmatprep.subr.mxu0 %v1832
        %2003 = vmatpush1.msra.mxu0 %v1831
        %2004 = vmatprep.subr.mxu0 %v1835
        %2005 = vmatpush1.msra.mxu0 %v1834
        %2006 = vmatprep.subr.mxu0 0.0
        %2007 = vmatpush1.msra.mxu0 0.0
        %2008 = vmatprep.subr.mxu0 0.0
        %2009 = vmatpush1.msra.mxu0 0.0
        %2010 = vmatprep.subr.mxu0 0.0
        %2011 = vmatpush1.msra.mxu0 0.0
        %2012 = vmatprep.subr.mxu0 0.0
        %2013 = vmatpush1.msra.mxu0 0.0
        %2014 = vmatprep.subr.mxu0 0.0
        %2015 = vmatpush1.msra.mxu0 0.0
        %2016 = vmatprep.subr.mxu0 0.0
        %2017 = vmatpush1.msra.mxu0 0.0
        %2018 = vmatprep.subr.mxu0 0.0
        %2019 = vmatpush1.msra.mxu0 0.0
        %2020 = vmatprep.subr.mxu0 0.0
        %2021 = vmatpush1.msra.mxu0 0.0
        %2022 = vmatprep.subr.mxu0 0.0
        %2023 = vmatpush1.msra.mxu0 0.0
        %2024 = vmatprep.subr.mxu0 0.0
        %2025 = vmatpush1.msra.mxu0 0.0
        %2026 = vmatprep.subr.mxu0 0.0
        %2027 = vmatpush1.msra.mxu0 0.0
        %2028 = vmatprep.subr.mxu0 0.0
        %2029 = vmatpush1.msra.mxu0 0.0
        %2030 = vmatprep.subr.mxu0 0.0
        %2031 = vmatpush1.msra.mxu0 0.0
        %2032 = vmatprep.subr.mxu0 0.0
        %2033 = vmatpush1.msra.mxu0 0.0
        %2034 = vmatprep.subr.mxu0 0.0
        %2035 = vmatpush1.msra.mxu0 0.0
        %2036 = vmatprep.subr.mxu0 0.0
        %2037 = vmatpush1.msra.mxu0 0.0
        %2038 = vmatprep.subr.mxu0 0.0
        %2039 = vmatpush1.msra.mxu0 0.0
        %2040 = vmatprep.subr.mxu0 0.0
        %2041 = vmatpush1.msra.mxu0 0.0
        %2042 = vmatprep.subr.mxu0 0.0
        %2043 = vmatpush1.msra.mxu0 0.0
        %2044 = vmatprep.subr.mxu0 0.0
        %2045 = vmatpush1.msra.mxu0 0.0
        %2046 = vmatprep.subr.mxu0 0.0
        %2047 = vmatpush1.msra.mxu0 0.0
        %2048 = vmatprep.subr.mxu0 0.0
        %2049 = vmatpush1.msra.mxu0 0.0
        %2050 = vmatprep.subr.mxu0 0.0
        %2051 = vmatpush1.msra.mxu0 0.0
        %2052 = vmatprep.subr.mxu0 0.0
        %2053 = vmatpush1.msra.mxu0 0.0
        %2054 = vmatprep.subr.mxu0 0.0
        %2055 = vmatpush1.msra.mxu0 0.0
        %2056 = vmatprep.subr.mxu0 0.0
        %2057 = vmatpush1.msra.mxu0 0.0
        %2058 = vmatprep.subr.mxu0 0.0
        %2059 = vmatpush1.msra.mxu0 0.0
        %2060 = vmatprep.subr.mxu0 0.0
        %2061 = vmatpush1.msra.mxu0 0.0
        %2062 = vmatprep.mubr.f32.mxu0 0.0
        %2063 = vmatmul.mubr.f32.gmra.mrb[0].mxu0 %v1994
        %v2064 = vpop.f32.mrb[0].mxu0
        %v2065 = vadd.f32 0.0, %v2064
        %v2066 = vpop.f32.mrb[0].mxu0
        %v2067 = vadd.f32 0.0, %v2066
        %2068 = vmatprep.mubr.f32.mxu0 0.0
        %2069 = vmatmul.mubr.f32.gmra.mrb[0].mxu0 %v1996
        %v2070 = vpop.f32.mrb[0].mxu0
        %v2071 = vpop.f32.mrb[0].mxu0
        %v2072 = vadd.f32 0.0, %v2071
        %2073 = vdwg.mxu0
        %2074 = vmatprep.subr.mxu0 0.0
        %2075 = vmatpush1.msra.mxu0 %v1827
        %2076 = vmatprep.subr.mxu0 0.0
        %2077 = vmatpush1.msra.mxu0 %v1830
        %2078 = vmatprep.subr.mxu0 0.0
        %2079 = vmatpush1.msra.mxu0 %v1833
        %2080 = vmatprep.subr.mxu0 0.0
        %2081 = vmatpush1.msra.mxu0 %v1836
        %2082 = vmatprep.subr.mxu0 0.0
        %2083 = vmatpush1.msra.mxu0 0.0
        %2084 = vmatprep.subr.mxu0 0.0
        %2085 = vmatpush1.msra.mxu0 0.0
        %2086 = vmatprep.subr.mxu0 0.0
        %2087 = vmatpush1.msra.mxu0 0.0
        %2088 = vmatprep.subr.mxu0 0.0
        %2089 = vmatpush1.msra.mxu0 0.0
        %2090 = vmatprep.subr.mxu0 0.0
        %2091 = vmatpush1.msra.mxu0 0.0
        %2092 = vmatprep.subr.mxu0 0.0
        %2093 = vmatpush1.msra.mxu0 0.0
        %2094 = vmatprep.subr.mxu0 0.0
        %2095 = vmatpush1.msra.mxu0 0.0
        %2096 = vmatprep.subr.mxu0 0.0
        %2097 = vmatpush1.msra.mxu0 0.0
        %2098 = vmatprep.subr.mxu0 0.0
        %2099 = vmatpush1.msra.mxu0 0.0
        %2100 = vmatprep.subr.mxu0 0.0
        %2101 = vmatpush1.msra.mxu0 0.0
        %2102 = vmatprep.subr.mxu0 0.0
        %2103 = vmatpush1.msra.mxu0 0.0
        %2104 = vmatprep.subr.mxu0 0.0
        %2105 = vmatpush1.msra.mxu0 0.0
        %2106 = vmatprep.subr.mxu0 0.0
        %2107 = vmatpush1.msra.mxu0 0.0
        %2108 = vmatprep.subr.mxu0 0.0
        %2109 = vmatpush1.msra.mxu0 0.0
        %2110 = vmatprep.subr.mxu0 0.0
        %2111 = vmatpush1.msra.mxu0 0.0
        %2112 = vmatprep.subr.mxu0 0.0
        %2113 = vmatpush1.msra.mxu0 0.0
        %2114 = vmatprep.subr.mxu0 0.0
        %2115 = vmatpush1.msra.mxu0 0.0
        %2116 = vmatprep.subr.mxu0 0.0
        %2117 = vmatpush1.msra.mxu0 0.0
        %2118 = vmatprep.subr.mxu0 0.0
        %2119 = vmatpush1.msra.mxu0 0.0
        %2120 = vmatprep.subr.mxu0 0.0
        %2121 = vmatpush1.msra.mxu0 0.0
        %2122 = vmatprep.subr.mxu0 0.0
        %2123 = vmatpush1.msra.mxu0 0.0
        %2124 = vmatprep.subr.mxu0 0.0
        %2125 = vmatpush1.msra.mxu0 0.0
        %2126 = vmatprep.subr.mxu0 0.0
        %2127 = vmatpush1.msra.mxu0 0.0
        %2128 = vmatprep.subr.mxu0 0.0
        %2129 = vmatpush1.msra.mxu0 0.0
        %2130 = vmatprep.subr.mxu0 0.0
        %2131 = vmatpush1.msra.mxu0 0.0
        %2132 = vmatprep.subr.mxu0 0.0
        %2133 = vmatpush1.msra.mxu0 0.0
        %2134 = vmatprep.subr.mxu0 0.0
        %2135 = vmatpush1.msra.mxu0 0.0
        %2136 = vmatprep.subr.mxu0 0.0
        %2137 = vmatpush1.msra.mxu0 0.0
        %2138 = vmatprep.mubr.f32.mxu0 0.0
        %2139 = vmatmul.mubr.f32.gmra.mrb[0].mxu0 %v1994
        %v2140 = vpop.f32.mrb[0].mxu0
        %v2141 = vadd.f32 0.0, %v2140
        %v2142 = vpop.f32.mrb[0].mxu0
        %2143 = vmatprep.mubr.f32.mxu0 0.0
        %2144 = vmatmul.mubr.f32.gmra.mrb[0].mxu0 %v1996
        %v2145 = vpop.f32.mrb[0].mxu0
        %v2146 = vadd.f32 0.0, %v2145
        %v2147 = vpop.f32.mrb[0].mxu0
        %2148 = vdwg.mxu0
        %v2150 = vsel %vm874, %v1909, 0
        %v2153 = vsel %vm874, %v2067, 0
        %v2156 = vsel %vm874, %v2072, 0
        %2158 = vmatprep.subr.mxu0 0.0
        %2159 = vmatpush1.xpose.msra.mxu0 %v2153
        %2160 = vmatprep.subr.mxu0 0.0
        %2161 = vmatpush1.xpose.msra.mxu0 %v2156
        %2162 = vmatprep.subr.mxu0 0.0
        %2163 = vmatpush1.xpose.msra.mxu0 0.0
        %2164 = vmatprep.subr.mxu0 0.0
        %2165 = vmatpush1.xpose.msra.mxu0 0.0
        %2166 = vmatprep.subr.mxu0 0.0
        %2167 = vmatpush1.xpose.msra.mxu0 0.0
        %2168 = vmatprep.subr.mxu0 0.0
        %2169 = vmatpush1.xpose.msra.mxu0 0.0
        %2170 = vmatprep.subr.mxu0 0.0
        %2171 = vmatpush1.xpose.msra.mxu0 0.0
        %2172 = vmatprep.subr.mxu0 0.0
        %2173 = vmatpush1.xpose.msra.mxu0 0.0
        %2174 = vmatprep.subr.mxu0 0.0
        %2175 = vmatpush1.xpose.msra.mxu0 0.0
        %2176 = vmatprep.subr.mxu0 0.0
        %2177 = vmatpush1.xpose.msra.mxu0 0.0
        %2178 = vmatprep.subr.mxu0 0.0
        %2179 = vmatpush1.xpose.msra.mxu0 0.0
        %2180 = vmatprep.subr.mxu0 0.0
        %2181 = vmatpush1.xpose.msra.mxu0 0.0
        %2182 = vmatprep.subr.mxu0 0.0
        %2183 = vmatpush1.xpose.msra.mxu0 0.0
        %2184 = vmatprep.subr.mxu0 0.0
        %2185 = vmatpush1.xpose.msra.mxu0 0.0
        %2186 = vmatprep.subr.mxu0 0.0
        %2187 = vmatpush1.xpose.msra.mxu0 0.0
        %2188 = vmatprep.subr.mxu0 0.0
        %2189 = vmatpush1.xpose.msra.mxu0 0.0
        %2190 = vmatprep.subr.mxu0 0.0
        %2191 = vmatpush1.xpose.msra.mxu0 0.0
        %2192 = vmatprep.subr.mxu0 0.0
        %2193 = vmatpush1.xpose.msra.mxu0 0.0
        %2194 = vmatprep.subr.mxu0 0.0
        %2195 = vmatpush1.xpose.msra.mxu0 0.0
        %2196 = vmatprep.subr.mxu0 0.0
        %2197 = vmatpush1.xpose.msra.mxu0 0.0
        %2198 = vmatprep.subr.mxu0 0.0
        %2199 = vmatpush1.xpose.msra.mxu0 0.0
        %2200 = vmatprep.subr.mxu0 0.0
        %2201 = vmatpush1.xpose.msra.mxu0 0.0
        %2202 = vmatprep.subr.mxu0 0.0
        %2203 = vmatpush1.xpose.msra.mxu0 0.0
        %2204 = vmatprep.subr.mxu0 0.0
        %2205 = vmatpush1.xpose.msra.mxu0 0.0
        %2206 = vmatprep.subr.mxu0 0.0
        %2207 = vmatpush1.xpose.msra.mxu0 0.0
        %2208 = vmatprep.subr.mxu0 0.0
        %2209 = vmatpush1.xpose.msra.mxu0 0.0
        %2210 = vmatprep.subr.mxu0 0.0
        %2211 = vmatpush1.xpose.msra.mxu0 0.0
        %2212 = vmatprep.subr.mxu0 0.0
        %2213 = vmatpush1.xpose.msra.mxu0 0.0
        %2214 = vmatprep.subr.mxu0 0.0
        %2215 = vmatpush1.xpose.msra.mxu0 0.0
        %2216 = vmatprep.subr.mxu0 0.0
        %2217 = vmatpush1.xpose.msra.mxu0 0.0
        %2218 = vmatprep.subr.mxu0 0.0
        %2219 = vmatpush1.xpose.msra.mxu0 0.0
        %2220 = vmatprep.subr.mxu0 0.0
        %2221 = vmatpush1.xpose.msra.mxu0 0.0
        %2222 = vmatprep.mubr.f32.mxu0 0.0
        %2223 = vmatmul.mubr.f32.gmra.mrb[0].mxu0 %v2150
        %v2224 = vpop.f32.mrb[0].mxu0
        %v2225 = vadd.f32 0.0, %v2224
        %v2226 = vpop.f32.mrb[0].mxu0
        %2227 = vdwg.mxu0
        %v2228 = vmul.f32 %v2225, 0.17677669
        %vm2229 = vcmask 65536
        %v2230 = vsel %vm2229, %v2228, -inf
        %2231 = vmax.xlane.f32.xlu0 %v2230
        %v2232 = vpop.xlane.xlu0 %2231
        %v2233 = vsub.f32 %v2228, %v2232
        %v2234 = vmul.f32 %v2233, 1.442695
        %v2235 = vpow.pop %v2234
        %v2236 = vsel %vm2229, %v2235, 0.0
        %2237 = vadd.xlane.f32.xlu0 %v2236
        %v2238 = vpop.xlane.xlu0 %2237
        %v2239 = vrcp.pop %v2238
        %v2240 = vmul.f32 %v2235, %v2239
        %vm2241 = vcmask 72704
        %v2243 = vsel %vm2241, %v2240, 0
        %v2246 = vsel %vm1266, %v2146, 0
        %2248 = vmatprep.subr.mxu0 0.0
        %2249 = vmatpush1.msra.mxu0 %v2141
        %2250 = vmatprep.subr.mxu0 0.0
        %2251 = vmatpush1.msra.mxu0 %v2246
        %2252 = vmatprep.subr.mxu0 0.0
        %2253 = vmatpush1.msra.mxu0 0.0
        %2254 = vmatprep.subr.mxu0 0.0
        %2255 = vmatpush1.msra.mxu0 0.0
        %2256 = vmatprep.subr.mxu0 0.0
        %2257 = vmatpush1.msra.mxu0 0.0
        %2258 = vmatprep.subr.mxu0 0.0
        %2259 = vmatpush1.msra.mxu0 0.0
        %2260 = vmatprep.subr.mxu0 0.0
        %2261 = vmatpush1.msra.mxu0 0.0
        %2262 = vmatprep.subr.mxu0 0.0
        %2263 = vmatpush1.msra.mxu0 0.0
        %2264 = vmatprep.subr.mxu0 0.0
        %2265 = vmatpush1.msra.mxu0 0.0
        %2266 = vmatprep.subr.mxu0 0.0
        %2267 = vmatpush1.msra.mxu0 0.0
        %2268 = vmatprep.subr.mxu0 0.0
        %2269 = vmatpush1.msra.mxu0 0.0
        %2270 = vmatprep.subr.mxu0 0.0
        %2271 = vmatpush1.msra.mxu0 0.0
        %2272 = vmatprep.subr.mxu0 0.0
        %2273 = vmatpush1.msra.mxu0 0.0
        %2274 = vmatprep.subr.mxu0 0.0
        %2275 = vmatpush1.msra.mxu0 0.0
        %2276 = vmatprep.subr.mxu0 0.0
        %2277 = vmatpush1.msra.mxu0 0.0
        %2278 = vmatprep.subr.mxu0 0.0
        %2279 = vmatpush1.msra.mxu0 0.0
        %2280 = vmatprep.subr.mxu0 0.0
        %2281 = vmatpush1.msra.mxu0 0.0
        %2282 = vmatprep.subr.mxu0 0.0
        %2283 = vmatpush1.msra.mxu0 0.0
        %2284 = vmatprep.subr.mxu0 0.0
        %2285 = vmatpush1.msra.mxu0 0.0
        %2286 = vmatprep.subr.mxu0 0.0
        %2287 = vmatpush1.msra.mxu0 0.0
        %2288 = vmatprep.subr.mxu0 0.0
        %2289 = vmatpush1.msra.mxu0 0.0
        %2290 = vmatprep.subr.mxu0 0.0
        %2291 = vmatpush1.msra.mxu0 0.0
        %2292 = vmatprep.subr.mxu0 0.0
        %2293 = vmatpush1.msra.mxu0 0.0
        %2294 = vmatprep.subr.mxu0 0.0
        %2295 = vmatpush1.msra.mxu0 0.0
        %2296 = vmatprep.subr.mxu0 0.0
        %2297 = vmatpush1.msra.mxu0 0.0
        %2298 = vmatprep.subr.mxu0 0.0
        %2299 = vmatpush1.msra.mxu0 0.0
        %2300 = vmatprep.subr.mxu0 0.0
        %2301 = vmatpush1.msra.mxu0 0.0
        %2302 = vmatprep.subr.mxu0 0.0
        %2303 = vmatpush1.msra.mxu0 0.0
        %2304 = vmatprep.subr.mxu0 0.0
        %2305 = vmatpush1.msra.mxu0 0.0
        %2306 = vmatprep.subr.mxu0 0.0
        %2307 = vmatpush1.msra.mxu0 0.0
        %2308 = vmatprep.subr.mxu0 0.0
        %2309 = vmatpush1.msra.mxu0 0.0
        %2310 = vmatprep.subr.mxu0 0.0
        %2311 = vmatpush1.msra.mxu0 0.0
        %2312 = vmatprep.mubr.f32.mxu0 0.0
        %2313 = vmatmul.mubr.f32.gmra.mrb[0].mxu0 %v2243
        %v2314 = vpop.f32.mrb[0].mxu0
        %v2315 = vadd.f32 0.0, %v2314
        %v2316 = vpop.f32.mrb[0].mxu0
        %2317 = vdwg.mxu0
        %2318 = vrot.lane.b32.xlu0 %v1909, 96
        %v2319 = vpop.permute.xlu0 %2318
        %2320 = vrot.lane.b32.xlu0 %v2067, 96
        %v2321 = vpop.permute.xlu0 %2320
        %2322 = vrot.lane.b32.xlu0 %v2072, 96
        %v2323 = vpop.permute.xlu0 %2322
        %v2324 = vsel %vm874, %v2319, 0
        %v2326 = vsel %vm874, %v2321, 0
        %v2328 = vsel %vm874, %v2323, 0
        %2330 = vmatprep.subr.mxu0 0.0
        %2331 = vmatpush1.xpose.msra.mxu0 %v2326
        %2332 = vmatprep.subr.mxu0 0.0
        %2333 = vmatpush1.xpose.msra.mxu0 %v2328
        %2334 = vmatprep.subr.mxu0 0.0
        %2335 = vmatpush1.xpose.msra.mxu0 0.0
        %2336 = vmatprep.subr.mxu0 0.0
        %2337 = vmatpush1.xpose.msra.mxu0 0.0
        %2338 = vmatprep.subr.mxu0 0.0
        %2339 = vmatpush1.xpose.msra.mxu0 0.0
        %2340 = vmatprep.subr.mxu0 0.0
        %2341 = vmatpush1.xpose.msra.mxu0 0.0
        %2342 = vmatprep.subr.mxu0 0.0
        %2343 = vmatpush1.xpose.msra.mxu0 0.0
        %2344 = vmatprep.subr.mxu0 0.0
        %2345 = vmatpush1.xpose.msra.mxu0 0.0
        %2346 = vmatprep.subr.mxu0 0.0
        %2347 = vmatpush1.xpose.msra.mxu0 0.0
        %2348 = vmatprep.subr.mxu0 0.0
        %2349 = vmatpush1.xpose.msra.mxu0 0.0
        %2350 = vmatprep.subr.mxu0 0.0
        %2351 = vmatpush1.xpose.msra.mxu0 0.0
        %2352 = vmatprep.subr.mxu0 0.0
        %2353 = vmatpush1.xpose.msra.mxu0 0.0
        %2354 = vmatprep.subr.mxu0 0.0
        %2355 = vmatpush1.xpose.msra.mxu0 0.0
        %2356 = vmatprep.subr.mxu0 0.0
        %2357 = vmatpush1.xpose.msra.mxu0 0.0
        %2358 = vmatprep.subr.mxu0 0.0
        %2359 = vmatpush1.xpose.msra.mxu0 0.0
        %2360 = vmatprep.subr.mxu0 0.0
        %2361 = vmatpush1.xpose.msra.mxu0 0.0
        %2362 = vmatprep.subr.mxu0 0.0
        %2363 = vmatpush1.xpose.msra.mxu0 0.0
        %2364 = vmatprep.subr.mxu0 0.0
        %2365 = vmatpush1.xpose.msra.mxu0 0.0
        %2366 = vmatprep.subr.mxu0 0.0
        %2367 = vmatpush1.xpose.msra.mxu0 0.0
        %2368 = vmatprep.subr.mxu0 0.0
        %2369 = vmatpush1.xpose.msra.mxu0 0.0
        %2370 = vmatprep.subr.mxu0 0.0
        %2371 = vmatpush1.xpose.msra.mxu0 0.0
        %2372 = vmatprep.subr.mxu0 0.0
        %2373 = vmatpush1.xpose.msra.mxu0 0.0
        %2374 = vmatprep.subr.mxu0 0.0
        %2375 = vmatpush1.xpose.msra.mxu0 0.0
        %2376 = vmatprep.subr.mxu0 0.0
        %2377 = vmatpush1.xpose.msra.mxu0 0.0
        %2378 = vmatprep.subr.mxu0 0.0
        %2379 = vmatpush1.xpose.msra.mxu0 0.0
        %2380 = vmatprep.subr.mxu0 0.0
        %2381 = vmatpush1.xpose.msra.mxu0 0.0
        %2382 = vmatprep.subr.mxu0 0.0
        %2383 = vmatpush1.xpose.msra.mxu0 0.0
        %2384 = vmatprep.subr.mxu0 0.0
        %2385 = vmatpush1.xpose.msra.mxu0 0.0
        %2386 = vmatprep.subr.mxu0 0.0
        %2387 = vmatpush1.xpose.msra.mxu0 0.0
        %2388 = vmatprep.subr.mxu0 0.0
        %2389 = vmatpush1.xpose.msra.mxu0 0.0
        %2390 = vmatprep.subr.mxu0 0.0
        %2391 = vmatpush1.xpose.msra.mxu0 0.0
        %2392 = vmatprep.subr.mxu0 0.0
        %2393 = vmatpush1.xpose.msra.mxu0 0.0
        %2394 = vmatprep.mubr.f32.mxu0 0.0
        %2395 = vmatmul.mubr.f32.gmra.mrb[0].mxu0 %v2324
        %v2396 = vpop.f32.mrb[0].mxu0
        %v2397 = vadd.f32 0.0, %v2396
        %v2398 = vpop.f32.mrb[0].mxu0
        %2399 = vdwg.mxu0
        %v2400 = vmul.f32 %v2397, 0.17677669
        %v2401 = vsel %vm2229, %v2400, -inf
        %2402 = vmax.xlane.f32.xlu0 %v2401
        %v2403 = vpop.xlane.xlu0 %2402
        %v2404 = vsub.f32 %v2400, %v2403
        %v2405 = vmul.f32 %v2404, 1.442695
        %v2406 = vpow.pop %v2405
        %v2407 = vsel %vm2229, %v2406, 0.0
        %2408 = vadd.xlane.f32.xlu0 %v2407
        %v2409 = vpop.xlane.xlu0 %2408
        %v2410 = vrcp.pop %v2409
        %v2411 = vmul.f32 %v2406, %v2410
        %2413 = vrot.lane.b32.xlu0 %v2141, 96
        %v2414 = vpop.permute.xlu0 %2413
        %2415 = vrot.lane.b32.xlu0 %v2146, 96
        %v2416 = vpop.permute.xlu0 %2415
        %v2419 = vsel %vm2241, %v2411, 0
        %v2421 = vsel %vm1266, %v2416, 0
        %2423 = vmatprep.subr.mxu0 0.0
        %2424 = vmatpush1.msra.mxu0 %v2414
        %2425 = vmatprep.subr.mxu0 0.0
        %2426 = vmatpush1.msra.mxu0 %v2421
        %2427 = vmatprep.subr.mxu0 0.0
        %2428 = vmatpush1.msra.mxu0 0.0
        %2429 = vmatprep.subr.mxu0 0.0
        %2430 = vmatpush1.msra.mxu0 0.0
        %2431 = vmatprep.subr.mxu0 0.0
        %2432 = vmatpush1.msra.mxu0 0.0
        %2433 = vmatprep.subr.mxu0 0.0
        %2434 = vmatpush1.msra.mxu0 0.0
        %2435 = vmatprep.subr.mxu0 0.0
        %2436 = vmatpush1.msra.mxu0 0.0
        %2437 = vmatprep.subr.mxu0 0.0
        %2438 = vmatpush1.msra.mxu0 0.0
        %2439 = vmatprep.subr.mxu0 0.0
        %2440 = vmatpush1.msra.mxu0 0.0
        %2441 = vmatprep.subr.mxu0 0.0
        %2442 = vmatpush1.msra.mxu0 0.0
        %2443 = vmatprep.subr.mxu0 0.0
        %2444 = vmatpush1.msra.mxu0 0.0
        %2445 = vmatprep.subr.mxu0 0.0
        %2446 = vmatpush1.msra.mxu0 0.0
        %2447 = vmatprep.subr.mxu0 0.0
        %2448 = vmatpush1.msra.mxu0 0.0
        %2449 = vmatprep.subr.mxu0 0.0
        %2450 = vmatpush1.msra.mxu0 0.0
        %2451 = vmatprep.subr.mxu0 0.0
        %2452 = vmatpush1.msra.mxu0 0.0
        %2453 = vmatprep.subr.mxu0 0.0
        %2454 = vmatpush1.msra.mxu0 0.0
        %2455 = vmatprep.subr.mxu0 0.0
        %2456 = vmatpush1.msra.mxu0 0.0
        %2457 = vmatprep.subr.mxu0 0.0
        %2458 = vmatpush1.msra.mxu0 0.0
        %2459 = vmatprep.subr.mxu0 0.0
        %2460 = vmatpush1.msra.mxu0 0.0
        %2461 = vmatprep.subr.mxu0 0.0
        %2462 = vmatpush1.msra.mxu0 0.0
        %2463 = vmatprep.subr.mxu0 0.0
        %2464 = vmatpush1.msra.mxu0 0.0
        %2465 = vmatprep.subr.mxu0 0.0
        %2466 = vmatpush1.msra.mxu0 0.0
        %2467 = vmatprep.subr.mxu0 0.0
        %2468 = vmatpush1.msra.mxu0 0.0
        %2469 = vmatprep.subr.mxu0 0.0
        %2470 = vmatpush1.msra.mxu0 0.0
        %2471 = vmatprep.subr.mxu0 0.0
        %2472 = vmatpush1.msra.mxu0 0.0
        %2473 = vmatprep.subr.mxu0 0.0
        %2474 = vmatpush1.msra.mxu0 0.0
        %2475 = vmatprep.subr.mxu0 0.0
        %2476 = vmatpush1.msra.mxu0 0.0
        %2477 = vmatprep.subr.mxu0 0.0
        %2478 = vmatpush1.msra.mxu0 0.0
        %2479 = vmatprep.subr.mxu0 0.0
        %2480 = vmatpush1.msra.mxu0 0.0
        %2481 = vmatprep.subr.mxu0 0.0
        %2482 = vmatpush1.msra.mxu0 0.0
        %2483 = vmatprep.subr.mxu0 0.0
        %2484 = vmatpush1.msra.mxu0 0.0
        %2485 = vmatprep.subr.mxu0 0.0
        %2486 = vmatpush1.msra.mxu0 0.0
        %2487 = vmatprep.mubr.f32.mxu0 0.0
        %2488 = vmatmul.mubr.f32.gmra.mrb[0].mxu0 %v2419
        %v2489 = vpop.f32.mrb[0].mxu0
        %v2490 = vadd.f32 0.0, %v2489
        %v2491 = vpop.f32.mrb[0].mxu0
        %2492 = vdwg.mxu0
        %2493 = vrot.lane.b32.xlu0 %v1909, 64
        %v2494 = vpop.permute.xlu0 %2493
        %2495 = vrot.lane.b32.xlu0 %v2067, 64
        %v2496 = vpop.permute.xlu0 %2495
        %2497 = vrot.lane.b32.xlu0 %v2072, 64
        %v2498 = vpop.permute.xlu0 %2497
        %v2499 = vsel %vm874, %v2494, 0
        %v2501 = vsel %vm874, %v2496, 0
        %v2503 = vsel %vm874, %v2498, 0
        %2505 = vmatprep.subr.mxu0 0.0
        %2506 = vmatpush1.xpose.msra.mxu0 %v2501
        %2507 = vmatprep.subr.mxu0 0.0
        %2508 = vmatpush1.xpose.msra.mxu0 %v2503
        %2509 = vmatprep.subr.mxu0 0.0
        %2510 = vmatpush1.xpose.msra.mxu0 0.0
        %2511 = vmatprep.subr.mxu0 0.0
        %2512 = vmatpush1.xpose.msra.mxu0 0.0
        %2513 = vmatprep.subr.mxu0 0.0
        %2514 = vmatpush1.xpose.msra.mxu0 0.0
        %2515 = vmatprep.subr.mxu0 0.0
        %2516 = vmatpush1.xpose.msra.mxu0 0.0
        %2517 = vmatprep.subr.mxu0 0.0
        %2518 = vmatpush1.xpose.msra.mxu0 0.0
        %2519 = vmatprep.subr.mxu0 0.0
        %2520 = vmatpush1.xpose.msra.mxu0 0.0
        %2521 = vmatprep.subr.mxu0 0.0
        %2522 = vmatpush1.xpose.msra.mxu0 0.0
        %2523 = vmatprep.subr.mxu0 0.0
        %2524 = vmatpush1.xpose.msra.mxu0 0.0
        %2525 = vmatprep.subr.mxu0 0.0
        %2526 = vmatpush1.xpose.msra.mxu0 0.0
        %2527 = vmatprep.subr.mxu0 0.0
        %2528 = vmatpush1.xpose.msra.mxu0 0.0
        %2529 = vmatprep.subr.mxu0 0.0
        %2530 = vmatpush1.xpose.msra.mxu0 0.0
        %2531 = vmatprep.subr.mxu0 0.0
        %2532 = vmatpush1.xpose.msra.mxu0 0.0
        %2533 = vmatprep.subr.mxu0 0.0
        %2534 = vmatpush1.xpose.msra.mxu0 0.0
        %2535 = vmatprep.subr.mxu0 0.0
        %2536 = vmatpush1.xpose.msra.mxu0 0.0
        %2537 = vmatprep.subr.mxu0 0.0
        %2538 = vmatpush1.xpose.msra.mxu0 0.0
        %2539 = vmatprep.subr.mxu0 0.0
        %2540 = vmatpush1.xpose.msra.mxu0 0.0
        %2541 = vmatprep.subr.mxu0 0.0
        %2542 = vmatpush1.xpose.msra.mxu0 0.0
        %2543 = vmatprep.subr.mxu0 0.0
        %2544 = vmatpush1.xpose.msra.mxu0 0.0
        %2545 = vmatprep.subr.mxu0 0.0
        %2546 = vmatpush1.xpose.msra.mxu0 0.0
        %2547 = vmatprep.subr.mxu0 0.0
        %2548 = vmatpush1.xpose.msra.mxu0 0.0
        %2549 = vmatprep.subr.mxu0 0.0
        %2550 = vmatpush1.xpose.msra.mxu0 0.0
        %2551 = vmatprep.subr.mxu0 0.0
        %2552 = vmatpush1.xpose.msra.mxu0 0.0
        %2553 = vmatprep.subr.mxu0 0.0
        %2554 = vmatpush1.xpose.msra.mxu0 0.0
        %2555 = vmatprep.subr.mxu0 0.0
        %2556 = vmatpush1.xpose.msra.mxu0 0.0
        %2557 = vmatprep.subr.mxu0 0.0
        %2558 = vmatpush1.xpose.msra.mxu0 0.0
        %2559 = vmatprep.subr.mxu0 0.0
        %2560 = vmatpush1.xpose.msra.mxu0 0.0
        %2561 = vmatprep.subr.mxu0 0.0
        %2562 = vmatpush1.xpose.msra.mxu0 0.0
        %2563 = vmatprep.subr.mxu0 0.0
        %2564 = vmatpush1.xpose.msra.mxu0 0.0
        %2565 = vmatprep.subr.mxu0 0.0
        %2566 = vmatpush1.xpose.msra.mxu0 0.0
        %2567 = vmatprep.subr.mxu0 0.0
        %2568 = vmatpush1.xpose.msra.mxu0 0.0
        %2569 = vmatprep.mubr.f32.mxu0 0.0
        %2570 = vmatmul.mubr.f32.gmra.mrb[0].mxu0 %v2499
        %v2571 = vpop.f32.mrb[0].mxu0
        %v2572 = vadd.f32 0.0, %v2571
        %v2573 = vpop.f32.mrb[0].mxu0
        %2574 = vdwg.mxu0
        %v2575 = vmul.f32 %v2572, 0.17677669
        %v2576 = vsel %vm2229, %v2575, -inf
        %2577 = vmax.xlane.f32.xlu0 %v2576
        %v2578 = vpop.xlane.xlu0 %2577
        %v2579 = vsub.f32 %v2575, %v2578
        %v2580 = vmul.f32 %v2579, 1.442695
        %v2581 = vpow.pop %v2580
        %v2582 = vsel %vm2229, %v2581, 0.0
        %2583 = vadd.xlane.f32.xlu0 %v2582
        %v2584 = vpop.xlane.xlu0 %2583
        %v2585 = vrcp.pop %v2584
        %v2586 = vmul.f32 %v2581, %v2585
        %2587 = vrot.lane.b32.xlu0 %v2141, 64
        %v2588 = vpop.permute.xlu0 %2587
        %2589 = vrot.lane.b32.xlu0 %v2146, 64
        %v2590 = vpop.permute.xlu0 %2589
        %v2593 = vsel %vm2241, %v2586, 0
        %v2595 = vsel %vm1266, %v2590, 0
        %2597 = vmatprep.subr.mxu0 0.0
        %2598 = vmatpush1.msra.mxu0 %v2588
        %2599 = vmatprep.subr.mxu0 0.0
        %2600 = vmatpush1.msra.mxu0 %v2595
        %2601 = vmatprep.subr.mxu0 0.0
        %2602 = vmatpush1.msra.mxu0 0.0
        %2603 = vmatprep.subr.mxu0 0.0
        %2604 = vmatpush1.msra.mxu0 0.0
        %2605 = vmatprep.subr.mxu0 0.0
        %2606 = vmatpush1.msra.mxu0 0.0
        %2607 = vmatprep.subr.mxu0 0.0
        %2608 = vmatpush1.msra.mxu0 0.0
        %2609 = vmatprep.subr.mxu0 0.0
        %2610 = vmatpush1.msra.mxu0 0.0
        %2611 = vmatprep.subr.mxu0 0.0
        %2612 = vmatpush1.msra.mxu0 0.0
        %2613 = vmatprep.subr.mxu0 0.0
        %2614 = vmatpush1.msra.mxu0 0.0
        %2615 = vmatprep.subr.mxu0 0.0
        %2616 = vmatpush1.msra.mxu0 0.0
        %2617 = vmatprep.subr.mxu0 0.0
        %2618 = vmatpush1.msra.mxu0 0.0
        %2619 = vmatprep.subr.mxu0 0.0
        %2620 = vmatpush1.msra.mxu0 0.0
        %2621 = vmatprep.subr.mxu0 0.0
        %2622 = vmatpush1.msra.mxu0 0.0
        %2623 = vmatprep.subr.mxu0 0.0
        %2624 = vmatpush1.msra.mxu0 0.0
        %2625 = vmatprep.subr.mxu0 0.0
        %2626 = vmatpush1.msra.mxu0 0.0
        %2627 = vmatprep.subr.mxu0 0.0
        %2628 = vmatpush1.msra.mxu0 0.0
        %2629 = vmatprep.subr.mxu0 0.0
        %2630 = vmatpush1.msra.mxu0 0.0
        %2631 = vmatprep.subr.mxu0 0.0
        %2632 = vmatpush1.msra.mxu0 0.0
        %2633 = vmatprep.subr.mxu0 0.0
        %2634 = vmatpush1.msra.mxu0 0.0
        %2635 = vmatprep.subr.mxu0 0.0
        %2636 = vmatpush1.msra.mxu0 0.0
        %2637 = vmatprep.subr.mxu0 0.0
        %2638 = vmatpush1.msra.mxu0 0.0
        %2639 = vmatprep.subr.mxu0 0.0
        %2640 = vmatpush1.msra.mxu0 0.0
        %2641 = vmatprep.subr.mxu0 0.0
        %2642 = vmatpush1.msra.mxu0 0.0
        %2643 = vmatprep.subr.mxu0 0.0
        %2644 = vmatpush1.msra.mxu0 0.0
        %2645 = vmatprep.subr.mxu0 0.0
        %2646 = vmatpush1.msra.mxu0 0.0
        %2647 = vmatprep.subr.mxu0 0.0
        %2648 = vmatpush1.msra.mxu0 0.0
        %2649 = vmatprep.subr.mxu0 0.0
        %2650 = vmatpush1.msra.mxu0 0.0
        %2651 = vmatprep.subr.mxu0 0.0
        %2652 = vmatpush1.msra.mxu0 0.0
        %2653 = vmatprep.subr.mxu0 0.0
        %2654 = vmatpush1.msra.mxu0 0.0
        %2655 = vmatprep.subr.mxu0 0.0
        %2656 = vmatpush1.msra.mxu0 0.0
        %2657 = vmatprep.subr.mxu0 0.0
        %2658 = vmatpush1.msra.mxu0 0.0
        %2659 = vmatprep.subr.mxu0 0.0
        %2660 = vmatpush1.msra.mxu0 0.0
        %2661 = vmatprep.mubr.f32.mxu0 0.0
        %2662 = vmatmul.mubr.f32.gmra.mrb[0].mxu0 %v2593
        %v2663 = vpop.f32.mrb[0].mxu0
        %v2664 = vadd.f32 0.0, %v2663
        %v2665 = vpop.f32.mrb[0].mxu0
        %2666 = vdwg.mxu0
        %2667 = vrot.lane.b32.xlu0 %v1909, 32
        %v2668 = vpop.permute.xlu0 %2667
        %2669 = vrot.lane.b32.xlu0 %v2067, 32
        %v2670 = vpop.permute.xlu0 %2669
        %2671 = vrot.lane.b32.xlu0 %v2072, 32
        %v2672 = vpop.permute.xlu0 %2671
        %v2673 = vsel %vm874, %v2668, 0
        %v2675 = vsel %vm874, %v2670, 0
        %v2677 = vsel %vm874, %v2672, 0
        %2679 = vmatprep.subr.mxu0 0.0
        %2680 = vmatpush1.xpose.msra.mxu0 %v2675
        %2681 = vmatprep.subr.mxu0 0.0
        %2682 = vmatpush1.xpose.msra.mxu0 %v2677
        %2683 = vmatprep.subr.mxu0 0.0
        %2684 = vmatpush1.xpose.msra.mxu0 0.0
        %2685 = vmatprep.subr.mxu0 0.0
        %2686 = vmatpush1.xpose.msra.mxu0 0.0
        %2687 = vmatprep.subr.mxu0 0.0
        %2688 = vmatpush1.xpose.msra.mxu0 0.0
        %2689 = vmatprep.subr.mxu0 0.0
        %2690 = vmatpush1.xpose.msra.mxu0 0.0
        %2691 = vmatprep.subr.mxu0 0.0
        %2692 = vmatpush1.xpose.msra.mxu0 0.0
        %2693 = vmatprep.subr.mxu0 0.0
        %2694 = vmatpush1.xpose.msra.mxu0 0.0
        %2695 = vmatprep.subr.mxu0 0.0
        %2696 = vmatpush1.xpose.msra.mxu0 0.0
        %2697 = vmatprep.subr.mxu0 0.0
        %2698 = vmatpush1.xpose.msra.mxu0 0.0
        %2699 = vmatprep.subr.mxu0 0.0
        %2700 = vmatpush1.xpose.msra.mxu0 0.0
        %2701 = vmatprep.subr.mxu0 0.0
        %2702 = vmatpush1.xpose.msra.mxu0 0.0
        %2703 = vmatprep.subr.mxu0 0.0
        %2704 = vmatpush1.xpose.msra.mxu0 0.0
        %2705 = vmatprep.subr.mxu0 0.0
        %2706 = vmatpush1.xpose.msra.mxu0 0.0
        %2707 = vmatprep.subr.mxu0 0.0
        %2708 = vmatpush1.xpose.msra.mxu0 0.0
        %2709 = vmatprep.subr.mxu0 0.0
        %2710 = vmatpush1.xpose.msra.mxu0 0.0
        %2711 = vmatprep.subr.mxu0 0.0
        %2712 = vmatpush1.xpose.msra.mxu0 0.0
        %2713 = vmatprep.subr.mxu0 0.0
        %2714 = vmatpush1.xpose.msra.mxu0 0.0
        %2715 = vmatprep.subr.mxu0 0.0
        %2716 = vmatpush1.xpose.msra.mxu0 0.0
        %2717 = vmatprep.subr.mxu0 0.0
        %2718 = vmatpush1.xpose.msra.mxu0 0.0
        %2719 = vmatprep.subr.mxu0 0.0
        %2720 = vmatpush1.xpose.msra.mxu0 0.0
        %2721 = vmatprep.subr.mxu0 0.0
        %2722 = vmatpush1.xpose.msra.mxu0 0.0
        %2723 = vmatprep.subr.mxu0 0.0
        %2724 = vmatpush1.xpose.msra.mxu0 0.0
        %2725 = vmatprep.subr.mxu0 0.0
        %2726 = vmatpush1.xpose.msra.mxu0 0.0
        %2727 = vmatprep.subr.mxu0 0.0
        %2728 = vmatpush1.xpose.msra.mxu0 0.0
        %2729 = vmatprep.subr.mxu0 0.0
        %2730 = vmatpush1.xpose.msra.mxu0 0.0
        %2731 = vmatprep.subr.mxu0 0.0
        %2732 = vmatpush1.xpose.msra.mxu0 0.0
        %2733 = vmatprep.subr.mxu0 0.0
        %2734 = vmatpush1.xpose.msra.mxu0 0.0
        %2735 = vmatprep.subr.mxu0 0.0
        %2736 = vmatpush1.xpose.msra.mxu0 0.0
        %2737 = vmatprep.subr.mxu0 0.0
        %2738 = vmatpush1.xpose.msra.mxu0 0.0
        %2739 = vmatprep.subr.mxu0 0.0
        %2740 = vmatpush1.xpose.msra.mxu0 0.0
        %2741 = vmatprep.subr.mxu0 0.0
        %2742 = vmatpush1.xpose.msra.mxu0 0.0
        %2743 = vmatprep.mubr.f32.mxu0 0.0
        %2744 = vmatmul.mubr.f32.gmra.mrb[0].mxu0 %v2673
        %v2745 = vpop.f32.mrb[0].mxu0
        %v2746 = vadd.f32 0.0, %v2745
        %v2747 = vpop.f32.mrb[0].mxu0
        %2748 = vdwg.mxu0
        %v2749 = vmul.f32 %v2746, 0.17677669
        %v2750 = vsel %vm2229, %v2749, -inf
        %2751 = vmax.xlane.f32.xlu0 %v2750
        %v2752 = vpop.xlane.xlu0 %2751
        %v2753 = vsub.f32 %v2749, %v2752
        %v2754 = vmul.f32 %v2753, 1.442695
        %v2755 = vpow.pop %v2754
        %v2756 = vsel %vm2229, %v2755, 0.0
        %2757 = vadd.xlane.f32.xlu0 %v2756
        %v2758 = vpop.xlane.xlu0 %2757
        %v2759 = vrcp.pop %v2758
        %v2760 = vmul.f32 %v2755, %v2759
        %2761 = vrot.lane.b32.xlu0 %v2141, 32
        %v2762 = vpop.permute.xlu0 %2761
        %2763 = vrot.lane.b32.xlu0 %v2146, 32
        %v2764 = vpop.permute.xlu0 %2763
        %v2767 = vsel %vm2241, %v2760, 0
        %v2769 = vsel %vm1266, %v2764, 0
        %2771 = vmatprep.subr.mxu0 0.0
        %2772 = vmatpush1.msra.mxu0 %v2762
        %2773 = vmatprep.subr.mxu0 0.0
        %2774 = vmatpush1.msra.mxu0 %v2769
        %2775 = vmatprep.subr.mxu0 0.0
        %2776 = vmatpush1.msra.mxu0 0.0
        %2777 = vmatprep.subr.mxu0 0.0
        %2778 = vmatpush1.msra.mxu0 0.0
        %2779 = vmatprep.subr.mxu0 0.0
        %2780 = vmatpush1.msra.mxu0 0.0
        %2781 = vmatprep.subr.mxu0 0.0
        %2782 = vmatpush1.msra.mxu0 0.0
        %2783 = vmatprep.subr.mxu0 0.0
        %2784 = vmatpush1.msra.mxu0 0.0
        %2785 = vmatprep.subr.mxu0 0.0
        %2786 = vmatpush1.msra.mxu0 0.0
        %2787 = vmatprep.subr.mxu0 0.0
        %2788 = vmatpush1.msra.mxu0 0.0
        %2789 = vmatprep.subr.mxu0 0.0
        %2790 = vmatpush1.msra.mxu0 0.0
        %2791 = vmatprep.subr.mxu0 0.0
        %2792 = vmatpush1.msra.mxu0 0.0
        %2793 = vmatprep.subr.mxu0 0.0
        %2794 = vmatpush1.msra.mxu0 0.0
        %2795 = vmatprep.subr.mxu0 0.0
        %2796 = vmatpush1.msra.mxu0 0.0
        %2797 = vmatprep.subr.mxu0 0.0
        %2798 = vmatpush1.msra.mxu0 0.0
        %2799 = vmatprep.subr.mxu0 0.0
        %2800 = vmatpush1.msra.mxu0 0.0
        %2801 = vmatprep.subr.mxu0 0.0
        %2802 = vmatpush1.msra.mxu0 0.0
        %2803 = vmatprep.subr.mxu0 0.0
        %2804 = vmatpush1.msra.mxu0 0.0
        %2805 = vmatprep.subr.mxu0 0.0
        %2806 = vmatpush1.msra.mxu0 0.0
        %2807 = vmatprep.subr.mxu0 0.0
        %2808 = vmatpush1.msra.mxu0 0.0
        %2809 = vmatprep.subr.mxu0 0.0
        %2810 = vmatpush1.msra.mxu0 0.0
        %2811 = vmatprep.subr.mxu0 0.0
        %2812 = vmatpush1.msra.mxu0 0.0
        %2813 = vmatprep.subr.mxu0 0.0
        %2814 = vmatpush1.msra.mxu0 0.0
        %2815 = vmatprep.subr.mxu0 0.0
        %2816 = vmatpush1.msra.mxu0 0.0
        %2817 = vmatprep.subr.mxu0 0.0
        %2818 = vmatpush1.msra.mxu0 0.0
        %2819 = vmatprep.subr.mxu0 0.0
        %2820 = vmatpush1.msra.mxu0 0.0
        %2821 = vmatprep.subr.mxu0 0.0
        %2822 = vmatpush1.msra.mxu0 0.0
        %2823 = vmatprep.subr.mxu0 0.0
        %2824 = vmatpush1.msra.mxu0 0.0
        %2825 = vmatprep.subr.mxu0 0.0
        %2826 = vmatpush1.msra.mxu0 0.0
        %2827 = vmatprep.subr.mxu0 0.0
        %2828 = vmatpush1.msra.mxu0 0.0
        %2829 = vmatprep.subr.mxu0 0.0
        %2830 = vmatpush1.msra.mxu0 0.0
        %2831 = vmatprep.subr.mxu0 0.0
        %2832 = vmatpush1.msra.mxu0 0.0
        %2833 = vmatprep.subr.mxu0 0.0
        %2834 = vmatpush1.msra.mxu0 0.0
        %2835 = vmatprep.mubr.f32.mxu0 0.0
        %2836 = vmatmul.mubr.f32.gmra.mrb[0].mxu0 %v2767
        %v2837 = vpop.f32.mrb[0].mxu0
        %v2838 = vadd.f32 0.0, %v2837
        %v2839 = vpop.f32.mrb[0].mxu0
        %2840 = vdwg.mxu0
        %2842 = vrot.lane.b32.xlu0 %v2490, 32
        %v2843 = vpop.permute.xlu0 %2842
        %2846 = vrot.lane.b32.xlu0 %v2664, 64
        %v2847 = vpop.permute.xlu0 %2846
        %2850 = vrot.lane.b32.xlu0 %v2838, 96
        %v2851 = vpop.permute.xlu0 %2850
        %v2853 = vsel %vm874, %v2315, %v2843
        %vm2854 = vcmask 523264
        %v2855 = vsel %vm2854, %v2853, %v2847
        %vm2856 = vcmask 785408
        %v2857 = vsel %vm2856, %v2855, %v2851
        %v2859 = vsel %vm874, %v2065, 0
        %v2862 = vsel %vm874, %v1911, 0
        %v2865 = vsel %vm874, %v1916, 0
        %2867 = vmatprep.subr.mxu0 0.0
        %2868 = vmatpush1.xpose.msra.mxu0 %v2862
        %2869 = vmatprep.subr.mxu0 0.0
        %2870 = vmatpush1.xpose.msra.mxu0 %v2865
        %2871 = vmatprep.subr.mxu0 0.0
        %2872 = vmatpush1.xpose.msra.mxu0 0.0
        %2873 = vmatprep.subr.mxu0 0.0
        %2874 = vmatpush1.xpose.msra.mxu0 0.0
        %2875 = vmatprep.subr.mxu0 0.0
        %2876 = vmatpush1.xpose.msra.mxu0 0.0
        %2877 = vmatprep.subr.mxu0 0.0
        %2878 = vmatpush1.xpose.msra.mxu0 0.0
        %2879 = vmatprep.subr.mxu0 0.0
        %2880 = vmatpush1.xpose.msra.mxu0 0.0
        %2881 = vmatprep.subr.mxu0 0.0
        %2882 = vmatpush1.xpose.msra.mxu0 0.0
        %2883 = vmatprep.subr.mxu0 0.0
        %2884 = vmatpush1.xpose.msra.mxu0 0.0
        %2885 = vmatprep.subr.mxu0 0.0
        %2886 = vmatpush1.xpose.msra.mxu0 0.0
        %2887 = vmatprep.subr.mxu0 0.0
        %2888 = vmatpush1.xpose.msra.mxu0 0.0
        %2889 = vmatprep.subr.mxu0 0.0
        %2890 = vmatpush1.xpose.msra.mxu0 0.0
        %2891 = vmatprep.subr.mxu0 0.0
        %2892 = vmatpush1.xpose.msra.mxu0 0.0
        %2893 = vmatprep.subr.mxu0 0.0
        %2894 = vmatpush1.xpose.msra.mxu0 0.0
        %2895 = vmatprep.subr.mxu0 0.0
        %2896 = vmatpush1.xpose.msra.mxu0 0.0
        %2897 = vmatprep.subr.mxu0 0.0
        %2898 = vmatpush1.xpose.msra.mxu0 0.0
        %2899 = vmatprep.subr.mxu0 0.0
        %2900 = vmatpush1.xpose.msra.mxu0 0.0
        %2901 = vmatprep.subr.mxu0 0.0
        %2902 = vmatpush1.xpose.msra.mxu0 0.0
        %2903 = vmatprep.subr.mxu0 0.0
        %2904 = vmatpush1.xpose.msra.mxu0 0.0
        %2905 = vmatprep.subr.mxu0 0.0
        %2906 = vmatpush1.xpose.msra.mxu0 0.0
        %2907 = vmatprep.subr.mxu0 0.0
        %2908 = vmatpush1.xpose.msra.mxu0 0.0
        %2909 = vmatprep.subr.mxu0 0.0
        %2910 = vmatpush1.xpose.msra.mxu0 0.0
        %2911 = vmatprep.subr.mxu0 0.0
        %2912 = vmatpush1.xpose.msra.mxu0 0.0
        %2913 = vmatprep.subr.mxu0 0.0
        %2914 = vmatpush1.xpose.msra.mxu0 0.0
        %2915 = vmatprep.subr.mxu0 0.0
        %2916 = vmatpush1.xpose.msra.mxu0 0.0
        %2917 = vmatprep.subr.mxu0 0.0
        %2918 = vmatpush1.xpose.msra.mxu0 0.0
        %2919 = vmatprep.subr.mxu0 0.0
        %2920 = vmatpush1.xpose.msra.mxu0 0.0
        %2921 = vmatprep.subr.mxu0 0.0
        %2922 = vmatpush1.xpose.msra.mxu0 0.0
        %2923 = vmatprep.subr.mxu0 0.0
        %2924 = vmatpush1.xpose.msra.mxu0 0.0
        %2925 = vmatprep.subr.mxu0 0.0
        %2926 = vmatpush1.xpose.msra.mxu0 0.0
        %2927 = vmatprep.subr.mxu0 0.0
        %2928 = vmatpush1.xpose.msra.mxu0 0.0
        %2929 = vmatprep.subr.mxu0 0.0
        %2930 = vmatpush1.xpose.msra.mxu0 0.0
        %2931 = vmatprep.mubr.f32.mxu0 0.0
        %2932 = vmatmul.mubr.f32.gmra.mrb[0].mxu0 %v2859
        %v2933 = vpop.f32.mrb[0].mxu0
        %v2934 = vadd.f32 0.0, %v2933
        %v2935 = vpop.f32.mrb[0].mxu0
        %2936 = vdwg.mxu0
        %v2937 = vmul.f32 %v2934, 0.17677669
        %v2938 = vsel %vm2229, %v2937, -inf
        %2939 = vmax.xlane.f32.xlu0 %v2938
        %v2940 = vpop.xlane.xlu0 %2939
        %v2941 = vsub.f32 %v2937, %v2940
        %v2942 = vmul.f32 %v2941, 1.442695
        %v2943 = vpow.pop %v2942
        %v2944 = vsel %vm2229, %v2943, 0.0
        %2945 = vadd.xlane.f32.xlu0 %v2944
        %v2946 = vpop.xlane.xlu0 %2945
        %v2947 = vrcp.pop %v2946
        %v2948 = vmul.f32 %v2943, %v2947
        %v2950 = vsel %vm2241, %v2948, 0
        %v2953 = vsel %vm1266, %v1990, 0
        %2955 = vmatprep.subr.mxu0 0.0
        %2956 = vmatpush1.msra.mxu0 %v1985
        %2957 = vmatprep.subr.mxu0 0.0
        %2958 = vmatpush1.msra.mxu0 %v2953
        %2959 = vmatprep.subr.mxu0 0.0
        %2960 = vmatpush1.msra.mxu0 0.0
        %2961 = vmatprep.subr.mxu0 0.0
        %2962 = vmatpush1.msra.mxu0 0.0
        %2963 = vmatprep.subr.mxu0 0.0
        %2964 = vmatpush1.msra.mxu0 0.0
        %2965 = vmatprep.subr.mxu0 0.0
        %2966 = vmatpush1.msra.mxu0 0.0
        %2967 = vmatprep.subr.mxu0 0.0
        %2968 = vmatpush1.msra.mxu0 0.0
        %2969 = vmatprep.subr.mxu0 0.0
        %2970 = vmatpush1.msra.mxu0 0.0
        %2971 = vmatprep.subr.mxu0 0.0
        %2972 = vmatpush1.msra.mxu0 0.0
        %2973 = vmatprep.subr.mxu0 0.0
        %2974 = vmatpush1.msra.mxu0 0.0
        %2975 = vmatprep.subr.mxu0 0.0
        %2976 = vmatpush1.msra.mxu0 0.0
        %2977 = vmatprep.subr.mxu0 0.0
        %2978 = vmatpush1.msra.mxu0 0.0
        %2979 = vmatprep.subr.mxu0 0.0
        %2980 = vmatpush1.msra.mxu0 0.0
        %2981 = vmatprep.subr.mxu0 0.0
        %2982 = vmatpush1.msra.mxu0 0.0
        %2983 = vmatprep.subr.mxu0 0.0
        %2984 = vmatpush1.msra.mxu0 0.0
        %2985 = vmatprep.subr.mxu0 0.0
        %2986 = vmatpush1.msra.mxu0 0.0
        %2987 = vmatprep.subr.mxu0 0.0
        %2988 = vmatpush1.msra.mxu0 0.0
        %2989 = vmatprep.subr.mxu0 0.0
        %2990 = vmatpush1.msra.mxu0 0.0
        %2991 = vmatprep.subr.mxu0 0.0
        %2992 = vmatpush1.msra.mxu0 0.0
        %2993 = vmatprep.subr.mxu0 0.0
        %2994 = vmatpush1.msra.mxu0 0.0
        %2995 = vmatprep.subr.mxu0 0.0
        %2996 = vmatpush1.msra.mxu0 0.0
        %2997 = vmatprep.subr.mxu0 0.0
        %2998 = vmatpush1.msra.mxu0 0.0
        %2999 = vmatprep.subr.mxu0 0.0
        %3000 = vmatpush1.msra.mxu0 0.0
        %3001 = vmatprep.subr.mxu0 0.0
        %3002 = vmatpush1.msra.mxu0 0.0
        %3003 = vmatprep.subr.mxu0 0.0
        %3004 = vmatpush1.msra.mxu0 0.0
        %3005 = vmatprep.subr.mxu0 0.0
        %3006 = vmatpush1.msra.mxu0 0.0
        %3007 = vmatprep.subr.mxu0 0.0
        %3008 = vmatpush1.msra.mxu0 0.0
        %3009 = vmatprep.subr.mxu0 0.0
        %3010 = vmatpush1.msra.mxu0 0.0
        %3011 = vmatprep.subr.mxu0 0.0
        %3012 = vmatpush1.msra.mxu0 0.0
        %3013 = vmatprep.subr.mxu0 0.0
        %3014 = vmatpush1.msra.mxu0 0.0
        %3015 = vmatprep.subr.mxu0 0.0
        %3016 = vmatpush1.msra.mxu0 0.0
        %3017 = vmatprep.subr.mxu0 0.0
        %3018 = vmatpush1.msra.mxu0 0.0
        %3019 = vmatprep.mubr.f32.mxu0 0.0
        %3020 = vmatmul.mubr.f32.gmra.mrb[0].mxu0 %v2950
        %v3021 = vpop.f32.mrb[0].mxu0
        %v3022 = vadd.f32 0.0, %v3021
        %v3023 = vpop.f32.mrb[0].mxu0
        %3024 = vdwg.mxu0
        %3025 = vrot.lane.b32.xlu0 %v2065, 96
        %v3026 = vpop.permute.xlu0 %3025
        %3027 = vrot.lane.b32.xlu0 %v1911, 96
        %v3028 = vpop.permute.xlu0 %3027
        %3029 = vrot.lane.b32.xlu0 %v1916, 96
        %v3030 = vpop.permute.xlu0 %3029
        %v3031 = vsel %vm874, %v3026, 0
        %v3033 = vsel %vm874, %v3028, 0
        %v3035 = vsel %vm874, %v3030, 0
        %3037 = vmatprep.subr.mxu0 0.0
        %3038 = vmatpush1.xpose.msra.mxu0 %v3033
        %3039 = vmatprep.subr.mxu0 0.0
        %3040 = vmatpush1.xpose.msra.mxu0 %v3035
        %3041 = vmatprep.subr.mxu0 0.0
        %3042 = vmatpush1.xpose.msra.mxu0 0.0
        %3043 = vmatprep.subr.mxu0 0.0
        %3044 = vmatpush1.xpose.msra.mxu0 0.0
        %3045 = vmatprep.subr.mxu0 0.0
        %3046 = vmatpush1.xpose.msra.mxu0 0.0
        %3047 = vmatprep.subr.mxu0 0.0
        %3048 = vmatpush1.xpose.msra.mxu0 0.0
        %3049 = vmatprep.subr.mxu0 0.0
        %3050 = vmatpush1.xpose.msra.mxu0 0.0
        %3051 = vmatprep.subr.mxu0 0.0
        %3052 = vmatpush1.xpose.msra.mxu0 0.0
        %3053 = vmatprep.subr.mxu0 0.0
        %3054 = vmatpush1.xpose.msra.mxu0 0.0
        %3055 = vmatprep.subr.mxu0 0.0
        %3056 = vmatpush1.xpose.msra.mxu0 0.0
        %3057 = vmatprep.subr.mxu0 0.0
        %3058 = vmatpush1.xpose.msra.mxu0 0.0
        %3059 = vmatprep.subr.mxu0 0.0
        %3060 = vmatpush1.xpose.msra.mxu0 0.0
        %3061 = vmatprep.subr.mxu0 0.0
        %3062 = vmatpush1.xpose.msra.mxu0 0.0
        %3063 = vmatprep.subr.mxu0 0.0
        %3064 = vmatpush1.xpose.msra.mxu0 0.0
        %3065 = vmatprep.subr.mxu0 0.0
        %3066 = vmatpush1.xpose.msra.mxu0 0.0
        %3067 = vmatprep.subr.mxu0 0.0
        %3068 = vmatpush1.xpose.msra.mxu0 0.0
        %3069 = vmatprep.subr.mxu0 0.0
        %3070 = vmatpush1.xpose.msra.mxu0 0.0
        %3071 = vmatprep.subr.mxu0 0.0
        %3072 = vmatpush1.xpose.msra.mxu0 0.0
        %3073 = vmatprep.subr.mxu0 0.0
        %3074 = vmatpush1.xpose.msra.mxu0 0.0
        %3075 = vmatprep.subr.mxu0 0.0
        %3076 = vmatpush1.xpose.msra.mxu0 0.0
        %3077 = vmatprep.subr.mxu0 0.0
        %3078 = vmatpush1.xpose.msra.mxu0 0.0
        %3079 = vmatprep.subr.mxu0 0.0
        %3080 = vmatpush1.xpose.msra.mxu0 0.0
        %3081 = vmatprep.subr.mxu0 0.0
        %3082 = vmatpush1.xpose.msra.mxu0 0.0
        %3083 = vmatprep.subr.mxu0 0.0
        %3084 = vmatpush1.xpose.msra.mxu0 0.0
        %3085 = vmatprep.subr.mxu0 0.0
        %3086 = vmatpush1.xpose.msra.mxu0 0.0
        %3087 = vmatprep.subr.mxu0 0.0
        %3088 = vmatpush1.xpose.msra.mxu0 0.0
        %3089 = vmatprep.subr.mxu0 0.0
        %3090 = vmatpush1.xpose.msra.mxu0 0.0
        %3091 = vmatprep.subr.mxu0 0.0
        %3092 = vmatpush1.xpose.msra.mxu0 0.0
        %3093 = vmatprep.subr.mxu0 0.0
        %3094 = vmatpush1.xpose.msra.mxu0 0.0
        %3095 = vmatprep.subr.mxu0 0.0
        %3096 = vmatpush1.xpose.msra.mxu0 0.0
        %3097 = vmatprep.subr.mxu0 0.0
        %3098 = vmatpush1.xpose.msra.mxu0 0.0
        %3099 = vmatprep.subr.mxu0 0.0
        %3100 = vmatpush1.xpose.msra.mxu0 0.0
        %3101 = vmatprep.mubr.f32.mxu0 0.0
        %3102 = vmatmul.mubr.f32.gmra.mrb[0].mxu0 %v3031
        %v3103 = vpop.f32.mrb[0].mxu0
        %v3104 = vadd.f32 0.0, %v3103
        %v3105 = vpop.f32.mrb[0].mxu0
        %3106 = vdwg.mxu0
        %v3107 = vmul.f32 %v3104, 0.17677669
        %v3108 = vsel %vm2229, %v3107, -inf
        %3109 = vmax.xlane.f32.xlu0 %v3108
        %v3110 = vpop.xlane.xlu0 %3109
        %v3111 = vsub.f32 %v3107, %v3110
        %v3112 = vmul.f32 %v3111, 1.442695
        %v3113 = vpow.pop %v3112
        %v3114 = vsel %vm2229, %v3113, 0.0
        %3115 = vadd.xlane.f32.xlu0 %v3114
        %v3116 = vpop.xlane.xlu0 %3115
        %v3117 = vrcp.pop %v3116
        %v3118 = vmul.f32 %v3113, %v3117
        %3120 = vrot.lane.b32.xlu0 %v1985, 96
        %v3121 = vpop.permute.xlu0 %3120
        %3122 = vrot.lane.b32.xlu0 %v1990, 96
        %v3123 = vpop.permute.xlu0 %3122
        %v3126 = vsel %vm2241, %v3118, 0
        %v3128 = vsel %vm1266, %v3123, 0
        %3130 = vmatprep.subr.mxu0 0.0
        %3131 = vmatpush1.msra.mxu0 %v3121
        %3132 = vmatprep.subr.mxu0 0.0
        %3133 = vmatpush1.msra.mxu0 %v3128
        %3134 = vmatprep.subr.mxu0 0.0
        %3135 = vmatpush1.msra.mxu0 0.0
        %3136 = vmatprep.subr.mxu0 0.0
        %3137 = vmatpush1.msra.mxu0 0.0
        %3138 = vmatprep.subr.mxu0 0.0
        %3139 = vmatpush1.msra.mxu0 0.0
        %3140 = vmatprep.subr.mxu0 0.0
        %3141 = vmatpush1.msra.mxu0 0.0
        %3142 = vmatprep.subr.mxu0 0.0
        %3143 = vmatpush1.msra.mxu0 0.0
        %3144 = vmatprep.subr.mxu0 0.0
        %3145 = vmatpush1.msra.mxu0 0.0
        %3146 = vmatprep.subr.mxu0 0.0
        %3147 = vmatpush1.msra.mxu0 0.0
        %3148 = vmatprep.subr.mxu0 0.0
        %3149 = vmatpush1.msra.mxu0 0.0
        %3150 = vmatprep.subr.mxu0 0.0
        %3151 = vmatpush1.msra.mxu0 0.0
        %3152 = vmatprep.subr.mxu0 0.0
        %3153 = vmatpush1.msra.mxu0 0.0
        %3154 = vmatprep.subr.mxu0 0.0
        %3155 = vmatpush1.msra.mxu0 0.0
        %3156 = vmatprep.subr.mxu0 0.0
        %3157 = vmatpush1.msra.mxu0 0.0
        %3158 = vmatprep.subr.mxu0 0.0
        %3159 = vmatpush1.msra.mxu0 0.0
        %3160 = vmatprep.subr.mxu0 0.0
        %3161 = vmatpush1.msra.mxu0 0.0
        %3162 = vmatprep.subr.mxu0 0.0
        %3163 = vmatpush1.msra.mxu0 0.0
        %3164 = vmatprep.subr.mxu0 0.0
        %3165 = vmatpush1.msra.mxu0 0.0
        %3166 = vmatprep.subr.mxu0 0.0
        %3167 = vmatpush1.msra.mxu0 0.0
        %3168 = vmatprep.subr.mxu0 0.0
        %3169 = vmatpush1.msra.mxu0 0.0
        %3170 = vmatprep.subr.mxu0 0.0
        %3171 = vmatpush1.msra.mxu0 0.0
        %3172 = vmatprep.subr.mxu0 0.0
        %3173 = vmatpush1.msra.mxu0 0.0
        %3174 = vmatprep.subr.mxu0 0.0
        %3175 = vmatpush1.msra.mxu0 0.0
        %3176 = vmatprep.subr.mxu0 0.0
        %3177 = vmatpush1.msra.mxu0 0.0
        %3178 = vmatprep.subr.mxu0 0.0
        %3179 = vmatpush1.msra.mxu0 0.0
        %3180 = vmatprep.subr.mxu0 0.0
        %3181 = vmatpush1.msra.mxu0 0.0
        %3182 = vmatprep.subr.mxu0 0.0
        %3183 = vmatpush1.msra.mxu0 0.0
        %3184 = vmatprep.subr.mxu0 0.0
        %3185 = vmatpush1.msra.mxu0 0.0
        %3186 = vmatprep.subr.mxu0 0.0
        %3187 = vmatpush1.msra.mxu0 0.0
        %3188 = vmatprep.subr.mxu0 0.0
        %3189 = vmatpush1.msra.mxu0 0.0
        %3190 = vmatprep.subr.mxu0 0.0
        %3191 = vmatpush1.msra.mxu0 0.0
        %3192 = vmatprep.subr.mxu0 0.0
        %3193 = vmatpush1.msra.mxu0 0.0
        %3194 = vmatprep.mubr.f32.mxu0 0.0
        %3195 = vmatmul.mubr.f32.gmra.mrb[0].mxu0 %v3126
        %v3196 = vpop.f32.mrb[0].mxu0
        %v3197 = vadd.f32 0.0, %v3196
        %v3198 = vpop.f32.mrb[0].mxu0
        %3199 = vdwg.mxu0
        %3200 = vrot.lane.b32.xlu0 %v2065, 64
        %v3201 = vpop.permute.xlu0 %3200
        %3202 = vrot.lane.b32.xlu0 %v1911, 64
        %v3203 = vpop.permute.xlu0 %3202
        %3204 = vrot.lane.b32.xlu0 %v1916, 64
        %v3205 = vpop.permute.xlu0 %3204
        %v3206 = vsel %vm874, %v3201, 0
        %v3208 = vsel %vm874, %v3203, 0
        %v3210 = vsel %vm874, %v3205, 0
        %3212 = vmatprep.subr.mxu0 0.0
        %3213 = vmatpush1.xpose.msra.mxu0 %v3208
        %3214 = vmatprep.subr.mxu0 0.0
        %3215 = vmatpush1.xpose.msra.mxu0 %v3210
        %3216 = vmatprep.subr.mxu0 0.0
        %3217 = vmatpush1.xpose.msra.mxu0 0.0
        %3218 = vmatprep.subr.mxu0 0.0
        %3219 = vmatpush1.xpose.msra.mxu0 0.0
        %3220 = vmatprep.subr.mxu0 0.0
        %3221 = vmatpush1.xpose.msra.mxu0 0.0
        %3222 = vmatprep.subr.mxu0 0.0
        %3223 = vmatpush1.xpose.msra.mxu0 0.0
        %3224 = vmatprep.subr.mxu0 0.0
        %3225 = vmatpush1.xpose.msra.mxu0 0.0
        %3226 = vmatprep.subr.mxu0 0.0
        %3227 = vmatpush1.xpose.msra.mxu0 0.0
        %3228 = vmatprep.subr.mxu0 0.0
        %3229 = vmatpush1.xpose.msra.mxu0 0.0
        %3230 = vmatprep.subr.mxu0 0.0
        %3231 = vmatpush1.xpose.msra.mxu0 0.0
        %3232 = vmatprep.subr.mxu0 0.0
        %3233 = vmatpush1.xpose.msra.mxu0 0.0
        %3234 = vmatprep.subr.mxu0 0.0
        %3235 = vmatpush1.xpose.msra.mxu0 0.0
        %3236 = vmatprep.subr.mxu0 0.0
        %3237 = vmatpush1.xpose.msra.mxu0 0.0
        %3238 = vmatprep.subr.mxu0 0.0
        %3239 = vmatpush1.xpose.msra.mxu0 0.0
        %3240 = vmatprep.subr.mxu0 0.0
        %3241 = vmatpush1.xpose.msra.mxu0 0.0
        %3242 = vmatprep.subr.mxu0 0.0
        %3243 = vmatpush1.xpose.msra.mxu0 0.0
        %3244 = vmatprep.subr.mxu0 0.0
        %3245 = vmatpush1.xpose.msra.mxu0 0.0
        %3246 = vmatprep.subr.mxu0 0.0
        %3247 = vmatpush1.xpose.msra.mxu0 0.0
        %3248 = vmatprep.subr.mxu0 0.0
        %3249 = vmatpush1.xpose.msra.mxu0 0.0
        %3250 = vmatprep.subr.mxu0 0.0
        %3251 = vmatpush1.xpose.msra.mxu0 0.0
        %3252 = vmatprep.subr.mxu0 0.0
        %3253 = vmatpush1.xpose.msra.mxu0 0.0
        %3254 = vmatprep.subr.mxu0 0.0
        %3255 = vmatpush1.xpose.msra.mxu0 0.0
        %3256 = vmatprep.subr.mxu0 0.0
        %3257 = vmatpush1.xpose.msra.mxu0 0.0
        %3258 = vmatprep.subr.mxu0 0.0
        %3259 = vmatpush1.xpose.msra.mxu0 0.0
        %3260 = vmatprep.subr.mxu0 0.0
        %3261 = vmatpush1.xpose.msra.mxu0 0.0
        %3262 = vmatprep.subr.mxu0 0.0
        %3263 = vmatpush1.xpose.msra.mxu0 0.0
        %3264 = vmatprep.subr.mxu0 0.0
        %3265 = vmatpush1.xpose.msra.mxu0 0.0
        %3266 = vmatprep.subr.mxu0 0.0
        %3267 = vmatpush1.xpose.msra.mxu0 0.0
        %3268 = vmatprep.subr.mxu0 0.0
        %3269 = vmatpush1.xpose.msra.mxu0 0.0
        %3270 = vmatprep.subr.mxu0 0.0
        %3271 = vmatpush1.xpose.msra.mxu0 0.0
        %3272 = vmatprep.subr.mxu0 0.0
        %3273 = vmatpush1.xpose.msra.mxu0 0.0
        %3274 = vmatprep.subr.mxu0 0.0
        %3275 = vmatpush1.xpose.msra.mxu0 0.0
        %3276 = vmatprep.mubr.f32.mxu0 0.0
        %3277 = vmatmul.mubr.f32.gmra.mrb[0].mxu0 %v3206
        %v3278 = vpop.f32.mrb[0].mxu0
        %v3279 = vadd.f32 0.0, %v3278
        %v3280 = vpop.f32.mrb[0].mxu0
        %3281 = vdwg.mxu0
        %v3282 = vmul.f32 %v3279, 0.17677669
        %v3283 = vsel %vm2229, %v3282, -inf
        %3284 = vmax.xlane.f32.xlu0 %v3283
        %v3285 = vpop.xlane.xlu0 %3284
        %v3286 = vsub.f32 %v3282, %v3285
        %v3287 = vmul.f32 %v3286, 1.442695
        %v3288 = vpow.pop %v3287
        %v3289 = vsel %vm2229, %v3288, 0.0
        %3290 = vadd.xlane.f32.xlu0 %v3289
        %v3291 = vpop.xlane.xlu0 %3290
        %v3292 = vrcp.pop %v3291
        %v3293 = vmul.f32 %v3288, %v3292
        %3294 = vrot.lane.b32.xlu0 %v1985, 64
        %v3295 = vpop.permute.xlu0 %3294
        %3296 = vrot.lane.b32.xlu0 %v1990, 64
        %v3297 = vpop.permute.xlu0 %3296
        %v3300 = vsel %vm2241, %v3293, 0
        %v3302 = vsel %vm1266, %v3297, 0
        %3304 = vmatprep.subr.mxu0 0.0
        %3305 = vmatpush1.msra.mxu0 %v3295
        %3306 = vmatprep.subr.mxu0 0.0
        %3307 = vmatpush1.msra.mxu0 %v3302
        %3308 = vmatprep.subr.mxu0 0.0
        %3309 = vmatpush1.msra.mxu0 0.0
        %3310 = vmatprep.subr.mxu0 0.0
        %3311 = vmatpush1.msra.mxu0 0.0
        %3312 = vmatprep.subr.mxu0 0.0
        %3313 = vmatpush1.msra.mxu0 0.0
        %3314 = vmatprep.subr.mxu0 0.0
        %3315 = vmatpush1.msra.mxu0 0.0
        %3316 = vmatprep.subr.mxu0 0.0
        %3317 = vmatpush1.msra.mxu0 0.0
        %3318 = vmatprep.subr.mxu0 0.0
        %3319 = vmatpush1.msra.mxu0 0.0
        %3320 = vmatprep.subr.mxu0 0.0
        %3321 = vmatpush1.msra.mxu0 0.0
        %3322 = vmatprep.subr.mxu0 0.0
        %3323 = vmatpush1.msra.mxu0 0.0
        %3324 = vmatprep.subr.mxu0 0.0
        %3325 = vmatpush1.msra.mxu0 0.0
        %3326 = vmatprep.subr.mxu0 0.0
        %3327 = vmatpush1.msra.mxu0 0.0
        %3328 = vmatprep.subr.mxu0 0.0
        %3329 = vmatpush1.msra.mxu0 0.0
        %3330 = vmatprep.subr.mxu0 0.0
        %3331 = vmatpush1.msra.mxu0 0.0
        %3332 = vmatprep.subr.mxu0 0.0
        %3333 = vmatpush1.msra.mxu0 0.0
        %3334 = vmatprep.subr.mxu0 0.0
        %3335 = vmatpush1.msra.mxu0 0.0
        %3336 = vmatprep.subr.mxu0 0.0
        %3337 = vmatpush1.msra.mxu0 0.0
        %3338 = vmatprep.subr.mxu0 0.0
        %3339 = vmatpush1.msra.mxu0 0.0
        %3340 = vmatprep.subr.mxu0 0.0
        %3341 = vmatpush1.msra.mxu0 0.0
        %3342 = vmatprep.subr.mxu0 0.0
        %3343 = vmatpush1.msra.mxu0 0.0
        %3344 = vmatprep.subr.mxu0 0.0
        %3345 = vmatpush1.msra.mxu0 0.0
        %3346 = vmatprep.subr.mxu0 0.0
        %3347 = vmatpush1.msra.mxu0 0.0
        %3348 = vmatprep.subr.mxu0 0.0
        %3349 = vmatpush1.msra.mxu0 0.0
        %3350 = vmatprep.subr.mxu0 0.0
        %3351 = vmatpush1.msra.mxu0 0.0
        %3352 = vmatprep.subr.mxu0 0.0
        %3353 = vmatpush1.msra.mxu0 0.0
        %3354 = vmatprep.subr.mxu0 0.0
        %3355 = vmatpush1.msra.mxu0 0.0
        %3356 = vmatprep.subr.mxu0 0.0
        %3357 = vmatpush1.msra.mxu0 0.0
        %3358 = vmatprep.subr.mxu0 0.0
        %3359 = vmatpush1.msra.mxu0 0.0
        %3360 = vmatprep.subr.mxu0 0.0
        %3361 = vmatpush1.msra.mxu0 0.0
        %3362 = vmatprep.subr.mxu0 0.0
        %3363 = vmatpush1.msra.mxu0 0.0
        %3364 = vmatprep.subr.mxu0 0.0
        %3365 = vmatpush1.msra.mxu0 0.0
        %3366 = vmatprep.subr.mxu0 0.0
        %3367 = vmatpush1.msra.mxu0 0.0
        %3368 = vmatprep.mubr.f32.mxu0 0.0
        %3369 = vmatmul.mubr.f32.gmra.mrb[0].mxu0 %v3300
        %v3370 = vpop.f32.mrb[0].mxu0
        %v3371 = vadd.f32 0.0, %v3370
        %v3372 = vpop.f32.mrb[0].mxu0
        %3373 = vdwg.mxu0
        %3374 = vrot.lane.b32.xlu0 %v2065, 32
        %v3375 = vpop.permute.xlu0 %3374
        %3376 = vrot.lane.b32.xlu0 %v1911, 32
        %v3377 = vpop.permute.xlu0 %3376
        %3378 = vrot.lane.b32.xlu0 %v1916, 32
        %v3379 = vpop.permute.xlu0 %3378
        %v3380 = vsel %vm874, %v3375, 0
        %v3382 = vsel %vm874, %v3377, 0
        %v3384 = vsel %vm874, %v3379, 0
        %3386 = vmatprep.subr.mxu0 0.0
        %3387 = vmatpush1.xpose.msra.mxu0 %v3382
        %3388 = vmatprep.subr.mxu0 0.0
        %3389 = vmatpush1.xpose.msra.mxu0 %v3384
        %3390 = vmatprep.subr.mxu0 0.0
        %3391 = vmatpush1.xpose.msra.mxu0 0.0
        %3392 = vmatprep.subr.mxu0 0.0
        %3393 = vmatpush1.xpose.msra.mxu0 0.0
        %3394 = vmatprep.subr.mxu0 0.0
        %3395 = vmatpush1.xpose.msra.mxu0 0.0
        %3396 = vmatprep.subr.mxu0 0.0
        %3397 = vmatpush1.xpose.msra.mxu0 0.0
        %3398 = vmatprep.subr.mxu0 0.0
        %3399 = vmatpush1.xpose.msra.mxu0 0.0
        %3400 = vmatprep.subr.mxu0 0.0
        %3401 = vmatpush1.xpose.msra.mxu0 0.0
        %3402 = vmatprep.subr.mxu0 0.0
        %3403 = vmatpush1.xpose.msra.mxu0 0.0
        %3404 = vmatprep.subr.mxu0 0.0
        %3405 = vmatpush1.xpose.msra.mxu0 0.0
        %3406 = vmatprep.subr.mxu0 0.0
        %3407 = vmatpush1.xpose.msra.mxu0 0.0
        %3408 = vmatprep.subr.mxu0 0.0
        %3409 = vmatpush1.xpose.msra.mxu0 0.0
        %3410 = vmatprep.subr.mxu0 0.0
        %3411 = vmatpush1.xpose.msra.mxu0 0.0
        %3412 = vmatprep.subr.mxu0 0.0
        %3413 = vmatpush1.xpose.msra.mxu0 0.0
        %3414 = vmatprep.subr.mxu0 0.0
        %3415 = vmatpush1.xpose.msra.mxu0 0.0
        %3416 = vmatprep.subr.mxu0 0.0
        %3417 = vmatpush1.xpose.msra.mxu0 0.0
        %3418 = vmatprep.subr.mxu0 0.0
        %3419 = vmatpush1.xpose.msra.mxu0 0.0
        %3420 = vmatprep.subr.mxu0 0.0
        %3421 = vmatpush1.xpose.msra.mxu0 0.0
        %3422 = vmatprep.subr.mxu0 0.0
        %3423 = vmatpush1.xpose.msra.mxu0 0.0
        %3424 = vmatprep.subr.mxu0 0.0
        %3425 = vmatpush1.xpose.msra.mxu0 0.0
        %3426 = vmatprep.subr.mxu0 0.0
        %3427 = vmatpush1.xpose.msra.mxu0 0.0
        %3428 = vmatprep.subr.mxu0 0.0
        %3429 = vmatpush1.xpose.msra.mxu0 0.0
        %3430 = vmatprep.subr.mxu0 0.0
        %3431 = vmatpush1.xpose.msra.mxu0 0.0
        %3432 = vmatprep.subr.mxu0 0.0
        %3433 = vmatpush1.xpose.msra.mxu0 0.0
        %3434 = vmatprep.subr.mxu0 0.0
        %3435 = vmatpush1.xpose.msra.mxu0 0.0
        %3436 = vmatprep.subr.mxu0 0.0
        %3437 = vmatpush1.xpose.msra.mxu0 0.0
        %3438 = vmatprep.subr.mxu0 0.0
        %3439 = vmatpush1.xpose.msra.mxu0 0.0
        %3440 = vmatprep.subr.mxu0 0.0
        %3441 = vmatpush1.xpose.msra.mxu0 0.0
        %3442 = vmatprep.subr.mxu0 0.0
        %3443 = vmatpush1.xpose.msra.mxu0 0.0
        %3444 = vmatprep.subr.mxu0 0.0
        %3445 = vmatpush1.xpose.msra.mxu0 0.0
        %3446 = vmatprep.subr.mxu0 0.0
        %3447 = vmatpush1.xpose.msra.mxu0 0.0
        %3448 = vmatprep.subr.mxu0 0.0
        %3449 = vmatpush1.xpose.msra.mxu0 0.0
        %3450 = vmatprep.mubr.f32.mxu0 0.0
        %3451 = vmatmul.mubr.f32.gmra.mrb[0].mxu0 %v3380
        %v3452 = vpop.f32.mrb[0].mxu0
        %v3453 = vadd.f32 0.0, %v3452
        %v3454 = vpop.f32.mrb[0].mxu0
        %3455 = vdwg.mxu0
        %v3456 = vmul.f32 %v3453, 0.17677669
        %v3457 = vsel %vm2229, %v3456, -inf
        %3458 = vmax.xlane.f32.xlu0 %v3457
        %v3459 = vpop.xlane.xlu0 %3458
        %v3460 = vsub.f32 %v3456, %v3459
        %v3461 = vmul.f32 %v3460, 1.442695
        %v3462 = vpow.pop %v3461
        %v3463 = vsel %vm2229, %v3462, 0.0
        %3464 = vadd.xlane.f32.xlu0 %v3463
        %v3465 = vpop.xlane.xlu0 %3464
        %v3466 = vrcp.pop %v3465
        %v3467 = vmul.f32 %v3462, %v3466
        %3468 = vrot.lane.b32.xlu0 %v1985, 32
        %v3469 = vpop.permute.xlu0 %3468
        %3470 = vrot.lane.b32.xlu0 %v1990, 32
        %v3471 = vpop.permute.xlu0 %3470
        %v3474 = vsel %vm2241, %v3467, 0
        %v3476 = vsel %vm1266, %v3471, 0
        %3478 = vmatprep.subr.mxu0 0.0
        %3479 = vmatpush1.msra.mxu0 %v3469
        %3480 = vmatprep.subr.mxu0 0.0
        %3481 = vmatpush1.msra.mxu0 %v3476
        %3482 = vmatprep.subr.mxu0 0.0
        %3483 = vmatpush1.msra.mxu0 0.0
        %3484 = vmatprep.subr.mxu0 0.0
        %3485 = vmatpush1.msra.mxu0 0.0
        %3486 = vmatprep.subr.mxu0 0.0
        %3487 = vmatpush1.msra.mxu0 0.0
        %3488 = vmatprep.subr.mxu0 0.0
        %3489 = vmatpush1.msra.mxu0 0.0
        %3490 = vmatprep.subr.mxu0 0.0
        %3491 = vmatpush1.msra.mxu0 0.0
        %3492 = vmatprep.subr.mxu0 0.0
        %3493 = vmatpush1.msra.mxu0 0.0
        %3494 = vmatprep.subr.mxu0 0.0
        %3495 = vmatpush1.msra.mxu0 0.0
        %3496 = vmatprep.subr.mxu0 0.0
        %3497 = vmatpush1.msra.mxu0 0.0
        %3498 = vmatprep.subr.mxu0 0.0
        %3499 = vmatpush1.msra.mxu0 0.0
        %3500 = vmatprep.subr.mxu0 0.0
        %3501 = vmatpush1.msra.mxu0 0.0
        %3502 = vmatprep.subr.mxu0 0.0
        %3503 = vmatpush1.msra.mxu0 0.0
        %3504 = vmatprep.subr.mxu0 0.0
        %3505 = vmatpush1.msra.mxu0 0.0
        %3506 = vmatprep.subr.mxu0 0.0
        %3507 = vmatpush1.msra.mxu0 0.0
        %3508 = vmatprep.subr.mxu0 0.0
        %3509 = vmatpush1.msra.mxu0 0.0
        %3510 = vmatprep.subr.mxu0 0.0
        %3511 = vmatpush1.msra.mxu0 0.0
        %3512 = vmatprep.subr.mxu0 0.0
        %3513 = vmatpush1.msra.mxu0 0.0
        %3514 = vmatprep.subr.mxu0 0.0
        %3515 = vmatpush1.msra.mxu0 0.0
        %3516 = vmatprep.subr.mxu0 0.0
        %3517 = vmatpush1.msra.mxu0 0.0
        %3518 = vmatprep.subr.mxu0 0.0
        %3519 = vmatpush1.msra.mxu0 0.0
        %3520 = vmatprep.subr.mxu0 0.0
        %3521 = vmatpush1.msra.mxu0 0.0
        %3522 = vmatprep.subr.mxu0 0.0
        %3523 = vmatpush1.msra.mxu0 0.0
        %3524 = vmatprep.subr.mxu0 0.0
        %3525 = vmatpush1.msra.mxu0 0.0
        %3526 = vmatprep.subr.mxu0 0.0
        %3527 = vmatpush1.msra.mxu0 0.0
        %3528 = vmatprep.subr.mxu0 0.0
        %3529 = vmatpush1.msra.mxu0 0.0
        %3530 = vmatprep.subr.mxu0 0.0
        %3531 = vmatpush1.msra.mxu0 0.0
        %3532 = vmatprep.subr.mxu0 0.0
        %3533 = vmatpush1.msra.mxu0 0.0
        %3534 = vmatprep.subr.mxu0 0.0
        %3535 = vmatpush1.msra.mxu0 0.0
        %3536 = vmatprep.subr.mxu0 0.0
        %3537 = vmatpush1.msra.mxu0 0.0
        %3538 = vmatprep.subr.mxu0 0.0
        %3539 = vmatpush1.msra.mxu0 0.0
        %3540 = vmatprep.subr.mxu0 0.0
        %3541 = vmatpush1.msra.mxu0 0.0
        %3542 = vmatprep.mubr.f32.mxu0 0.0
        %3543 = vmatmul.mubr.f32.gmra.mrb[0].mxu0 %v3474
        %v3544 = vpop.f32.mrb[0].mxu0
        %v3545 = vadd.f32 0.0, %v3544
        %v3546 = vpop.f32.mrb[0].mxu0
        %3547 = vdwg.mxu0
        %3549 = vrot.lane.b32.xlu0 %v3197, 32
        %v3550 = vpop.permute.xlu0 %3549
        %3553 = vrot.lane.b32.xlu0 %v3371, 64
        %v3554 = vpop.permute.xlu0 %3553
        %3557 = vrot.lane.b32.xlu0 %v3545, 96
        %v3558 = vpop.permute.xlu0 %3557
        %v3560 = vsel %vm874, %v3022, %v3550
        %v3561 = vsel %vm2854, %v3560, %v3554
        %v3562 = vsel %vm2856, %v3561, %v3558
        %v3564 = vrot.slane %v3562, 7
        %v3566 = vsel %vm1266, %v2857, %v3564
        %v3567 = vld [vmem:[%s13] sm:$0xff]
        %v3568 = vld [vmem:[%s13 + $0x8] sm:$0xff]
        %v3569 = vld [vmem:[%s13 + $0x10] sm:$0xff]
        %v3570 = vld [vmem:[%s13 + $0x18] sm:$0xff]
        %v3571 = vld [vmem:[%s13 + $0x20] sm:$0xff]
        %v3572 = vld [vmem:[%s13 + $0x28] sm:$0xff]
        %v3573 = vld [vmem:[%s13 + $0x30] sm:$0xff]
        %v3574 = vld [vmem:[%s13 + $0x38] sm:$0xff]
        %v3575 = vld [vmem:[%s13 + $0x40] sm:$0xff]
        %v3576 = vld [vmem:[%s13 + $0x48] sm:$0xff]
        %v3577 = vld [vmem:[%s13 + $0x50] sm:$0xff]
        %v3578 = vld [vmem:[%s13 + $0x58] sm:$0xff]
        %v3579 = vld [vmem:[%s13 + $0x60] sm:$0xff]
        %v3580 = vld [vmem:[%s13 + $0x68] sm:$0xff]
        %v3581 = vld [vmem:[%s13 + $0x70] sm:$0xff]
        %v3582 = vld [vmem:[%s13 + $0x78] sm:$0xff]
        %v3583 = vld [vmem:[%s14] sm:$0x1]
        %v3585 = vlaneseq
        %v3586 = vshrl.u32 %v3585, 7
        %v3587 = vsub.s32 0, %v3586
        %v3588 = vrot.slane %v3583, %v3587
        %3590 = vmatprep.subr.mxu0 0.0
        %3591 = vmatpush1.msra.mxu0 %v3567
        %3592 = vmatprep.subr.mxu0 0.0
        %3593 = vmatpush1.msra.mxu0 %v3568
        %3594 = vmatprep.subr.mxu0 0.0
        %3595 = vmatpush1.msra.mxu0 %v3569
        %3596 = vmatprep.subr.mxu0 0.0
        %3597 = vmatpush1.msra.mxu0 %v3570
        %3598 = vmatprep.subr.mxu0 0.0
        %3599 = vmatpush1.msra.mxu0 %v3571
        %3600 = vmatprep.subr.mxu0 0.0
        %3601 = vmatpush1.msra.mxu0 %v3572
        %3602 = vmatprep.subr.mxu0 0.0
        %3603 = vmatpush1.msra.mxu0 %v3573
        %3604 = vmatprep.subr.mxu0 0.0
        %3605 = vmatpush1.msra.mxu0 %v3574
        %3606 = vmatprep.subr.mxu0 0.0
        %3607 = vmatpush1.msra.mxu0 %v3575
        %3608 = vmatprep.subr.mxu0 0.0
        %3609 = vmatpush1.msra.mxu0 %v3576
        %3610 = vmatprep.subr.mxu0 0.0
        %3611 = vmatpush1.msra.mxu0 %v3577
        %3612 = vmatprep.subr.mxu0 0.0
        %3613 = vmatpush1.msra.mxu0 %v3578
        %3614 = vmatprep.subr.mxu0 0.0
        %3615 = vmatpush1.msra.mxu0 %v3579
        %3616 = vmatprep.subr.mxu0 0.0
        %3617 = vmatpush1.msra.mxu0 %v3580
        %3618 = vmatprep.subr.mxu0 0.0
        %3619 = vmatpush1.msra.mxu0 %v3581
        %3620 = vmatprep.subr.mxu0 0.0
        %3621 = vmatpush1.msra.mxu0 %v3582
        %3622 = vmatprep.subr.mxu0 0.0
        %3623 = vmatpush1.msra.mxu0 0.0
        %3624 = vmatprep.subr.mxu0 0.0
        %3625 = vmatpush1.msra.mxu0 0.0
        %3626 = vmatprep.subr.mxu0 0.0
        %3627 = vmatpush1.msra.mxu0 0.0
        %3628 = vmatprep.subr.mxu0 0.0
        %3629 = vmatpush1.msra.mxu0 0.0
        %3630 = vmatprep.subr.mxu0 0.0
        %3631 = vmatpush1.msra.mxu0 0.0
        %3632 = vmatprep.subr.mxu0 0.0
        %3633 = vmatpush1.msra.mxu0 0.0
        %3634 = vmatprep.subr.mxu0 0.0
        %3635 = vmatpush1.msra.mxu0 0.0
        %3636 = vmatprep.subr.mxu0 0.0
        %3637 = vmatpush1.msra.mxu0 0.0
        %3638 = vmatprep.subr.mxu0 0.0
        %3639 = vmatpush1.msra.mxu0 0.0
        %3640 = vmatprep.subr.mxu0 0.0
        %3641 = vmatpush1.msra.mxu0 0.0
        %3642 = vmatprep.subr.mxu0 0.0
        %3643 = vmatpush1.msra.mxu0 0.0
        %3644 = vmatprep.subr.mxu0 0.0
        %3645 = vmatpush1.msra.mxu0 0.0
        %3646 = vmatprep.subr.mxu0 0.0
        %3647 = vmatpush1.msra.mxu0 0.0
        %3648 = vmatprep.subr.mxu0 0.0
        %3649 = vmatpush1.msra.mxu0 0.0
        %3650 = vmatprep.subr.mxu0 0.0
        %3651 = vmatpush1.msra.mxu0 0.0
        %3652 = vmatprep.subr.mxu0 0.0
        %3653 = vmatpush1.msra.mxu0 0.0
        %3654 = vmatprep.mubr.f32.mxu0 0.0
        %3655 = vmatmul.mubr.f32.gmra.mrb[0].mxu0 %v3566
        %v3656 = vpop.f32.mrb[0].mxu0
        %v3657 = vadd.f32 %v3588, %v3656
        %v3658 = vpop.f32.mrb[0].mxu0
        %3659 = vdwg.mxu0
        %v3660 = vmax.f32 %v3657, 0.0
        %v3661 = vld [vmem:[%s15] sm:$0xff]
        %v3662 = vld [vmem:[%s15 + $0x8] sm:$0xff]
        %v3663 = vld [vmem:[%s15 + $0x10] sm:$0xff]
        %v3664 = vld [vmem:[%s15 + $0x18] sm:$0xff]
        %v3665 = vld [vmem:[%s16] sm:$0x1]
        %v3667 = vlaneseq
        %v3668 = vshrl.u32 %v3667, 7
        %v3669 = vsub.s32 0, %v3668
        %v3670 = vrot.slane %v3665, %v3669
        %v3673 = vsel %vm874, %v3660, 0
        %3675 = vmatprep.subr.mxu0 0.0
        %3676 = vmatpush1.msra.mxu0 %v3661
        %3677 = vmatprep.subr.mxu0 0.0
        %3678 = vmatpush1.msra.mxu0 %v3662
        %3679 = vmatprep.subr.mxu0 0.0
        %3680 = vmatpush1.msra.mxu0 %v3663
        %3681 = vmatprep.subr.mxu0 0.0
        %3682 = vmatpush1.msra.mxu0 %v3664
        %3683 = vmatprep.subr.mxu0 0.0
        %3684 = vmatpush1.msra.mxu0 0.0
        %3685 = vmatprep.subr.mxu0 0.0
        %3686 = vmatpush1.msra.mxu0 0.0
        %3687 = vmatprep.subr.mxu0 0.0
        %3688 = vmatpush1.msra.mxu0 0.0
        %3689 = vmatprep.subr.mxu0 0.0
        %3690 = vmatpush1.msra.mxu0 0.0
        %3691 = vmatprep.subr.mxu0 0.0
        %3692 = vmatpush1.msra.mxu0 0.0
        %3693 = vmatprep.subr.mxu0 0.0
        %3694 = vmatpush1.msra.mxu0 0.0
        %3695 = vmatprep.subr.mxu0 0.0
        %3696 = vmatpush1.msra.mxu0 0.0
        %3697 = vmatprep.subr.mxu0 0.0
        %3698 = vmatpush1.msra.mxu0 0.0
        %3699 = vmatprep.subr.mxu0 0.0
        %3700 = vmatpush1.msra.mxu0 0.0
        %3701 = vmatprep.subr.mxu0 0.0
        %3702 = vmatpush1.msra.mxu0 0.0
        %3703 = vmatprep.subr.mxu0 0.0
        %3704 = vmatpush1.msra.mxu0 0.0
        %3705 = vmatprep.subr.mxu0 0.0
        %3706 = vmatpush1.msra.mxu0 0.0
        %3707 = vmatprep.subr.mxu0 0.0
        %3708 = vmatpush1.msra.mxu0 0.0
        %3709 = vmatprep.subr.mxu0 0.0
        %3710 = vmatpush1.msra.mxu0 0.0
        %3711 = vmatprep.subr.mxu0 0.0
        %3712 = vmatpush1.msra.mxu0 0.0
        %3713 = vmatprep.subr.mxu0 0.0
        %3714 = vmatpush1.msra.mxu0 0.0
        %3715 = vmatprep.subr.mxu0 0.0
        %3716 = vmatpush1.msra.mxu0 0.0
        %3717 = vmatprep.subr.mxu0 0.0
        %3718 = vmatpush1.msra.mxu0 0.0
        %3719 = vmatprep.subr.mxu0 0.0
        %3720 = vmatpush1.msra.mxu0 0.0
        %3721 = vmatprep.subr.mxu0 0.0
        %3722 = vmatpush1.msra.mxu0 0.0
        %3723 = vmatprep.subr.mxu0 0.0
        %3724 = vmatpush1.msra.mxu0 0.0
        %3725 = vmatprep.subr.mxu0 0.0
        %3726 = vmatpush1.msra.mxu0 0.0
        %3727 = vmatprep.subr.mxu0 0.0
        %3728 = vmatpush1.msra.mxu0 0.0
        %3729 = vmatprep.subr.mxu0 0.0
        %3730 = vmatpush1.msra.mxu0 0.0
        %3731 = vmatprep.subr.mxu0 0.0
        %3732 = vmatpush1.msra.mxu0 0.0
        %3733 = vmatprep.subr.mxu0 0.0
        %3734 = vmatpush1.msra.mxu0 0.0
        %3735 = vmatprep.subr.mxu0 0.0
        %3736 = vmatpush1.msra.mxu0 0.0
        %3737 = vmatprep.subr.mxu0 0.0
        %3738 = vmatpush1.msra.mxu0 0.0
        %3739 = vmatprep.mubr.f32.mxu0 0.0
        %3740 = vmatmul.mubr.f32.gmra.mrb[0].mxu0 %v3673
        %v3741 = vpop.f32.mrb[0].mxu0
        %v3742 = vadd.f32 %v3670, %v3741
        %v3743 = vpop.f32.mrb[0].mxu0
        %3744 = vdwg.mxu0
        %v3745 = vmax.f32 %v3742, 0.0
        %v3746 = vld [vmem:[%s17] sm:$0xff]
        %v3747 = vld [vmem:[%s17 + $0x8] sm:$0xff]
        %v3748 = vld [vmem:[%s17 + $0x10] sm:$0xff]
        %v3749 = vld [vmem:[%s17 + $0x18] sm:$0xff]
        %v3750 = vld [vmem:[%s18] sm:$0x1]
        %v3752 = vlaneseq
        %v3753 = vshrl.u32 %v3752, 7
        %v3754 = vsub.s32 0, %v3753
        %v3755 = vrot.slane %v3750, %v3754
        %v3758 = vsel %vm874, %v3745, 0
        %3760 = vmatprep.subr.mxu0 0.0
        %3761 = vmatpush1.msra.mxu0 %v3746
        %3762 = vmatprep.subr.mxu0 0.0
        %3763 = vmatpush1.msra.mxu0 %v3747
        %3764 = vmatprep.subr.mxu0 0.0
        %3765 = vmatpush1.msra.mxu0 %v3748
        %3766 = vmatprep.subr.mxu0 0.0
        %3767 = vmatpush1.msra.mxu0 %v3749
        %3768 = vmatprep.subr.mxu0 0.0
        %3769 = vmatpush1.msra.mxu0 0.0
        %3770 = vmatprep.subr.mxu0 0.0
        %3771 = vmatpush1.msra.mxu0 0.0
        %3772 = vmatprep.subr.mxu0 0.0
        %3773 = vmatpush1.msra.mxu0 0.0
        %3774 = vmatprep.subr.mxu0 0.0
        %3775 = vmatpush1.msra.mxu0 0.0
        %3776 = vmatprep.subr.mxu0 0.0
        %3777 = vmatpush1.msra.mxu0 0.0
        %3778 = vmatprep.subr.mxu0 0.0
        %3779 = vmatpush1.msra.mxu0 0.0
        %3780 = vmatprep.subr.mxu0 0.0
        %3781 = vmatpush1.msra.mxu0 0.0
        %3782 = vmatprep.subr.mxu0 0.0
        %3783 = vmatpush1.msra.mxu0 0.0
        %3784 = vmatprep.subr.mxu0 0.0
        %3785 = vmatpush1.msra.mxu0 0.0
        %3786 = vmatprep.subr.mxu0 0.0
        %3787 = vmatpush1.msra.mxu0 0.0
        %3788 = vmatprep.subr.mxu0 0.0
        %3789 = vmatpush1.msra.mxu0 0.0
        %3790 = vmatprep.subr.mxu0 0.0
        %3791 = vmatpush1.msra.mxu0 0.0
        %3792 = vmatprep.subr.mxu0 0.0
        %3793 = vmatpush1.msra.mxu0 0.0
        %3794 = vmatprep.subr.mxu0 0.0
        %3795 = vmatpush1.msra.mxu0 0.0
        %3796 = vmatprep.subr.mxu0 0.0
        %3797 = vmatpush1.msra.mxu0 0.0
        %3798 = vmatprep.subr.mxu0 0.0
        %3799 = vmatpush1.msra.mxu0 0.0
        %3800 = vmatprep.subr.mxu0 0.0
        %3801 = vmatpush1.msra.mxu0 0.0
        %3802 = vmatprep.subr.mxu0 0.0
        %3803 = vmatpush1.msra.mxu0 0.0
        %3804 = vmatprep.subr.mxu0 0.0
        %3805 = vmatpush1.msra.mxu0 0.0
        %3806 = vmatprep.subr.mxu0 0.0
        %3807 = vmatpush1.msra.mxu0 0.0
        %3808 = vmatprep.subr.mxu0 0.0
        %3809 = vmatpush1.msra.mxu0 0.0
        %3810 = vmatprep.subr.mxu0 0.0
        %3811 = vmatpush1.msra.mxu0 0.0
        %3812 = vmatprep.subr.mxu0 0.0
        %3813 = vmatpush1.msra.mxu0 0.0
        %3814 = vmatprep.subr.mxu0 0.0
        %3815 = vmatpush1.msra.mxu0 0.0
        %3816 = vmatprep.subr.mxu0 0.0
        %3817 = vmatpush1.msra.mxu0 0.0
        %3818 = vmatprep.subr.mxu0 0.0
        %3819 = vmatpush1.msra.mxu0 0.0
        %3820 = vmatprep.subr.mxu0 0.0
        %3821 = vmatpush1.msra.mxu0 0.0
        %3822 = vmatprep.subr.mxu0 0.0
        %3823 = vmatpush1.msra.mxu0 0.0
        %3824 = vmatprep.mubr.f32.mxu0 0.0
        %3825 = vmatmul.mubr.f32.gmra.mrb[0].mxu0 %v3758
        %v3826 = vpop.f32.mrb[0].mxu0
        %v3827 = vadd.f32 %v3755, %v3826
        %v3828 = vpop.f32.mrb[0].mxu0
        %3829 = vdwg.mxu0
        %vm3830 = vcmask 253952
        %3831 = vst.msk [vmem:[%s689] sm:$0x1] %vm3830, %v3827
        %vm3832 = vcmask 254977
        %3833 = vst.msk [vmem:[%s695 - $0x1] sm:$0x2] %vm3832, %v3827
        %s3834 = sand.u32 %s458, 1
        %s3835 = scalar_lea.sflag [#allocation4], %s3834
        %s3836 = sand.u32 %s458, 1
        %s3837 = scalar_lea.vmem [#allocation10], %s3836
        %s3838 = sand.u32 %s484, 1
        %s3839 = scalar_lea.sflag [#allocation12], %s3838
        %s3840 = sand.u32 %s484, 1
        %s3841 = scalar_lea.vmem [#allocation11], %s3840
        // Predicated region
        $region113: #{tpu_custom_call.1} parent=95 // pred_check
          %p3842 = pneg %p468
        $region114: #{tpu_custom_call.1} parent=95 // pred_check_branch
          %3844 = sbr.rel (%p3842) target = $region116
        $region115: #{tpu_custom_call.1} parent=95 // pred_region
          %s3846 = ssub.s32 16, 16
          %3847 = vsyncadd %s3835, %s3846
          %s3848 = smul.addr %s41, 16
          %s3849 = scalar_lea.hbm %s19, %s3848
          %s3851 = sshll.u32 %s3837, 4
          %s3852 = int_to_ptr.vmem [resolvable:$true] %s3851
          %3854 = dma.vmem_to_hbm [thread:$0]  %s3852, 16, %s3849, %s3835
        $region116: #{tpu_custom_call.1} parent=95 // pred_fallthru
          _
        // Predicated region
        $region117: #{tpu_custom_call.1} parent=95 // pred_check
          %p3855 = pneg %p494
        $region118: #{tpu_custom_call.1} parent=95 // pred_check_branch
          %3857 = sbr.rel (%p3855) target = $region120
        $region119: #{tpu_custom_call.1} parent=95 // pred_region
          %s3859 = ssub.s32 16, 16
          %3860 = vsyncadd %s3839, %s3859
          %s3861 = smul.addr %s41, 16
          %s3862 = scalar_lea.hbm %s20, %s3861
          %s3864 = sshll.u32 %s3841, 4
          %s3865 = int_to_ptr.vmem [resolvable:$true] %s3864
          %3867 = dma.vmem_to_hbm [thread:$0]  %s3865, 16, %s3862, %s3839
        $region120: #{tpu_custom_call.1} parent=95 // pred_fallthru
          _
      $region96: #{tpu_custom_call.1} parent=5 // pred_fallthru
        _
      %p3868 = scmp.le.s32.totalorder 2, %s36
      // Predicated region
      $region121: #{tpu_custom_call.1} parent=5 // pred_check
        %p3869 = pneg %p3868
      $region122: #{tpu_custom_call.1} parent=5 // pred_check_branch
        %3871 = sbr.rel (%p3869) target = $region124
      $region123: #{tpu_custom_call.1} parent=5 // pred_region
        %s3872 = ssub.s32 %s36, 2
        // Predicated region
        $region125: #{tpu_custom_call.1} parent=123 // pred_check
          %p3873 = pneg %p474
        $region126: #{tpu_custom_call.1} parent=123 // pred_check_branch
          %3875 = sbr.rel (%p3873) target = $region128
        $region127: #{tpu_custom_call.1} parent=123 // pred_region
          %s3876 = sand.u32 %s459, 1
          %s3877 = scalar_lea.sflag [#allocation4], %s3876
          %s3878 = sand.u32 %s459, 1
          %s3879 = scalar_lea.vmem [#allocation10], %s3878
          %3880 = dma.done %s3877, 16
        $region128: #{tpu_custom_call.1} parent=123 // pred_fallthru
          _
        // Predicated region
        $region129: #{tpu_custom_call.1} parent=123 // pred_check
          %p3881 = pneg %p500
        $region130: #{tpu_custom_call.1} parent=123 // pred_check_branch
          %3883 = sbr.rel (%p3881) target = $region132
        $region131: #{tpu_custom_call.1} parent=123 // pred_region
          %s3884 = sand.u32 %s485, 1
          %s3885 = scalar_lea.sflag [#allocation12], %s3884
          %s3886 = sand.u32 %s485, 1
          %s3887 = scalar_lea.vmem [#allocation11], %s3886
          %3888 = dma.done %s3885, 16
        $region132: #{tpu_custom_call.1} parent=123 // pred_fallthru
          _
      $region124: #{tpu_custom_call.1} parent=5 // pred_fallthru
        _
    $region6: #{tpu_custom_call.1} parent=1 // loop_footer
      %s40 = sadd.s32 1, %s36
    $region7: #{tpu_custom_call.1} parent=1 // loop_footer_branch
      %35 = sbr.rel target = $region3
    $region8: #{tpu_custom_call.1} parent=1 // loop_exit
      _
    %3889 = vsyncpa [#allocation3], 1
    %s3890 = scalar_lea.sflag [#allocation3], 1
    %3891 = vsyncpa %s3890, 1
    %3892 = vsyncpa [#allocation6], 1
    %3893 = vsyncpa [#allocation9], 1
    %3894 = vsyncpa [#allocation4], 1
    %s3895 = scalar_lea.sflag [#allocation4], 1
    %3896 = vsyncpa %s3895, 1
    %3897 = vsyncpa [#allocation12], 1
    %s3898 = scalar_lea.sflag [#allocation12], 1
    %3899 = vsyncpa %s3898, 1

</llo_original>
